<compile_context>
chip_gen: v5e
topology: v5e:2x2
jax: 0.10.0
libtpu: 0.0.40
codegen_flags: <defaults>
</compile_context>

<pallas_src>
import functools

import numpy as np
import jax
import jax.numpy as jnp
from jax.experimental import pallas as pl
from jax.experimental.pallas import tpu as pltpu

_CP = 128   # every channel axis is padded to the 128-wide lane dimension
_K = 3      # 3x3 convolutions


def _round_up(x, m):
    return (x + m - 1) // m * m


# ----------------------------------------------------------------------------
# Fused Pallas kernel: conv1 + ReLU + conv2 + ReLU + global average pool
# ----------------------------------------------------------------------------
def _backbone_kernel(x_ref, w1_ref, b1_ref, w2_ref, b2_ref, v1_ref, pw_ref,
                     o_ref, h1_ref, *, M, Wp, lead, store_off, n_h1):
    """Whole backbone for one batch element, fully VMEM-resident.

    x_ref : (1, n_x, cp) bf16   flat zero-padded input (row = flat (H+2)*(W+2) spatial index)
    w1/w2 : (9*cp, cp)   bf16   concatenated-K weights, row = tap*(cp) + cin
    b1/b2 : (1, cp)      f32
    v1    : (M, 1)       f32    1.0 on real columns, 0.0 on the 2 junk cols per row
    pw    : (M, 1)       f32    pooling weights (stride-2 keep * 1/n_out, 0 on junk)
    o_ref : (1, 1, cp)   f32    pooled features (padded channel axis)
    h1_ref: (n_h1, cp)   bf16   scratch: flat zero-padded conv1 output
    """
    cp = x_ref.shape[-1]

    # ---- conv1: 3x3 s1 p1 + bias + ReLU as ONE (M, 9*cp) x (9*cp, cp) MXU matmul.
    # Each tap is a contiguous shifted slice of the flat padded input (no relayout reshape).
    lhs1 = jnp.concatenate(
        [x_ref[0, i * Wp + j: i * Wp + j + M, :]
         for i in range(_K) for j in range(_K)], axis=1)
    acc1 = jnp.dot(lhs1, w1_ref[...], preferred_element_type=jnp.float32)
    # junk pseudo-columns -> 0 (they land exactly on conv2's left/right zero padding below)
    h1 = jnp.maximum(acc1 + b1_ref[...], 0.0) * v1_ref[...]

    # ---- stage conv1 output into the flat zero-padded scratch.
    # Zero only the border bands the interior store never covers (aligned, ~32 rows each);
    # done every step so there is no carried scratch state (safe for per-core scratch).
    h1_ref[0:store_off, :] = jnp.zeros((store_off, cp), h1_ref.dtype)
    h1_ref[store_off + M:n_h1, :] = jnp.zeros((n_h1 - store_off - M, cp), h1_ref.dtype)
    # single contiguous, 16-row-aligned bf16 store of the interior (single f32->bf16 cast)
    h1_ref[store_off:store_off + M, :] = h1.astype(h1_ref.dtype)

    # ---- conv2: 3x3 p1 + bias + ReLU, dense stride-1 on the padded h1; the stride-2
    # subsampling / junk rejection / 1/n_out are folded into the pooling weights.
    lhs2 = jnp.concatenate(
        [h1_ref[lead + i * Wp + j: lead + i * Wp + j + M, :]
         for i in range(_K) for j in range(_K)], axis=1)
    acc2 = jnp.dot(lhs2, w2_ref[...], preferred_element_type=jnp.float32)
    h2 = jnp.maximum(acc2 + b2_ref[...], 0.0)

    # ---- AdaptiveAvgPool2d((1,1)) + flatten: weighted row-sum with precomputed weights
    pooled = jnp.sum(h2 * pw_ref[...], axis=0, keepdims=True)     # (1, cp) f32
    o_ref[...] = pooled.reshape(1, 1, cp)


# ----------------------------------------------------------------------------
# Wrapper glue (tiny, fused by XLA): layout prep + pallas_call
# ----------------------------------------------------------------------------
def _prep_conv_weights(w_oikk, b_o, cp=_CP):
    """PyTorch (Cout, Cin, kh, kw) -> concatenated-K (kh*kw*cp, cp) bf16 and (1, cp) f32 bias."""
    cout, cin, kh, kw = w_oikk.shape
    assert kh == kw == _K and cin <= cp and cout <= cp
    wt = jnp.transpose(w_oikk, (2, 3, 1, 0))                         # (kh, kw, cin, cout)
    wt = jnp.pad(wt, ((0, 0), (0, 0), (0, cp - cin), (0, cp - cout)))
    wt = wt.reshape(kh * kw * cp, cp).astype(jnp.bfloat16)           # row = tap*cp + cin
    bt = jnp.pad(b_o, (0, cp - cout)).reshape(1, cp).astype(jnp.float32)
    return wt, bt


def backbone_forward(params, x_nchw):
    B, C, H, W = x_nchw.shape
    assert C <= _CP

    Wp = W + 2                       # padded row pitch
    M = H * Wp                       # conv pseudo-output rows (W real + 2 junk cols per row)
    n_flat = (H + 2) * Wp            # flat size of the padded image

    # input slab: conv1 tap reads reach up to 2*Wp + 2 + M; round rows to a bf16 tile (16)
    n_x = _round_up(M + 2 * Wp + 2, 16)
    # h1 scratch: choose a lead pad so the interior store offset (lead + Wp + 1) is 16-aligned
    lead = (-(Wp + 1)) % 16
    store_off = lead + Wp + 1
    n_h1 = _round_up(max(store_off + M, lead + 2 * Wp + 2 + M), 16)

    # NCHW -> NHWC, spatial pad 1, flatten spatial, pad rows + channels, cast bf16 (one XLA fusion)
    x = jnp.transpose(x_nchw, (0, 2, 3, 1)).astype(jnp.float32)
    xp = jnp.pad(x, ((0, 0), (1, 1), (1, 1), (0, 0))).reshape(B, n_flat, C)
    xf = jnp.pad(xp, ((0, 0), (0, n_x - n_flat), (0, _CP - C))).astype(jnp.bfloat16)

    w1, b1 = _prep_conv_weights(params["w1"], params["b1"])
    w2, b2 = _prep_conv_weights(params["w2"], params["b2"])
    c2 = params["w2"].shape[0]

    # precomputed constants (no per-step iota/div/mod in the kernel)
    idx = np.arange(M)
    col = idx % Wp
    row = idx // Wp
    valid1 = (col < W).astype(np.float32).reshape(M, 1)              # junk-column mask
    Ho2 = (H - 1) // 2 + 1
    Wo2 = (W - 1) // 2 + 1
    keep = (row % 2 == 0) & (col % 2 == 0) & (col < W)               # stride-2 output positions
    poolw = np.where(keep, 1.0 / float(Ho2 * Wo2), 0.0).astype(np.float32).reshape(M, 1)

    kernel = functools.partial(_backbone_kernel, M=M, Wp=Wp, lead=lead,
                               store_off=store_off, n_h1=n_h1)
    out = pl.pallas_call(
        kernel,
        out_shape=jax.ShapeDtypeStruct((B, 1, _CP), jnp.float32),
        grid=(B,),
        in_specs=[
            pl.BlockSpec((1, n_x, _CP), lambda b: (b, 0, 0)),        # x (flat, padded, bf16)
            pl.BlockSpec((_K * _K * _CP, _CP), lambda b: (0, 0)),    # w1 (concat-K)
            pl.BlockSpec((1, _CP), lambda b: (0, 0)),                # b1
            pl.BlockSpec((_K * _K * _CP, _CP), lambda b: (0, 0)),    # w2 (concat-K)
            pl.BlockSpec((1, _CP), lambda b: (0, 0)),                # b2
            pl.BlockSpec((M, 1), lambda b: (0, 0)),                  # valid-column mask
            pl.BlockSpec((M, 1), lambda b: (0, 0)),                  # pooling weights
        ],
        out_specs=pl.BlockSpec((1, 1, _CP), lambda b: (b, 0, 0)),
        scratch_shapes=[pltpu.VMEM((n_h1, _CP), jnp.bfloat16)],
        compiler_params=pltpu.CompilerParams(
            dimension_semantics=("parallel",)),                      # megacore on v7x
    )(xf, w1, b1, w2, b2, jnp.asarray(valid1), jnp.asarray(poolw))

    return out.reshape(B, _CP)[:, :c2]


def init_params(key, c_in=4, c1=16, c2=32):
    k1, k2, k3, k4 = jax.random.split(key, 4)
    return {
        "w1": jax.random.normal(k1, (c1, c_in, 3, 3), jnp.float32) * 0.1,
        "b1": jax.random.normal(k2, (c1,), jnp.float32) * 0.1,
        "w2": jax.random.normal(k3, (c2, c1, 3, 3), jnp.float32) * 0.1,
        "b2": jax.random.normal(k4, (c2,), jnp.float32) * 0.1,
    }


def _reference(params, x_nchw):
    """Pure-JAX (f32) reference of the same forward pass."""
    dn = ("NCHW", "OIHW", "NCHW")
    y = jax.lax.conv_general_dilated(x_nchw, params["w1"], (1, 1),
                                     [(1, 1), (1, 1)], dimension_numbers=dn)
    y = jnp.maximum(y + params["b1"][None, :, None, None], 0.0)
    y = jax.lax.conv_general_dilated(y, params["w2"], (2, 2),
                                     [(1, 1), (1, 1)], dimension_numbers=dn)
    y = jnp.maximum(y + params["b2"][None, :, None, None], 0.0)
    return jnp.mean(y, axis=(2, 3))


if __name__ == "__main__":
    key = jax.random.PRNGKey(0)
    kx, kp = jax.random.split(key)

    B, C, H, W = 2, 4, 16, 16
    x = jax.random.normal(kx, (B, C, H, W), jnp.float32)
    params = init_params(kp, c_in=C, c1=16, c2=32)

    feats = jax.jit(backbone_forward)(params, x)
    feats = jax.block_until_ready(feats)

    assert feats.shape == (B, 32), feats.shape
    assert jnp.all(jnp.isfinite(feats))

    # correctness vs. f32 reference (kernel uses bf16 MXU operands, f32 accumulation)
    ref = _reference(params, x)
    assert jnp.allclose(feats, ref, rtol=5e-2, atol=5e-2), (feats, ref)

    print("KERNEL_OK")
</pallas_src>

<mosaic_0001>
module attributes {stable_mosaic.version = 11 : i64} {
  func.func @_backbone_kernel(%arg0: i32, %arg1: memref<1x336x128xbf16, #tpu.memory_space<vmem>>, %arg2: memref<1152x128xbf16, #tpu.memory_space<vmem>>, %arg3: memref<1x128xf32, #tpu.memory_space<vmem>>, %arg4: memref<1152x128xbf16, #tpu.memory_space<vmem>>, %arg5: memref<1x128xf32, #tpu.memory_space<vmem>>, %arg6: memref<288x1xf32, #tpu.memory_space<vmem>>, %arg7: memref<288x1xf32, #tpu.memory_space<vmem>>, %arg8: memref<1x1x128xf32, #tpu.memory_space<vmem>>, %arg9: memref<352x128xbf16, #tpu.memory_space<vmem>>) attributes {dimension_semantics = [#tpu.dimension_semantics<parallel>], iteration_bounds = array<i64: 2>, scalar_prefetch = 0 : i64, scratch_operands = 1 : i64, tpu.core_type = #tpu.core_type<tc>, window_params = [{transform_indices = @transform_0, window_bounds = array<i64: 1, 336, 128>}, {pipeline_mode = #tpu.pipeline_mode<synchronous>, transform_indices = @transform_1, window_bounds = array<i64: 1152, 128>}, {pipeline_mode = #tpu.pipeline_mode<synchronous>, transform_indices = @transform_2, window_bounds = array<i64: 1, 128>}, {pipeline_mode = #tpu.pipeline_mode<synchronous>, transform_indices = @transform_3, window_bounds = array<i64: 1152, 128>}, {pipeline_mode = #tpu.pipeline_mode<synchronous>, transform_indices = @transform_4, window_bounds = array<i64: 1, 128>}, {pipeline_mode = #tpu.pipeline_mode<synchronous>, transform_indices = @transform_5, window_bounds = array<i64: 288, 1>}, {pipeline_mode = #tpu.pipeline_mode<synchronous>, transform_indices = @transform_6, window_bounds = array<i64: 288, 1>}, {transform_indices = @transform_7, window_bounds = array<i64: 1, 1, 128>}]} {
    %c0 = arith.constant 0 : index
    %c0_0 = arith.constant 0 : index
    %c0_1 = arith.constant 0 : index
    %0 = vector.load %arg1[%c0, %c0_0, %c0_1] : memref<1x336x128xbf16, #tpu.memory_space<vmem>>, vector<1x288x128xbf16>
    %1 = vector.shape_cast %0 : vector<1x288x128xbf16> to vector<288x128xbf16>
    %c0_2 = arith.constant 0 : index
    %c1 = arith.constant 1 : index
    %c0_3 = arith.constant 0 : index
    %2 = vector.load %arg1[%c0_2, %c1, %c0_3] : memref<1x336x128xbf16, #tpu.memory_space<vmem>>, vector<1x288x128xbf16>
    %3 = vector.shape_cast %2 : vector<1x288x128xbf16> to vector<288x128xbf16>
    %c0_4 = arith.constant 0 : index
    %c2 = arith.constant 2 : index
    %c0_5 = arith.constant 0 : index
    %4 = vector.load %arg1[%c0_4, %c2, %c0_5] : memref<1x336x128xbf16, #tpu.memory_space<vmem>>, vector<1x288x128xbf16>
    %5 = vector.shape_cast %4 : vector<1x288x128xbf16> to vector<288x128xbf16>
    %c0_6 = arith.constant 0 : index
    %c18 = arith.constant 18 : index
    %c0_7 = arith.constant 0 : index
    %6 = vector.load %arg1[%c0_6, %c18, %c0_7] : memref<1x336x128xbf16, #tpu.memory_space<vmem>>, vector<1x288x128xbf16>
    %7 = vector.shape_cast %6 : vector<1x288x128xbf16> to vector<288x128xbf16>
    %c0_8 = arith.constant 0 : index
    %c19 = arith.constant 19 : index
    %c0_9 = arith.constant 0 : index
    %8 = vector.load %arg1[%c0_8, %c19, %c0_9] : memref<1x336x128xbf16, #tpu.memory_space<vmem>>, vector<1x288x128xbf16>
    %9 = vector.shape_cast %8 : vector<1x288x128xbf16> to vector<288x128xbf16>
    %c0_10 = arith.constant 0 : index
    %c20 = arith.constant 20 : index
    %c0_11 = arith.constant 0 : index
    %10 = vector.load %arg1[%c0_10, %c20, %c0_11] : memref<1x336x128xbf16, #tpu.memory_space<vmem>>, vector<1x288x128xbf16>
    %11 = vector.shape_cast %10 : vector<1x288x128xbf16> to vector<288x128xbf16>
    %c0_12 = arith.constant 0 : index
    %c36 = arith.constant 36 : index
    %c0_13 = arith.constant 0 : index
    %12 = vector.load %arg1[%c0_12, %c36, %c0_13] : memref<1x336x128xbf16, #tpu.memory_space<vmem>>, vector<1x288x128xbf16>
    %13 = vector.shape_cast %12 : vector<1x288x128xbf16> to vector<288x128xbf16>
    %c0_14 = arith.constant 0 : index
    %c37 = arith.constant 37 : index
    %c0_15 = arith.constant 0 : index
    %14 = vector.load %arg1[%c0_14, %c37, %c0_15] : memref<1x336x128xbf16, #tpu.memory_space<vmem>>, vector<1x288x128xbf16>
    %15 = vector.shape_cast %14 : vector<1x288x128xbf16> to vector<288x128xbf16>
    %c0_16 = arith.constant 0 : index
    %c38 = arith.constant 38 : index
    %c0_17 = arith.constant 0 : index
    %16 = vector.load %arg1[%c0_16, %c38, %c0_17] : memref<1x336x128xbf16, #tpu.memory_space<vmem>>, vector<1x288x128xbf16>
    %17 = vector.shape_cast %16 : vector<1x288x128xbf16> to vector<288x128xbf16>
    %18 = tpu.concatenate %1, %3, %5, %7, %9, %11, %13, %15, %17 in 1 : vector<288x128xbf16>, vector<288x128xbf16>, vector<288x128xbf16>, vector<288x128xbf16>, vector<288x128xbf16>, vector<288x128xbf16>, vector<288x128xbf16>, vector<288x128xbf16>, vector<288x128xbf16> -> vector<288x1152xbf16>
    %c0_18 = arith.constant 0 : index
    %c0_19 = arith.constant 0 : index
    %19 = vector.load %arg2[%c0_18, %c0_19] : memref<1152x128xbf16, #tpu.memory_space<vmem>>, vector<1152x128xbf16>
    %cst = arith.constant dense<0.000000e+00> : vector<288x128xf32>
    %20 = tpu.matmul %18, %19, %cst {dimension_numbers = #tpu.dot_dimension_numbers<[1], [0], [0], [1], [0, 0, 1, 1], [], []>} : vector<288x1152xbf16>, vector<1152x128xbf16>, vector<288x128xf32> -> vector<288x128xf32>
    %c0_20 = arith.constant 0 : index
    %c0_21 = arith.constant 0 : index
    %21 = vector.load %arg3[%c0_20, %c0_21] : memref<1x128xf32, #tpu.memory_space<vmem>>, vector<1x128xf32>
    %22 = vector.broadcast %21 : vector<1x128xf32> to vector<288x128xf32>
    %23 = arith.addf %20, %22 : vector<288x128xf32>
    %cst_22 = arith.constant 0.000000e+00 : f32
    %24 = vector.broadcast %cst_22 : f32 to vector<288x128xf32>
    %25 = arith.maximumf %23, %24 : vector<288x128xf32>
    %c0_23 = arith.constant 0 : index
    %c0_24 = arith.constant 0 : index
    %26 = vector.load %arg6[%c0_23, %c0_24] : memref<288x1xf32, #tpu.memory_space<vmem>>, vector<288x1xf32>
    %27 = vector.broadcast %26 : vector<288x1xf32> to vector<288x128xf32>
    %28 = arith.mulf %25, %27 : vector<288x128xf32>
    %cst_25 = arith.constant 0.000000e+00 : bf16
    %29 = vector.broadcast %cst_25 : bf16 to vector<32x128xbf16>
    %c0_26 = arith.constant 0 : index
    %c0_27 = arith.constant 0 : index
    %30 = vector.load %arg9[%c0_26, %c0_27] : memref<352x128xbf16, #tpu.memory_space<vmem>>, vector<32x128xbf16>
    tpu.vector_store %arg9[%c0_26, %c0_27], %29 {strides = array<i32>} : memref<352x128xbf16, #tpu.memory_space<vmem>>, vector<32x128xbf16>,
    %cst_28 = arith.constant 0.000000e+00 : bf16
    %31 = vector.broadcast %cst_28 : bf16 to vector<32x128xbf16>
    %c320 = arith.constant 320 : index
    %c0_29 = arith.constant 0 : index
    %32 = vector.load %arg9[%c320, %c0_29] : memref<352x128xbf16, #tpu.memory_space<vmem>>, vector<32x128xbf16>
    tpu.vector_store %arg9[%c320, %c0_29], %31 {strides = array<i32>} : memref<352x128xbf16, #tpu.memory_space<vmem>>, vector<32x128xbf16>,
    %33 = arith.truncf %28 : vector<288x128xf32> to vector<288x128xbf16>
    %c32 = arith.constant 32 : index
    %c0_30 = arith.constant 0 : index
    %34 = vector.load %arg9[%c32, %c0_30] : memref<352x128xbf16, #tpu.memory_space<vmem>>, vector<288x128xbf16>
    tpu.vector_store %arg9[%c32, %c0_30], %33 {strides = array<i32>} : memref<352x128xbf16, #tpu.memory_space<vmem>>, vector<288x128xbf16>,
    %c13 = arith.constant 13 : index
    %c0_31 = arith.constant 0 : index
    %35 = vector.load %arg9[%c13, %c0_31] : memref<352x128xbf16, #tpu.memory_space<vmem>>, vector<288x128xbf16>
    %c14 = arith.constant 14 : index
    %c0_32 = arith.constant 0 : index
    %36 = vector.load %arg9[%c14, %c0_32] : memref<352x128xbf16, #tpu.memory_space<vmem>>, vector<288x128xbf16>
    %c15 = arith.constant 15 : index
    %c0_33 = arith.constant 0 : index
    %37 = vector.load %arg9[%c15, %c0_33] : memref<352x128xbf16, #tpu.memory_space<vmem>>, vector<288x128xbf16>
    %c31 = arith.constant 31 : index
    %c0_34 = arith.constant 0 : index
    %38 = vector.load %arg9[%c31, %c0_34] : memref<352x128xbf16, #tpu.memory_space<vmem>>, vector<288x128xbf16>
    %c32_35 = arith.constant 32 : index
    %c0_36 = arith.constant 0 : index
    %39 = vector.load %arg9[%c32_35, %c0_36] : memref<352x128xbf16, #tpu.memory_space<vmem>>, vector<288x128xbf16>
    %c33 = arith.constant 33 : index
    %c0_37 = arith.constant 0 : index
    %40 = vector.load %arg9[%c33, %c0_37] : memref<352x128xbf16, #tpu.memory_space<vmem>>, vector<288x128xbf16>
    %c49 = arith.constant 49 : index
    %c0_38 = arith.constant 0 : index
    %41 = vector.load %arg9[%c49, %c0_38] : memref<352x128xbf16, #tpu.memory_space<vmem>>, vector<288x128xbf16>
    %c50 = arith.constant 50 : index
    %c0_39 = arith.constant 0 : index
    %42 = vector.load %arg9[%c50, %c0_39] : memref<352x128xbf16, #tpu.memory_space<vmem>>, vector<288x128xbf16>
    %c51 = arith.constant 51 : index
    %c0_40 = arith.constant 0 : index
    %43 = vector.load %arg9[%c51, %c0_40] : memref<352x128xbf16, #tpu.memory_space<vmem>>, vector<288x128xbf16>
    %44 = tpu.concatenate %35, %36, %37, %38, %39, %40, %41, %42, %43 in 1 : vector<288x128xbf16>, vector<288x128xbf16>, vector<288x128xbf16>, vector<288x128xbf16>, vector<288x128xbf16>, vector<288x128xbf16>, vector<288x128xbf16>, vector<288x128xbf16>, vector<288x128xbf16> -> vector<288x1152xbf16>
    %c0_41 = arith.constant 0 : index
    %c0_42 = arith.constant 0 : index
    %45 = vector.load %arg4[%c0_41, %c0_42] : memref<1152x128xbf16, #tpu.memory_space<vmem>>, vector<1152x128xbf16>
    %cst_43 = arith.constant dense<0.000000e+00> : vector<288x128xf32>
    %46 = tpu.matmul %44, %45, %cst_43 {dimension_numbers = #tpu.dot_dimension_numbers<[1], [0], [0], [1], [0, 0, 1, 1], [], []>} : vector<288x1152xbf16>, vector<1152x128xbf16>, vector<288x128xf32> -> vector<288x128xf32>
    %c0_44 = arith.constant 0 : index
    %c0_45 = arith.constant 0 : index
    %47 = vector.load %arg5[%c0_44, %c0_45] : memref<1x128xf32, #tpu.memory_space<vmem>>, vector<1x128xf32>
    %48 = vector.broadcast %47 : vector<1x128xf32> to vector<288x128xf32>
    %49 = arith.addf %46, %48 : vector<288x128xf32>
    %cst_46 = arith.constant 0.000000e+00 : f32
    %50 = vector.broadcast %cst_46 : f32 to vector<288x128xf32>
    %51 = arith.maximumf %49, %50 : vector<288x128xf32>
    %c0_47 = arith.constant 0 : index
    %c0_48 = arith.constant 0 : index
    %52 = vector.load %arg7[%c0_47, %c0_48] : memref<288x1xf32, #tpu.memory_space<vmem>>, vector<288x1xf32>
    %53 = vector.broadcast %52 : vector<288x1xf32> to vector<288x128xf32>
    %54 = arith.mulf %51, %53 : vector<288x128xf32>
    %cst_49 = arith.constant dense<0.000000e+00> : vector<128xf32>
    %55 = vector.multi_reduction <add>, %54, %cst_49 [0] : vector<288x128xf32> to vector<128xf32>
    %56 = vector.shape_cast %55 : vector<128xf32> to vector<1x128xf32>
    %57 = vector.shape_cast %56 : vector<1x128xf32> to vector<1x1x128xf32>
    %c0_50 = arith.constant 0 : index
    %c0_51 = arith.constant 0 : index
    %c0_52 = arith.constant 0 : index
    %58 = vector.load %arg8[%c0_50, %c0_51, %c0_52] : memref<1x1x128xf32, #tpu.memory_space<vmem>>, vector<1x1x128xf32>
    tpu.vector_store %arg8[%c0_50, %c0_51, %c0_52], %57 {strides = array<i32>} : memref<1x1x128xf32, #tpu.memory_space<vmem>>, vector<1x1x128xf32>,
    return
  }
  func.func @transform_0(%arg0: i32) -> (i32, i32, i32) {
    %c0_i32 = arith.constant 0 : i32
    %c0_i32_0 = arith.constant 0 : i32
    %c0_i32_1 = arith.constant 0 : i32
    return %arg0, %c0_i32, %c0_i32_0 : i32, i32, i32
  }
  func.func @transform_1(%arg0: i32) -> (i32, i32) {
    %c0_i32 = arith.constant 0 : i32
    %c0_i32_0 = arith.constant 0 : i32
    %c0_i32_1 = arith.constant 0 : i32
    return %c0_i32, %c0_i32_0 : i32, i32
  }
  func.func @transform_2(%arg0: i32) -> (i32, i32) {
    %c0_i32 = arith.constant 0 : i32
    %c0_i32_0 = arith.constant 0 : i32
    %c0_i32_1 = arith.constant 0 : i32
    return %c0_i32, %c0_i32_0 : i32, i32
  }
  func.func @transform_3(%arg0: i32) -> (i32, i32) {
    %c0_i32 = arith.constant 0 : i32
    %c0_i32_0 = arith.constant 0 : i32
    %c0_i32_1 = arith.constant 0 : i32
    return %c0_i32, %c0_i32_0 : i32, i32
  }
  func.func @transform_4(%arg0: i32) -> (i32, i32) {
    %c0_i32 = arith.constant 0 : i32
    %c0_i32_0 = arith.constant 0 : i32
    %c0_i32_1 = arith.constant 0 : i32
    return %c0_i32, %c0_i32_0 : i32, i32
  }
  func.func @transform_5(%arg0: i32) -> (i32, i32) {
    %c0_i32 = arith.constant 0 : i32
    %c0_i32_0 = arith.constant 0 : i32
    %c0_i32_1 = arith.constant 0 : i32
    return %c0_i32, %c0_i32_0 : i32, i32
  }
  func.func @transform_6(%arg0: i32) -> (i32, i32) {
    %c0_i32 = arith.constant 0 : i32
    %c0_i32_0 = arith.constant 0 : i32
    %c0_i32_1 = arith.constant 0 : i32
    return %c0_i32, %c0_i32_0 : i32, i32
  }
  func.func @transform_7(%arg0: i32) -> (i32, i32, i32) {
    %c0_i32 = arith.constant 0 : i32
    %c0_i32_0 = arith.constant 0 : i32
    %c0_i32_1 = arith.constant 0 : i32
    return %arg0, %c0_i32, %c0_i32_0 : i32, i32, i32
  }
}

</mosaic_0001>

<llo_original>
// kernel: backbone_forward.1
$region0: #{backbone_forward.1}
  #allocation0 [shape = 'u32[]', space=smem, size = 0x4, offset = 0x4, fixed_abs, tag = 'smem constant byte address 0x4 - core index']
  #allocation1 [shape = 'u32[72,128]{1,0:T(1,128)}', space=vmem, size = 0x9000, scoped, tag = 'internal scratch']
  #allocation2 [shape = 'bf16[352,128]{1,0:T(8,128)(2,1)}', space=vmem, size = 0x16000, scoped, tag = 'scratch operand']
  %s0 = inlined_call_operand.vmem [shape: bf16[2,336,128], index: 0, kind: input, shape index: {}]
  %s1 = inlined_call_operand.vmem [shape: bf16[1152,128], index: 1, kind: input, shape index: {}]
  %s2 = inlined_call_operand.vmem [shape: f32[1,128], index: 2, kind: input, shape index: {}]
  %s3 = inlined_call_operand.vmem [shape: bf16[1152,128], index: 3, kind: input, shape index: {}]
  %s4 = inlined_call_operand.vmem [shape: f32[1,128], index: 4, kind: input, shape index: {}]
  %s5 = inlined_call_operand.vmem [shape: f32[288,1], index: 5, kind: input, shape index: {}]
  %s6 = inlined_call_operand.vmem [shape: f32[288,1], index: 6, kind: input, shape index: {}]
  %s7 = inlined_call_operand.hbm [shape: f32[2,1,128], index: 7, kind: output, shape index: {}]
  %s8 = sld [smem:[#allocation0]]
  $region61: #{backbone_forward.1} parent=0
    _
  %s10 = ssub.s32 1, %s8
  %s11 = scalar_select 0, %s10, %s8
  $region1: #{backbone_forward.1} parent=0
    #allocation3 [shape = 'u8[1024]{0}', space=vmem, size = 0x400, scoped, tag = 'output window, operand 0']
    #allocation4 [shape = 's32[2]{0}', space=sflag, size = 0x8, scoped, tag = 'scoped memory for backbone_forward.1']
    %12 = vsyncpa [#allocation4], 0
    %s13 = scalar_lea.sflag [#allocation4], 1
    %14 = vsyncpa %s13, 0
    loop: start=0, step=1, limit=4
    $region2: #{backbone_forward.1} parent=1 // loop_pre_header
      _
    $region3: #{backbone_forward.1} parent=1 // loop_header
      %s16 = sphi 0, %s20
      %p17 = scmp.ge.s32.totalorder %s16, 4
      %s26 = sphi 0, %s28
      %s29 = sphi 0, %s26
      %s30 = sphi 0, %s29
      %s46 = sphi 0, %s30
      %s50 = sphi 0, %s50
      %s52 = sphi 0, %s50
      %s53 = sphi 0, %s52
      %s67 = sphi 0, %s53
      %s71 = sphi 0, %s71
      %s73 = sphi 0, %s71
      %s74 = sphi 0, %s73
      %s88 = sphi 0, %s74
      %s92 = sphi 0, %s92
      %s94 = sphi 0, %s92
      %s95 = sphi 0, %s94
      %s109 = sphi 0, %s95
      %s113 = sphi 0, %s113
      %s115 = sphi 0, %s113
      %s116 = sphi 0, %s115
      %s130 = sphi 0, %s116
      %s134 = sphi 0, %s134
      %s136 = sphi 0, %s134
      %s137 = sphi 0, %s136
      %s151 = sphi 0, %s137
      %s155 = sphi 0, %s155
      %s157 = sphi 0, %s155
      %s158 = sphi 0, %s157
      %s172 = sphi 0, %s158
      %s178 = sphi 0, %s180
      %s181 = sphi 0, %s178
      %s182 = sphi 0, %s181
      %s198 = sphi 0, %s182
    $region4: #{backbone_forward.1} parent=1 // loop_header_branch
      %19 = sbr.rel (%p17) target = $region8
    $region5: #{backbone_forward.1} parent=1 // loop_body
      %s21 = ssub.s32 %s16, 1
      %s22 = ssub.s32 %s16, 2
      %s23 = sadd.s32 %s16, 1
      %s24 = ssub.s32 %s16, %s23
      %p25 = scmp.eq.s32.totalorder %s24, 0
      %s27 = sadd.s32 %s26, 1
      %s28 = scalar_select %p25, %s26, %s27
      %p31 = pneg %p25
      %p32 = scmp.eq.s32.totalorder %s16, 1
      %p33 = por %p31, %p32
      %p34 = scmp.ne.s32.totalorder %s26, %s29
      %p35 = scmp.eq.s32.totalorder %s16, 0
      %p36 = por %p34, %p35
      %p37 = scmp.ne.s32.totalorder %s26, %s29
      %p38 = scmp.eq.s32.totalorder %s21, 1
      %p39 = por %p37, %p38
      %p40 = scmp.ne.s32.totalorder %s29, %s30
      %p41 = scmp.eq.s32.totalorder %s21, 0
      %p42 = por %p40, %p41
      %p43 = scmp.ne.s32.totalorder %s29, %s30
      %p44 = scmp.eq.s32.totalorder %s22, 1
      %p45 = por %p43, %p44
      %p47 = scmp.ne.s32.totalorder %s30, %s46
      %p48 = scmp.eq.s32.totalorder %s22, 0
      %p49 = por %p47, %p48
      %s51 = sadd.s32 %s50, 1
      %p54 = scmp.eq.s32.totalorder %s16, 1
      %p55 = scmp.ne.s32.totalorder %s50, %s52
      %p56 = scmp.eq.s32.totalorder %s16, 0
      %p57 = por %p55, %p56
      %p58 = scmp.ne.s32.totalorder %s50, %s52
      %p59 = scmp.eq.s32.totalorder %s21, 1
      %p60 = por %p58, %p59
      %p61 = scmp.ne.s32.totalorder %s52, %s53
      %p62 = scmp.eq.s32.totalorder %s21, 0
      %p63 = por %p61, %p62
      %p64 = scmp.ne.s32.totalorder %s52, %s53
      %p65 = scmp.eq.s32.totalorder %s22, 1
      %p66 = por %p64, %p65
      %p68 = scmp.ne.s32.totalorder %s53, %s67
      %p69 = scmp.eq.s32.totalorder %s22, 0
      %p70 = por %p68, %p69
      %s72 = sadd.s32 %s71, 1
      %p75 = scmp.eq.s32.totalorder %s16, 1
      %p76 = scmp.ne.s32.totalorder %s71, %s73
      %p77 = scmp.eq.s32.totalorder %s16, 0
      %p78 = por %p76, %p77
      %p79 = scmp.ne.s32.totalorder %s71, %s73
      %p80 = scmp.eq.s32.totalorder %s21, 1
      %p81 = por %p79, %p80
      %p82 = scmp.ne.s32.totalorder %s73, %s74
      %p83 = scmp.eq.s32.totalorder %s21, 0
      %p84 = por %p82, %p83
      %p85 = scmp.ne.s32.totalorder %s73, %s74
      %p86 = scmp.eq.s32.totalorder %s22, 1
      %p87 = por %p85, %p86
      %p89 = scmp.ne.s32.totalorder %s74, %s88
      %p90 = scmp.eq.s32.totalorder %s22, 0
      %p91 = por %p89, %p90
      %s93 = sadd.s32 %s92, 1
      %p96 = scmp.eq.s32.totalorder %s16, 1
      %p97 = scmp.ne.s32.totalorder %s92, %s94
      %p98 = scmp.eq.s32.totalorder %s16, 0
      %p99 = por %p97, %p98
      %p100 = scmp.ne.s32.totalorder %s92, %s94
      %p101 = scmp.eq.s32.totalorder %s21, 1
      %p102 = por %p100, %p101
      %p103 = scmp.ne.s32.totalorder %s94, %s95
      %p104 = scmp.eq.s32.totalorder %s21, 0
      %p105 = por %p103, %p104
      %p106 = scmp.ne.s32.totalorder %s94, %s95
      %p107 = scmp.eq.s32.totalorder %s22, 1
      %p108 = por %p106, %p107
      %p110 = scmp.ne.s32.totalorder %s95, %s109
      %p111 = scmp.eq.s32.totalorder %s22, 0
      %p112 = por %p110, %p111
      %s114 = sadd.s32 %s113, 1
      %p117 = scmp.eq.s32.totalorder %s16, 1
      %p118 = scmp.ne.s32.totalorder %s113, %s115
      %p119 = scmp.eq.s32.totalorder %s16, 0
      %p120 = por %p118, %p119
      %p121 = scmp.ne.s32.totalorder %s113, %s115
      %p122 = scmp.eq.s32.totalorder %s21, 1
      %p123 = por %p121, %p122
      %p124 = scmp.ne.s32.totalorder %s115, %s116
      %p125 = scmp.eq.s32.totalorder %s21, 0
      %p126 = por %p124, %p125
      %p127 = scmp.ne.s32.totalorder %s115, %s116
      %p128 = scmp.eq.s32.totalorder %s22, 1
      %p129 = por %p127, %p128
      %p131 = scmp.ne.s32.totalorder %s116, %s130
      %p132 = scmp.eq.s32.totalorder %s22, 0
      %p133 = por %p131, %p132
      %s135 = sadd.s32 %s134, 1
      %p138 = scmp.eq.s32.totalorder %s16, 1
      %p139 = scmp.ne.s32.totalorder %s134, %s136
      %p140 = scmp.eq.s32.totalorder %s16, 0
      %p141 = por %p139, %p140
      %p142 = scmp.ne.s32.totalorder %s134, %s136
      %p143 = scmp.eq.s32.totalorder %s21, 1
      %p144 = por %p142, %p143
      %p145 = scmp.ne.s32.totalorder %s136, %s137
      %p146 = scmp.eq.s32.totalorder %s21, 0
      %p147 = por %p145, %p146
      %p148 = scmp.ne.s32.totalorder %s136, %s137
      %p149 = scmp.eq.s32.totalorder %s22, 1
      %p150 = por %p148, %p149
      %p152 = scmp.ne.s32.totalorder %s137, %s151
      %p153 = scmp.eq.s32.totalorder %s22, 0
      %p154 = por %p152, %p153
      %s156 = sadd.s32 %s155, 1
      %p159 = scmp.eq.s32.totalorder %s16, 1
      %p160 = scmp.ne.s32.totalorder %s155, %s157
      %p161 = scmp.eq.s32.totalorder %s16, 0
      %p162 = por %p160, %p161
      %p163 = scmp.ne.s32.totalorder %s155, %s157
      %p164 = scmp.eq.s32.totalorder %s21, 1
      %p165 = por %p163, %p164
      %p166 = scmp.ne.s32.totalorder %s157, %s158
      %p167 = scmp.eq.s32.totalorder %s21, 0
      %p168 = por %p166, %p167
      %p169 = scmp.ne.s32.totalorder %s157, %s158
      %p170 = scmp.eq.s32.totalorder %s22, 1
      %p171 = por %p169, %p170
      %p173 = scmp.ne.s32.totalorder %s158, %s172
      %p174 = scmp.eq.s32.totalorder %s22, 0
      %p175 = por %p173, %p174
      %s176 = ssub.s32 %s16, %s23
      %p177 = scmp.eq.s32.totalorder %s176, 0
      %s179 = sadd.s32 %s178, 1
      %s180 = scalar_select %p177, %s178, %s179
      %p183 = pneg %p177
      %p184 = scmp.eq.s32.totalorder %s16, 1
      %p185 = por %p183, %p184
      %p186 = scmp.ne.s32.totalorder %s178, %s181
      %p187 = scmp.eq.s32.totalorder %s16, 0
      %p188 = por %p186, %p187
      %p189 = scmp.ne.s32.totalorder %s178, %s181
      %p190 = scmp.eq.s32.totalorder %s21, 1
      %p191 = por %p189, %p190
      %p192 = scmp.ne.s32.totalorder %s181, %s182
      %p193 = scmp.eq.s32.totalorder %s21, 0
      %p194 = por %p192, %p193
      %p195 = scmp.ne.s32.totalorder %s181, %s182
      %p196 = scmp.eq.s32.totalorder %s22, 1
      %p197 = por %p195, %p196
      %p199 = scmp.ne.s32.totalorder %s182, %s198
      %p200 = scmp.eq.s32.totalorder %s22, 0
      %p201 = por %p199, %p200
      %p202 = scmp.le.s32.totalorder 1, %s16
      %p203 = scmp.lt.s32.totalorder %s16, 3
      %p204 = pnand %p202, %p203
      %p205 = pneg %p204
      // Predicated region
      $region9: #{backbone_forward.1} parent=5 // pred_check
        _
      $region10: #{backbone_forward.1} parent=5 // pred_check_branch
        %207 = sbr.rel (%p204) target = $region12
      $region11: #{backbone_forward.1} parent=5 // pred_region
        %s208 = ssub.s32 %s16, 1
        // Predicated region
        $region13: #{backbone_forward.1} parent=11 // pred_check
          %p209 = pneg %p63
        $region14: #{backbone_forward.1} parent=11 // pred_check_branch
          %211 = sbr.rel (%p209) target = $region16
        $region15: #{backbone_forward.1} parent=11 // pred_region
          _
        $region16: #{backbone_forward.1} parent=11 // pred_fallthru
          _
        // Predicated region
        $region17: #{backbone_forward.1} parent=11 // pred_check
          %p212 = pneg %p84
        $region18: #{backbone_forward.1} parent=11 // pred_check_branch
          %214 = sbr.rel (%p212) target = $region20
        $region19: #{backbone_forward.1} parent=11 // pred_region
          _
        $region20: #{backbone_forward.1} parent=11 // pred_fallthru
          _
        // Predicated region
        $region21: #{backbone_forward.1} parent=11 // pred_check
          %p215 = pneg %p105
        $region22: #{backbone_forward.1} parent=11 // pred_check_branch
          %217 = sbr.rel (%p215) target = $region24
        $region23: #{backbone_forward.1} parent=11 // pred_region
          _
        $region24: #{backbone_forward.1} parent=11 // pred_fallthru
          _
        // Predicated region
        $region25: #{backbone_forward.1} parent=11 // pred_check
          %p218 = pneg %p126
        $region26: #{backbone_forward.1} parent=11 // pred_check_branch
          %220 = sbr.rel (%p218) target = $region28
        $region27: #{backbone_forward.1} parent=11 // pred_region
          _
        $region28: #{backbone_forward.1} parent=11 // pred_fallthru
          _
        // Predicated region
        $region29: #{backbone_forward.1} parent=11 // pred_check
          %p221 = pneg %p147
        $region30: #{backbone_forward.1} parent=11 // pred_check_branch
          %223 = sbr.rel (%p221) target = $region32
        $region31: #{backbone_forward.1} parent=11 // pred_region
          _
        $region32: #{backbone_forward.1} parent=11 // pred_fallthru
          _
        // Predicated region
        $region33: #{backbone_forward.1} parent=11 // pred_check
          %p224 = pneg %p168
        $region34: #{backbone_forward.1} parent=11 // pred_check_branch
          %226 = sbr.rel (%p224) target = $region36
        $region35: #{backbone_forward.1} parent=11 // pred_region
          _
        $region36: #{backbone_forward.1} parent=11 // pred_fallthru
          _
      $region12: #{backbone_forward.1} parent=5 // pred_fallthru
        _
      %p227 = scmp.lt.s32.totalorder %s16, 2
      // Predicated region
      $region37: #{backbone_forward.1} parent=5 // pred_check
        %p228 = pneg %p227
      $region38: #{backbone_forward.1} parent=5 // pred_check_branch
        %230 = sbr.rel (%p228) target = $region40
      $region39: #{backbone_forward.1} parent=5 // pred_region
        // Predicated region
        $region41: #{backbone_forward.1} parent=39 // pred_check
          %p231 = pneg %p36
        $region42: #{backbone_forward.1} parent=39 // pred_check_branch
          %233 = sbr.rel (%p231) target = $region44
        $region43: #{backbone_forward.1} parent=39 // pred_region
          %p234 = scmp.lt.s32.totalorder %s16, 1
          %s235 = scalar_select %p234, %s16, 1
          %s236 = smul.addr %s235, 42
          %s237 = smul.addr %s236, 4
          %s238 = scalar_lea.vmem %s0, %s237
        $region44: #{backbone_forward.1} parent=39 // pred_fallthru
          _
      $region40: #{backbone_forward.1} parent=5 // pred_fallthru
        _
      %p239 = scmp.le.s32.totalorder 1, %s16
      %p240 = scmp.lt.s32.totalorder %s16, 3
      %p241 = pnand %p239, %p240
      %p242 = pneg %p241
      // Predicated region
      $region45: #{backbone_forward.1} parent=5 // pred_check
        _
      $region46: #{backbone_forward.1} parent=5 // pred_check_branch
        %244 = sbr.rel (%p241) target = $region48
      $region47: #{backbone_forward.1} parent=5 // pred_region
        %s245 = ssub.s32 %s16, 1
        %p246 = scmp.lt.s32.totalorder %s21, 1
        %s247 = scalar_select %p246, %s21, 1
        %s248 = smul.addr %s247, 42
        %s249 = smul.addr %s248, 4
        %s250 = scalar_lea.vmem %s0, %s249
        %p251 = pneg %p42
        %p252 = pneg %p39
        %p253 = pneg %p63
        %p254 = pneg %p60
        %p255 = pneg %p84
        %p256 = pneg %p81
        %p257 = pneg %p105
        %p258 = pneg %p102
        %p259 = pneg %p126
        %p260 = pneg %p123
        %p261 = pneg %p147
        %p262 = pneg %p144
        %p263 = pneg %p168
        %p264 = pneg %p165
        %p265 = pneg %p194
        %p266 = pneg %p191
        %s267 = sand.u32 %s181, 1
        %s268 = scalar_lea.sflag [#allocation4], %s267
        %s269 = sand.u32 %s181, 1
        %s270 = scalar_lea.vmem [#allocation3], %s269
        %p271 = scmp.lt.s32.totalorder %s21, 1
        %s272 = scalar_select %p271, %s21, 1
        %s273 = smul.addr %s272, 42
        %s274 = smul.addr %s273, 4
        %s275 = scalar_lea.vmem %s0, %s274
        %v277 = vld [vmem:[%s275] sm:$0xf]
        %v278 = vld [vmem:[%s275 + $0x4] sm:$0xf]
        %v279 = vld [vmem:[%s275 + $0x8] sm:$0xf]
        %v280 = vld [vmem:[%s275 + $0xc] sm:$0xf]
        %v281 = vld [vmem:[%s275 + $0x10] sm:$0xf]
        %v282 = vld [vmem:[%s275 + $0x14] sm:$0xf]
        %v283 = vld [vmem:[%s275 + $0x18] sm:$0xf]
        %v284 = vld [vmem:[%s275 + $0x1c] sm:$0xf]
        %v285 = vld [vmem:[%s275 + $0x20] sm:$0xf]
        %v286 = vld [vmem:[%s275 + $0x24] sm:$0xf]
        %v287 = vld [vmem:[%s275 + $0x28] sm:$0xf]
        %v288 = vld [vmem:[%s275 + $0x2c] sm:$0xf]
        %v289 = vld [vmem:[%s275 + $0x30] sm:$0xf]
        %v290 = vld [vmem:[%s275 + $0x34] sm:$0xf]
        %v291 = vld [vmem:[%s275 + $0x38] sm:$0xf]
        %v292 = vld [vmem:[%s275 + $0x3c] sm:$0xf]
        %v293 = vld [vmem:[%s275 + $0x40] sm:$0xf]
        %v294 = vld [vmem:[%s275 + $0x44] sm:$0xf]
        %v295 = vld [vmem:[%s275 + $0x48] sm:$0xf]
        %v296 = vld [vmem:[%s275 + $0x4c] sm:$0xf]
        %v297 = vld [vmem:[%s275 + $0x50] sm:$0xf]
        %v298 = vld [vmem:[%s275 + $0x54] sm:$0xf]
        %v299 = vld [vmem:[%s275 + $0x58] sm:$0xf]
        %v300 = vld [vmem:[%s275 + $0x5c] sm:$0xf]
        %v301 = vld [vmem:[%s275 + $0x60] sm:$0xf]
        %v302 = vld [vmem:[%s275 + $0x64] sm:$0xf]
        %v303 = vld [vmem:[%s275 + $0x68] sm:$0xf]
        %v304 = vld [vmem:[%s275 + $0x6c] sm:$0xf]
        %v305 = vld [vmem:[%s275 + $0x70] sm:$0xf]
        %v306 = vld [vmem:[%s275 + $0x74] sm:$0xf]
        %v307 = vld [vmem:[%s275 + $0x78] sm:$0xf]
        %v308 = vld [vmem:[%s275 + $0x7c] sm:$0xf]
        %v309 = vld [vmem:[%s275 + $0x80] sm:$0xf]
        %v310 = vld [vmem:[%s275 + $0x84] sm:$0xf]
        %v311 = vld [vmem:[%s275 + $0x88] sm:$0xf]
        %v312 = vld [vmem:[%s275 + $0x8c] sm:$0xf]
        %v313 = vld [vmem:[%s275 + $0x90] sm:$0x1]
        %v314 = vld [vmem:[%s275] sm:$0xe]
        %v315 = vld [vmem:[%s275 + $0x8] sm:$0xe]
        %v316 = vld [vmem:[%s275 + $0x90] sm:$0xf]
        %v317 = vld [vmem:[%s275 + $0x94] sm:$0xf]
        %v318 = vld [vmem:[%s275 + $0x98] sm:$0x1]
        %v319 = vld [vmem:[%s275 + $0x98] sm:$0x3]
        %v320 = vld [vmem:[%s275 + $0x8] sm:$0xc]
        %v321 = vld [vmem:[%s275 + $0x10] sm:$0xc]
        %v322 = vld [vmem:[%s275 + $0x98] sm:$0xf]
        %v323 = vld [vmem:[%s275 + $0x9c] sm:$0xf]
        %v324 = vld [vmem:[%s275 + $0xa0] sm:$0x3]
        %v325 = vld [vmem:[%s275 + $0xa0] sm:$0x7]
        %v326 = vld [vmem:[%s275 + $0x10] sm:$0x8]
        %v363 = vunpack.c.l.b16 %v277
        %v364 = vunpack.c.l.b16 %v278
        %v365 = vunpack.c.l.b16 %v279
        %v366 = vunpack.c.l.b16 %v280
        %v367 = vunpack.c.l.b16 %v281
        %v368 = vunpack.c.l.b16 %v282
        %v369 = vunpack.c.l.b16 %v283
        %v370 = vunpack.c.l.b16 %v284
        %v371 = vunpack.c.l.b16 %v285
        %v372 = vunpack.c.l.b16 %v286
        %v373 = vunpack.c.l.b16 %v287
        %v374 = vunpack.c.l.b16 %v288
        %v375 = vunpack.c.l.b16 %v289
        %v376 = vunpack.c.l.b16 %v290
        %v377 = vunpack.c.l.b16 %v291
        %v378 = vunpack.c.l.b16 %v292
        %v379 = vunpack.c.l.b16 %v293
        %v380 = vunpack.c.l.b16 %v294
        %v381 = vunpack.c.l.b16 %v295
        %v382 = vunpack.c.l.b16 %v296
        %v383 = vunpack.c.l.b16 %v297
        %v384 = vunpack.c.l.b16 %v298
        %v385 = vunpack.c.l.b16 %v299
        %v386 = vunpack.c.l.b16 %v300
        %v387 = vunpack.c.l.b16 %v301
        %v388 = vunpack.c.l.b16 %v302
        %v389 = vunpack.c.l.b16 %v303
        %v390 = vunpack.c.l.b16 %v304
        %v391 = vunpack.c.l.b16 %v305
        %v392 = vunpack.c.l.b16 %v306
        %v393 = vunpack.c.l.b16 %v307
        %v394 = vunpack.c.l.b16 %v308
        %v395 = vunpack.c.l.b16 %v309
        %v396 = vunpack.c.l.b16 %v310
        %v397 = vunpack.c.l.b16 %v311
        %v398 = vunpack.c.l.b16 %v312
        %v399 = vpack.c.b16 %v364, %v363
        %v400 = vpack.c.b16 %v366, %v365
        %v401 = vpack.c.b16 %v368, %v367
        %v402 = vpack.c.b16 %v370, %v369
        %v403 = vpack.c.b16 %v372, %v371
        %v404 = vpack.c.b16 %v374, %v373
        %v405 = vpack.c.b16 %v376, %v375
        %v406 = vpack.c.b16 %v378, %v377
        %v407 = vpack.c.b16 %v380, %v379
        %v408 = vpack.c.b16 %v382, %v381
        %v409 = vpack.c.b16 %v384, %v383
        %v410 = vpack.c.b16 %v386, %v385
        %v411 = vpack.c.b16 %v388, %v387
        %v412 = vpack.c.b16 %v390, %v389
        %v413 = vpack.c.b16 %v392, %v391
        %v414 = vpack.c.b16 %v394, %v393
        %v415 = vpack.c.b16 %v396, %v395
        %v416 = vpack.c.b16 %v398, %v397
        %v436 = vunpack.c.l.b16 %v313
        %v437 = vpack.c.b16 %v436, %v436
        %vm438 = vsmask.f32 7424
        %v440 = vshrl.u32 %v399, 16
        %v442 = vshll.u32 %v399, 16
        %v444 = vrot.slane %v442, 1
        %v445 = vor.u32 %v440, %v444
        %v447 = vshll.u32 %v400, 16
        %v449 = vrot.slane %v447, 1
        %v450 = vsel %vm438, %v445, %v449
        %v451 = vshrl.u32 %v400, 16
        %v453 = vor.u32 %v451, %v449
        %v455 = vshll.u32 %v401, 16
        %v457 = vrot.slane %v455, 1
        %v458 = vsel %vm438, %v453, %v457
        %v459 = vshrl.u32 %v401, 16
        %v461 = vor.u32 %v459, %v457
        %v463 = vshll.u32 %v402, 16
        %v465 = vrot.slane %v463, 1
        %v466 = vsel %vm438, %v461, %v465
        %v467 = vshrl.u32 %v402, 16
        %v469 = vor.u32 %v467, %v465
        %v471 = vshll.u32 %v403, 16
        %v473 = vrot.slane %v471, 1
        %v474 = vsel %vm438, %v469, %v473
        %v475 = vshrl.u32 %v403, 16
        %v477 = vor.u32 %v475, %v473
        %v479 = vshll.u32 %v404, 16
        %v481 = vrot.slane %v479, 1
        %v482 = vsel %vm438, %v477, %v481
        %v483 = vshrl.u32 %v404, 16
        %v485 = vor.u32 %v483, %v481
        %v487 = vshll.u32 %v405, 16
        %v489 = vrot.slane %v487, 1
        %v490 = vsel %vm438, %v485, %v489
        %v491 = vshrl.u32 %v405, 16
        %v493 = vor.u32 %v491, %v489
        %v495 = vshll.u32 %v406, 16
        %v497 = vrot.slane %v495, 1
        %v498 = vsel %vm438, %v493, %v497
        %v499 = vshrl.u32 %v406, 16
        %v501 = vor.u32 %v499, %v497
        %v503 = vshll.u32 %v407, 16
        %v505 = vrot.slane %v503, 1
        %v506 = vsel %vm438, %v501, %v505
        %v507 = vshrl.u32 %v407, 16
        %v509 = vor.u32 %v507, %v505
        %v511 = vshll.u32 %v408, 16
        %v513 = vrot.slane %v511, 1
        %v514 = vsel %vm438, %v509, %v513
        %v515 = vshrl.u32 %v408, 16
        %v517 = vor.u32 %v515, %v513
        %v519 = vshll.u32 %v409, 16
        %v521 = vrot.slane %v519, 1
        %v522 = vsel %vm438, %v517, %v521
        %v523 = vshrl.u32 %v409, 16
        %v525 = vor.u32 %v523, %v521
        %v527 = vshll.u32 %v410, 16
        %v529 = vrot.slane %v527, 1
        %v530 = vsel %vm438, %v525, %v529
        %v531 = vshrl.u32 %v410, 16
        %v533 = vor.u32 %v531, %v529
        %v535 = vshll.u32 %v411, 16
        %v537 = vrot.slane %v535, 1
        %v538 = vsel %vm438, %v533, %v537
        %v539 = vshrl.u32 %v411, 16
        %v541 = vor.u32 %v539, %v537
        %v543 = vshll.u32 %v412, 16
        %v545 = vrot.slane %v543, 1
        %v546 = vsel %vm438, %v541, %v545
        %v547 = vshrl.u32 %v412, 16
        %v549 = vor.u32 %v547, %v545
        %v551 = vshll.u32 %v413, 16
        %v553 = vrot.slane %v551, 1
        %v554 = vsel %vm438, %v549, %v553
        %v555 = vshrl.u32 %v413, 16
        %v557 = vor.u32 %v555, %v553
        %v559 = vshll.u32 %v414, 16
        %v561 = vrot.slane %v559, 1
        %v562 = vsel %vm438, %v557, %v561
        %v563 = vshrl.u32 %v414, 16
        %v565 = vor.u32 %v563, %v561
        %v567 = vshll.u32 %v415, 16
        %v569 = vrot.slane %v567, 1
        %v570 = vsel %vm438, %v565, %v569
        %v571 = vshrl.u32 %v415, 16
        %v573 = vor.u32 %v571, %v569
        %v575 = vshll.u32 %v416, 16
        %v577 = vrot.slane %v575, 1
        %v578 = vsel %vm438, %v573, %v577
        %v579 = vshrl.u32 %v416, 16
        %v581 = vor.u32 %v579, %v577
        %v583 = vshll.u32 %v437, 16
        %v585 = vrot.slane %v583, 1
        %v586 = vsel %vm438, %v581, %v585
        %v606 = vunpack.c.l.b16 %v314
        %v607 = vpack.c.b16 %v364, %v606
        %vm608 = vcmask 1046528
        %v609 = vrot.slane %v607, 1
        %v610 = vrot.slane %v400, 1
        %v611 = vsel %vm608, %v609, %v610
        %v612 = vrot.slane %v401, 1
        %v613 = vsel %vm608, %v610, %v612
        %v614 = vrot.slane %v402, 1
        %v615 = vsel %vm608, %v612, %v614
        %v616 = vrot.slane %v403, 1
        %v617 = vsel %vm608, %v614, %v616
        %v618 = vrot.slane %v404, 1
        %v619 = vsel %vm608, %v616, %v618
        %v620 = vrot.slane %v405, 1
        %v621 = vsel %vm608, %v618, %v620
        %v622 = vrot.slane %v406, 1
        %v623 = vsel %vm608, %v620, %v622
        %v624 = vrot.slane %v407, 1
        %v625 = vsel %vm608, %v622, %v624
        %v626 = vrot.slane %v408, 1
        %v627 = vsel %vm608, %v624, %v626
        %v628 = vrot.slane %v409, 1
        %v629 = vsel %vm608, %v626, %v628
        %v630 = vrot.slane %v410, 1
        %v631 = vsel %vm608, %v628, %v630
        %v632 = vrot.slane %v411, 1
        %v633 = vsel %vm608, %v630, %v632
        %v634 = vrot.slane %v412, 1
        %v635 = vsel %vm608, %v632, %v634
        %v636 = vrot.slane %v413, 1
        %v637 = vsel %vm608, %v634, %v636
        %v638 = vrot.slane %v414, 1
        %v639 = vsel %vm608, %v636, %v638
        %v640 = vrot.slane %v415, 1
        %v641 = vsel %vm608, %v638, %v640
        %v642 = vrot.slane %v416, 1
        %v643 = vsel %vm608, %v640, %v642
        %v644 = vrot.slane %v437, 1
        %v645 = vsel %vm608, %v642, %v644
        %v668 = vunpack.c.l.b16 %v315
        %v669 = vunpack.c.l.b16 %v316
        %v670 = vunpack.c.l.b16 %v317
        %v671 = vunpack.c.l.b16 %v318
        %v672 = vpack.c.b16 %v366, %v668
        %v673 = vpack.c.b16 %v670, %v669
        %v674 = vpack.c.b16 %v671, %v671
        %v675 = vrot.slane %v672, 1
        %v676 = vsel %vm608, %v675, %v612
        %v677 = vrot.slane %v673, 1
        %v678 = vsel %vm608, %v642, %v677
        %v679 = vrot.slane %v674, 1
        %v680 = vsel %vm608, %v677, %v679
        %v685 = vunpack.c.l.b16 %v319
        %v686 = vpack.c.b16 %v685, %v685
        %vm687 = vsmask.f32 6400
        %v689 = vshrl.u32 %v672, 16
        %v691 = vrot.slane %v689, 1
        %v692 = vshll.u32 %v672, 16
        %v694 = vrot.slane %v692, 2
        %v695 = vor.u32 %v691, %v694
        %v696 = vrot.slane %v459, 1
        %v697 = vrot.slane %v455, 2
        %v698 = vor.u32 %v696, %v697
        %v699 = vsel %vm687, %v695, %v698
        %v700 = vrot.slane %v467, 1
        %v701 = vrot.slane %v463, 2
        %v702 = vor.u32 %v700, %v701
        %v703 = vsel %vm687, %v698, %v702
        %v704 = vrot.slane %v475, 1
        %v705 = vrot.slane %v471, 2
        %v706 = vor.u32 %v704, %v705
        %v707 = vsel %vm687, %v702, %v706
        %v708 = vrot.slane %v483, 1
        %v709 = vrot.slane %v479, 2
        %v710 = vor.u32 %v708, %v709
        %v711 = vsel %vm687, %v706, %v710
        %v712 = vrot.slane %v491, 1
        %v713 = vrot.slane %v487, 2
        %v714 = vor.u32 %v712, %v713
        %v715 = vsel %vm687, %v710, %v714
        %v716 = vrot.slane %v499, 1
        %v717 = vrot.slane %v495, 2
        %v718 = vor.u32 %v716, %v717
        %v719 = vsel %vm687, %v714, %v718
        %v720 = vrot.slane %v507, 1
        %v721 = vrot.slane %v503, 2
        %v722 = vor.u32 %v720, %v721
        %v723 = vsel %vm687, %v718, %v722
        %v724 = vrot.slane %v515, 1
        %v725 = vrot.slane %v511, 2
        %v726 = vor.u32 %v724, %v725
        %v727 = vsel %vm687, %v722, %v726
        %v728 = vrot.slane %v523, 1
        %v729 = vrot.slane %v519, 2
        %v730 = vor.u32 %v728, %v729
        %v731 = vsel %vm687, %v726, %v730
        %v732 = vrot.slane %v531, 1
        %v733 = vrot.slane %v527, 2
        %v734 = vor.u32 %v732, %v733
        %v735 = vsel %vm687, %v730, %v734
        %v736 = vrot.slane %v539, 1
        %v737 = vrot.slane %v535, 2
        %v738 = vor.u32 %v736, %v737
        %v739 = vsel %vm687, %v734, %v738
        %v740 = vrot.slane %v547, 1
        %v741 = vrot.slane %v543, 2
        %v742 = vor.u32 %v740, %v741
        %v743 = vsel %vm687, %v738, %v742
        %v744 = vrot.slane %v555, 1
        %v745 = vrot.slane %v551, 2
        %v746 = vor.u32 %v744, %v745
        %v747 = vsel %vm687, %v742, %v746
        %v748 = vrot.slane %v563, 1
        %v749 = vrot.slane %v559, 2
        %v750 = vor.u32 %v748, %v749
        %v751 = vsel %vm687, %v746, %v750
        %v752 = vrot.slane %v571, 1
        %v753 = vrot.slane %v567, 2
        %v754 = vor.u32 %v752, %v753
        %v755 = vsel %vm687, %v750, %v754
        %v756 = vrot.slane %v579, 1
        %v757 = vrot.slane %v575, 2
        %v758 = vor.u32 %v756, %v757
        %v759 = vsel %vm687, %v754, %v758
        %v761 = vshrl.u32 %v673, 16
        %v763 = vrot.slane %v761, 1
        %v764 = vshll.u32 %v673, 16
        %v766 = vrot.slane %v764, 2
        %v767 = vor.u32 %v763, %v766
        %v768 = vsel %vm687, %v758, %v767
        %v770 = vshrl.u32 %v686, 16
        %v772 = vrot.slane %v770, 1
        %v773 = vshll.u32 %v686, 16
        %v775 = vrot.slane %v773, 2
        %v776 = vor.u32 %v772, %v775
        %v777 = vsel %vm687, %v767, %v776
        %v797 = vunpack.c.l.b16 %v320
        %v798 = vpack.c.b16 %v366, %v797
        %vm799 = vcmask 1045504
        %v800 = vrot.slane %v798, 2
        %v801 = vrot.slane %v401, 2
        %v802 = vsel %vm799, %v800, %v801
        %v803 = vrot.slane %v402, 2
        %v804 = vsel %vm799, %v801, %v803
        %v805 = vrot.slane %v403, 2
        %v806 = vsel %vm799, %v803, %v805
        %v807 = vrot.slane %v404, 2
        %v808 = vsel %vm799, %v805, %v807
        %v809 = vrot.slane %v405, 2
        %v810 = vsel %vm799, %v807, %v809
        %v811 = vrot.slane %v406, 2
        %v812 = vsel %vm799, %v809, %v811
        %v813 = vrot.slane %v407, 2
        %v814 = vsel %vm799, %v811, %v813
        %v815 = vrot.slane %v408, 2
        %v816 = vsel %vm799, %v813, %v815
        %v817 = vrot.slane %v409, 2
        %v818 = vsel %vm799, %v815, %v817
        %v819 = vrot.slane %v410, 2
        %v820 = vsel %vm799, %v817, %v819
        %v821 = vrot.slane %v411, 2
        %v822 = vsel %vm799, %v819, %v821
        %v823 = vrot.slane %v412, 2
        %v824 = vsel %vm799, %v821, %v823
        %v825 = vrot.slane %v413, 2
        %v826 = vsel %vm799, %v823, %v825
        %v827 = vrot.slane %v414, 2
        %v828 = vsel %vm799, %v825, %v827
        %v829 = vrot.slane %v415, 2
        %v830 = vsel %vm799, %v827, %v829
        %v831 = vrot.slane %v416, 2
        %v832 = vsel %vm799, %v829, %v831
        %v833 = vrot.slane %v673, 2
        %v834 = vsel %vm799, %v831, %v833
        %v835 = vrot.slane %v686, 2
        %v836 = vsel %vm799, %v833, %v835
        %v859 = vunpack.c.l.b16 %v321
        %v860 = vunpack.c.l.b16 %v322
        %v861 = vunpack.c.l.b16 %v323
        %v862 = vunpack.c.l.b16 %v324
        %v863 = vpack.c.b16 %v368, %v859
        %v864 = vpack.c.b16 %v861, %v860
        %v865 = vpack.c.b16 %v862, %v862
        %v866 = vrot.slane %v863, 2
        %v867 = vsel %vm799, %v866, %v803
        %v868 = vrot.slane %v864, 2
        %v869 = vsel %vm799, %v833, %v868
        %v870 = vrot.slane %v865, 2
        %v871 = vsel %vm799, %v868, %v870
        %v876 = vunpack.c.l.b16 %v325
        %v877 = vpack.c.b16 %v876, %v876
        %vm878 = vsmask.f32 5376
        %v880 = vshrl.u32 %v863, 16
        %v882 = vrot.slane %v880, 2
        %v883 = vshll.u32 %v863, 16
        %v885 = vrot.slane %v883, 3
        %v886 = vor.u32 %v882, %v885
        %v887 = vrot.slane %v467, 2
        %v888 = vrot.slane %v463, 3
        %v889 = vor.u32 %v887, %v888
        %v890 = vsel %vm878, %v886, %v889
        %v891 = vrot.slane %v475, 2
        %v892 = vrot.slane %v471, 3
        %v893 = vor.u32 %v891, %v892
        %v894 = vsel %vm878, %v889, %v893
        %v895 = vrot.slane %v483, 2
        %v896 = vrot.slane %v479, 3
        %v897 = vor.u32 %v895, %v896
        %v898 = vsel %vm878, %v893, %v897
        %v899 = vrot.slane %v491, 2
        %v900 = vrot.slane %v487, 3
        %v901 = vor.u32 %v899, %v900
        %v902 = vsel %vm878, %v897, %v901
        %v903 = vrot.slane %v499, 2
        %v904 = vrot.slane %v495, 3
        %v905 = vor.u32 %v903, %v904
        %v906 = vsel %vm878, %v901, %v905
        %v907 = vrot.slane %v507, 2
        %v908 = vrot.slane %v503, 3
        %v909 = vor.u32 %v907, %v908
        %v910 = vsel %vm878, %v905, %v909
        %v911 = vrot.slane %v515, 2
        %v912 = vrot.slane %v511, 3
        %v913 = vor.u32 %v911, %v912
        %v914 = vsel %vm878, %v909, %v913
        %v915 = vrot.slane %v523, 2
        %v916 = vrot.slane %v519, 3
        %v917 = vor.u32 %v915, %v916
        %v918 = vsel %vm878, %v913, %v917
        %v919 = vrot.slane %v531, 2
        %v920 = vrot.slane %v527, 3
        %v921 = vor.u32 %v919, %v920
        %v922 = vsel %vm878, %v917, %v921
        %v923 = vrot.slane %v539, 2
        %v924 = vrot.slane %v535, 3
        %v925 = vor.u32 %v923, %v924
        %v926 = vsel %vm878, %v921, %v925
        %v927 = vrot.slane %v547, 2
        %v928 = vrot.slane %v543, 3
        %v929 = vor.u32 %v927, %v928
        %v930 = vsel %vm878, %v925, %v929
        %v931 = vrot.slane %v555, 2
        %v932 = vrot.slane %v551, 3
        %v933 = vor.u32 %v931, %v932
        %v934 = vsel %vm878, %v929, %v933
        %v935 = vrot.slane %v563, 2
        %v936 = vrot.slane %v559, 3
        %v937 = vor.u32 %v935, %v936
        %v938 = vsel %vm878, %v933, %v937
        %v939 = vrot.slane %v571, 2
        %v940 = vrot.slane %v567, 3
        %v941 = vor.u32 %v939, %v940
        %v942 = vsel %vm878, %v937, %v941
        %v943 = vrot.slane %v579, 2
        %v944 = vrot.slane %v575, 3
        %v945 = vor.u32 %v943, %v944
        %v946 = vsel %vm878, %v941, %v945
        %v947 = vrot.slane %v761, 2
        %v948 = vrot.slane %v764, 3
        %v949 = vor.u32 %v947, %v948
        %v950 = vsel %vm878, %v945, %v949
        %v952 = vshrl.u32 %v864, 16
        %v954 = vrot.slane %v952, 2
        %v955 = vshll.u32 %v864, 16
        %v957 = vrot.slane %v955, 3
        %v958 = vor.u32 %v954, %v957
        %v959 = vsel %vm878, %v949, %v958
        %v961 = vshrl.u32 %v877, 16
        %v963 = vrot.slane %v961, 2
        %v964 = vshll.u32 %v877, 16
        %v966 = vrot.slane %v964, 3
        %v967 = vor.u32 %v963, %v966
        %v968 = vsel %vm878, %v958, %v967
        %v988 = vunpack.c.l.b16 %v326
        %v989 = vpack.c.b16 %v368, %v988
        %vm990 = vcmask 1044480
        %v991 = vrot.slane %v989, 3
        %v992 = vrot.slane %v402, 3
        %v993 = vsel %vm990, %v991, %v992
        %v994 = vrot.slane %v403, 3
        %v995 = vsel %vm990, %v992, %v994
        %v996 = vrot.slane %v404, 3
        %v997 = vsel %vm990, %v994, %v996
        %v998 = vrot.slane %v405, 3
        %v999 = vsel %vm990, %v996, %v998
        %v1000 = vrot.slane %v406, 3
        %v1001 = vsel %vm990, %v998, %v1000
        %v1002 = vrot.slane %v407, 3
        %v1003 = vsel %vm990, %v1000, %v1002
        %v1004 = vrot.slane %v408, 3
        %v1005 = vsel %vm990, %v1002, %v1004
        %v1006 = vrot.slane %v409, 3
        %v1007 = vsel %vm990, %v1004, %v1006
        %v1008 = vrot.slane %v410, 3
        %v1009 = vsel %vm990, %v1006, %v1008
        %v1010 = vrot.slane %v411, 3
        %v1011 = vsel %vm990, %v1008, %v1010
        %v1012 = vrot.slane %v412, 3
        %v1013 = vsel %vm990, %v1010, %v1012
        %v1014 = vrot.slane %v413, 3
        %v1015 = vsel %vm990, %v1012, %v1014
        %v1016 = vrot.slane %v414, 3
        %v1017 = vsel %vm990, %v1014, %v1016
        %v1018 = vrot.slane %v415, 3
        %v1019 = vsel %vm990, %v1016, %v1018
        %v1020 = vrot.slane %v416, 3
        %v1021 = vsel %vm990, %v1018, %v1020
        %v1022 = vrot.slane %v673, 3
        %v1023 = vsel %vm990, %v1020, %v1022
        %v1024 = vrot.slane %v864, 3
        %v1025 = vsel %vm990, %v1022, %v1024
        %v1026 = vrot.slane %v877, 3
        %v1027 = vsel %vm990, %v1024, %v1026
        %v1046 = vld [vmem:[%s1] sm:$0xf]
        %v1047 = vld [vmem:[%s1 + $0x4] sm:$0xf]
        %v1048 = vld [vmem:[%s1 + $0x8] sm:$0xf]
        %v1049 = vld [vmem:[%s1 + $0xc] sm:$0xf]
        %v1050 = vld [vmem:[%s1 + $0x10] sm:$0xf]
        %v1051 = vld [vmem:[%s1 + $0x14] sm:$0xf]
        %v1052 = vld [vmem:[%s1 + $0x18] sm:$0xf]
        %v1053 = vld [vmem:[%s1 + $0x1c] sm:$0xf]
        %v1054 = vld [vmem:[%s1 + $0x20] sm:$0xf]
        %v1055 = vld [vmem:[%s1 + $0x24] sm:$0xf]
        %v1056 = vld [vmem:[%s1 + $0x28] sm:$0xf]
        %v1057 = vld [vmem:[%s1 + $0x2c] sm:$0xf]
        %v1058 = vld [vmem:[%s1 + $0x30] sm:$0xf]
        %v1059 = vld [vmem:[%s1 + $0x34] sm:$0xf]
        %v1060 = vld [vmem:[%s1 + $0x38] sm:$0xf]
        %v1061 = vld [vmem:[%s1 + $0x3c] sm:$0xf]
        %v1062 = vld [vmem:[%s1 + $0x40] sm:$0xf]
        %v1063 = vld [vmem:[%s1 + $0x44] sm:$0xf]
        %v1064 = vld [vmem:[%s1 + $0x48] sm:$0xf]
        %v1065 = vld [vmem:[%s1 + $0x4c] sm:$0xf]
        %v1066 = vld [vmem:[%s1 + $0x50] sm:$0xf]
        %v1067 = vld [vmem:[%s1 + $0x54] sm:$0xf]
        %v1068 = vld [vmem:[%s1 + $0x58] sm:$0xf]
        %v1069 = vld [vmem:[%s1 + $0x5c] sm:$0xf]
        %v1070 = vld [vmem:[%s1 + $0x60] sm:$0xf]
        %v1071 = vld [vmem:[%s1 + $0x64] sm:$0xf]
        %v1072 = vld [vmem:[%s1 + $0x68] sm:$0xf]
        %v1073 = vld [vmem:[%s1 + $0x6c] sm:$0xf]
        %v1074 = vld [vmem:[%s1 + $0x70] sm:$0xf]
        %v1075 = vld [vmem:[%s1 + $0x74] sm:$0xf]
        %v1076 = vld [vmem:[%s1 + $0x78] sm:$0xf]
        %v1077 = vld [vmem:[%s1 + $0x7c] sm:$0xf]
        %v1078 = vld [vmem:[%s1 + $0x80] sm:$0xf]
        %v1079 = vld [vmem:[%s1 + $0x84] sm:$0xf]
        %v1080 = vld [vmem:[%s1 + $0x88] sm:$0xf]
        %v1081 = vld [vmem:[%s1 + $0x8c] sm:$0xf]
        %v1082 = vld [vmem:[%s1 + $0x90] sm:$0xf]
        %v1083 = vld [vmem:[%s1 + $0x94] sm:$0xf]
        %v1084 = vld [vmem:[%s1 + $0x98] sm:$0xf]
        %v1085 = vld [vmem:[%s1 + $0x9c] sm:$0xf]
        %v1086 = vld [vmem:[%s1 + $0xa0] sm:$0xf]
        %v1087 = vld [vmem:[%s1 + $0xa4] sm:$0xf]
        %v1088 = vld [vmem:[%s1 + $0xa8] sm:$0xf]
        %v1089 = vld [vmem:[%s1 + $0xac] sm:$0xf]
        %v1090 = vld [vmem:[%s1 + $0xb0] sm:$0xf]
        %v1091 = vld [vmem:[%s1 + $0xb4] sm:$0xf]
        %v1092 = vld [vmem:[%s1 + $0xb8] sm:$0xf]
        %v1093 = vld [vmem:[%s1 + $0xbc] sm:$0xf]
        %v1094 = vld [vmem:[%s1 + $0xc0] sm:$0xf]
        %v1095 = vld [vmem:[%s1 + $0xc4] sm:$0xf]
        %v1096 = vld [vmem:[%s1 + $0xc8] sm:$0xf]
        %v1097 = vld [vmem:[%s1 + $0xcc] sm:$0xf]
        %v1098 = vld [vmem:[%s1 + $0xd0] sm:$0xf]
        %v1099 = vld [vmem:[%s1 + $0xd4] sm:$0xf]
        %v1100 = vld [vmem:[%s1 + $0xd8] sm:$0xf]
        %v1101 = vld [vmem:[%s1 + $0xdc] sm:$0xf]
        %v1102 = vld [vmem:[%s1 + $0xe0] sm:$0xf]
        %v1103 = vld [vmem:[%s1 + $0xe4] sm:$0xf]
        %v1104 = vld [vmem:[%s1 + $0xe8] sm:$0xf]
        %v1105 = vld [vmem:[%s1 + $0xec] sm:$0xf]
        %v1106 = vld [vmem:[%s1 + $0xf0] sm:$0xf]
        %v1107 = vld [vmem:[%s1 + $0xf4] sm:$0xf]
        %v1108 = vld [vmem:[%s1 + $0xf8] sm:$0xf]
        %v1109 = vld [vmem:[%s1 + $0xfc] sm:$0xf]
        %v1110 = vld [vmem:[%s1 + $0x100] sm:$0xf]
        %v1111 = vld [vmem:[%s1 + $0x104] sm:$0xf]
        %v1112 = vld [vmem:[%s1 + $0x108] sm:$0xf]
        %v1113 = vld [vmem:[%s1 + $0x10c] sm:$0xf]
        %v1114 = vld [vmem:[%s1 + $0x110] sm:$0xf]
        %v1115 = vld [vmem:[%s1 + $0x114] sm:$0xf]
        %v1116 = vld [vmem:[%s1 + $0x118] sm:$0xf]
        %v1117 = vld [vmem:[%s1 + $0x11c] sm:$0xf]
        %v1118 = vld [vmem:[%s1 + $0x120] sm:$0xf]
        %v1119 = vld [vmem:[%s1 + $0x124] sm:$0xf]
        %v1120 = vld [vmem:[%s1 + $0x128] sm:$0xf]
        %v1121 = vld [vmem:[%s1 + $0x12c] sm:$0xf]
        %v1122 = vld [vmem:[%s1 + $0x130] sm:$0xf]
        %v1123 = vld [vmem:[%s1 + $0x134] sm:$0xf]
        %v1124 = vld [vmem:[%s1 + $0x138] sm:$0xf]
        %v1125 = vld [vmem:[%s1 + $0x13c] sm:$0xf]
        %v1126 = vld [vmem:[%s1 + $0x140] sm:$0xf]
        %v1127 = vld [vmem:[%s1 + $0x144] sm:$0xf]
        %v1128 = vld [vmem:[%s1 + $0x148] sm:$0xf]
        %v1129 = vld [vmem:[%s1 + $0x14c] sm:$0xf]
        %v1130 = vld [vmem:[%s1 + $0x150] sm:$0xf]
        %v1131 = vld [vmem:[%s1 + $0x154] sm:$0xf]
        %v1132 = vld [vmem:[%s1 + $0x158] sm:$0xf]
        %v1133 = vld [vmem:[%s1 + $0x15c] sm:$0xf]
        %v1134 = vld [vmem:[%s1 + $0x160] sm:$0xf]
        %v1135 = vld [vmem:[%s1 + $0x164] sm:$0xf]
        %v1136 = vld [vmem:[%s1 + $0x168] sm:$0xf]
        %v1137 = vld [vmem:[%s1 + $0x16c] sm:$0xf]
        %v1138 = vld [vmem:[%s1 + $0x170] sm:$0xf]
        %v1139 = vld [vmem:[%s1 + $0x174] sm:$0xf]
        %v1140 = vld [vmem:[%s1 + $0x178] sm:$0xf]
        %v1141 = vld [vmem:[%s1 + $0x17c] sm:$0xf]
        %v1142 = vld [vmem:[%s1 + $0x180] sm:$0xf]
        %v1143 = vld [vmem:[%s1 + $0x184] sm:$0xf]
        %v1144 = vld [vmem:[%s1 + $0x188] sm:$0xf]
        %v1145 = vld [vmem:[%s1 + $0x18c] sm:$0xf]
        %v1146 = vld [vmem:[%s1 + $0x190] sm:$0xf]
        %v1147 = vld [vmem:[%s1 + $0x194] sm:$0xf]
        %v1148 = vld [vmem:[%s1 + $0x198] sm:$0xf]
        %v1149 = vld [vmem:[%s1 + $0x19c] sm:$0xf]
        %v1150 = vld [vmem:[%s1 + $0x1a0] sm:$0xf]
        %v1151 = vld [vmem:[%s1 + $0x1a4] sm:$0xf]
        %v1152 = vld [vmem:[%s1 + $0x1a8] sm:$0xf]
        %v1153 = vld [vmem:[%s1 + $0x1ac] sm:$0xf]
        %v1154 = vld [vmem:[%s1 + $0x1b0] sm:$0xf]
        %v1155 = vld [vmem:[%s1 + $0x1b4] sm:$0xf]
        %v1156 = vld [vmem:[%s1 + $0x1b8] sm:$0xf]
        %v1157 = vld [vmem:[%s1 + $0x1bc] sm:$0xf]
        %v1158 = vld [vmem:[%s1 + $0x1c0] sm:$0xf]
        %v1159 = vld [vmem:[%s1 + $0x1c4] sm:$0xf]
        %v1160 = vld [vmem:[%s1 + $0x1c8] sm:$0xf]
        %v1161 = vld [vmem:[%s1 + $0x1cc] sm:$0xf]
        %v1162 = vld [vmem:[%s1 + $0x1d0] sm:$0xf]
        %v1163 = vld [vmem:[%s1 + $0x1d4] sm:$0xf]
        %v1164 = vld [vmem:[%s1 + $0x1d8] sm:$0xf]
        %v1165 = vld [vmem:[%s1 + $0x1dc] sm:$0xf]
        %v1166 = vld [vmem:[%s1 + $0x1e0] sm:$0xf]
        %v1167 = vld [vmem:[%s1 + $0x1e4] sm:$0xf]
        %v1168 = vld [vmem:[%s1 + $0x1e8] sm:$0xf]
        %v1169 = vld [vmem:[%s1 + $0x1ec] sm:$0xf]
        %v1170 = vld [vmem:[%s1 + $0x1f0] sm:$0xf]
        %v1171 = vld [vmem:[%s1 + $0x1f4] sm:$0xf]
        %v1172 = vld [vmem:[%s1 + $0x1f8] sm:$0xf]
        %v1173 = vld [vmem:[%s1 + $0x1fc] sm:$0xf]
        %v1174 = vld [vmem:[%s1 + $0x200] sm:$0xf]
        %v1175 = vld [vmem:[%s1 + $0x204] sm:$0xf]
        %v1176 = vld [vmem:[%s1 + $0x208] sm:$0xf]
        %v1177 = vld [vmem:[%s1 + $0x20c] sm:$0xf]
        %v1178 = vld [vmem:[%s1 + $0x210] sm:$0xf]
        %v1179 = vld [vmem:[%s1 + $0x214] sm:$0xf]
        %v1180 = vld [vmem:[%s1 + $0x218] sm:$0xf]
        %v1181 = vld [vmem:[%s1 + $0x21c] sm:$0xf]
        %v1182 = vld [vmem:[%s1 + $0x220] sm:$0xf]
        %v1183 = vld [vmem:[%s1 + $0x224] sm:$0xf]
        %v1184 = vld [vmem:[%s1 + $0x228] sm:$0xf]
        %v1185 = vld [vmem:[%s1 + $0x22c] sm:$0xf]
        %v1186 = vld [vmem:[%s1 + $0x230] sm:$0xf]
        %v1187 = vld [vmem:[%s1 + $0x234] sm:$0xf]
        %v1188 = vld [vmem:[%s1 + $0x238] sm:$0xf]
        %v1189 = vld [vmem:[%s1 + $0x23c] sm:$0xf]
        %v1190 = vld [vmem:[%s2] sm:$0x1]
        %v1192 = vperm.slane %v1190, 0
        %v1338 = vunpack.c.l.b16 %v1046
        %v1339 = vunpack.c.l.b16 %v1047
        %v1340 = vunpack.c.l.b16 %v1048
        %v1341 = vunpack.c.l.b16 %v1049
        %v1342 = vunpack.c.l.b16 %v1050
        %v1343 = vunpack.c.l.b16 %v1051
        %v1344 = vunpack.c.l.b16 %v1052
        %v1345 = vunpack.c.l.b16 %v1053
        %v1346 = vunpack.c.l.b16 %v1054
        %v1347 = vunpack.c.l.b16 %v1055
        %v1348 = vunpack.c.l.b16 %v1056
        %v1349 = vunpack.c.l.b16 %v1057
        %v1350 = vunpack.c.l.b16 %v1058
        %v1351 = vunpack.c.l.b16 %v1059
        %v1352 = vunpack.c.l.b16 %v1060
        %v1353 = vunpack.c.l.b16 %v1061
        %v1354 = vunpack.c.l.b16 %v1062
        %v1355 = vunpack.c.l.b16 %v1063
        %v1356 = vunpack.c.l.b16 %v1064
        %v1357 = vunpack.c.l.b16 %v1065
        %v1358 = vunpack.c.l.b16 %v1066
        %v1359 = vunpack.c.l.b16 %v1067
        %v1360 = vunpack.c.l.b16 %v1068
        %v1361 = vunpack.c.l.b16 %v1069
        %v1362 = vunpack.c.l.b16 %v1070
        %v1363 = vunpack.c.l.b16 %v1071
        %v1364 = vunpack.c.l.b16 %v1072
        %v1365 = vunpack.c.l.b16 %v1073
        %v1366 = vunpack.c.l.b16 %v1074
        %v1367 = vunpack.c.l.b16 %v1075
        %v1368 = vunpack.c.l.b16 %v1076
        %v1369 = vunpack.c.l.b16 %v1077
        %v1370 = vunpack.c.l.b16 %v1078
        %v1371 = vunpack.c.l.b16 %v1079
        %v1372 = vunpack.c.l.b16 %v1080
        %v1373 = vunpack.c.l.b16 %v1081
        %v1374 = vunpack.c.l.b16 %v1082
        %v1375 = vunpack.c.l.b16 %v1083
        %v1376 = vunpack.c.l.b16 %v1084
        %v1377 = vunpack.c.l.b16 %v1085
        %v1378 = vunpack.c.l.b16 %v1086
        %v1379 = vunpack.c.l.b16 %v1087
        %v1380 = vunpack.c.l.b16 %v1088
        %v1381 = vunpack.c.l.b16 %v1089
        %v1382 = vunpack.c.l.b16 %v1090
        %v1383 = vunpack.c.l.b16 %v1091
        %v1384 = vunpack.c.l.b16 %v1092
        %v1385 = vunpack.c.l.b16 %v1093
        %v1386 = vunpack.c.l.b16 %v1094
        %v1387 = vunpack.c.l.b16 %v1095
        %v1388 = vunpack.c.l.b16 %v1096
        %v1389 = vunpack.c.l.b16 %v1097
        %v1390 = vunpack.c.l.b16 %v1098
        %v1391 = vunpack.c.l.b16 %v1099
        %v1392 = vunpack.c.l.b16 %v1100
        %v1393 = vunpack.c.l.b16 %v1101
        %v1394 = vunpack.c.l.b16 %v1102
        %v1395 = vunpack.c.l.b16 %v1103
        %v1396 = vunpack.c.l.b16 %v1104
        %v1397 = vunpack.c.l.b16 %v1105
        %v1398 = vunpack.c.l.b16 %v1106
        %v1399 = vunpack.c.l.b16 %v1107
        %v1400 = vunpack.c.l.b16 %v1108
        %v1401 = vunpack.c.l.b16 %v1109
        %v1402 = vunpack.c.l.b16 %v1110
        %v1403 = vunpack.c.l.b16 %v1111
        %v1404 = vunpack.c.l.b16 %v1112
        %v1405 = vunpack.c.l.b16 %v1113
        %v1406 = vunpack.c.l.b16 %v1114
        %v1407 = vunpack.c.l.b16 %v1115
        %v1408 = vunpack.c.l.b16 %v1116
        %v1409 = vunpack.c.l.b16 %v1117
        %v1410 = vunpack.c.l.b16 %v1118
        %v1411 = vunpack.c.l.b16 %v1119
        %v1412 = vunpack.c.l.b16 %v1120
        %v1413 = vunpack.c.l.b16 %v1121
        %v1414 = vunpack.c.l.b16 %v1122
        %v1415 = vunpack.c.l.b16 %v1123
        %v1416 = vunpack.c.l.b16 %v1124
        %v1417 = vunpack.c.l.b16 %v1125
        %v1418 = vunpack.c.l.b16 %v1126
        %v1419 = vunpack.c.l.b16 %v1127
        %v1420 = vunpack.c.l.b16 %v1128
        %v1421 = vunpack.c.l.b16 %v1129
        %v1422 = vunpack.c.l.b16 %v1130
        %v1423 = vunpack.c.l.b16 %v1131
        %v1424 = vunpack.c.l.b16 %v1132
        %v1425 = vunpack.c.l.b16 %v1133
        %v1426 = vunpack.c.l.b16 %v1134
        %v1427 = vunpack.c.l.b16 %v1135
        %v1428 = vunpack.c.l.b16 %v1136
        %v1429 = vunpack.c.l.b16 %v1137
        %v1430 = vunpack.c.l.b16 %v1138
        %v1431 = vunpack.c.l.b16 %v1139
        %v1432 = vunpack.c.l.b16 %v1140
        %v1433 = vunpack.c.l.b16 %v1141
        %v1434 = vunpack.c.l.b16 %v1142
        %v1435 = vunpack.c.l.b16 %v1143
        %v1436 = vunpack.c.l.b16 %v1144
        %v1437 = vunpack.c.l.b16 %v1145
        %v1438 = vunpack.c.l.b16 %v1146
        %v1439 = vunpack.c.l.b16 %v1147
        %v1440 = vunpack.c.l.b16 %v1148
        %v1441 = vunpack.c.l.b16 %v1149
        %v1442 = vunpack.c.l.b16 %v1150
        %v1443 = vunpack.c.l.b16 %v1151
        %v1444 = vunpack.c.l.b16 %v1152
        %v1445 = vunpack.c.l.b16 %v1153
        %v1446 = vunpack.c.l.b16 %v1154
        %v1447 = vunpack.c.l.b16 %v1155
        %v1448 = vunpack.c.l.b16 %v1156
        %v1449 = vunpack.c.l.b16 %v1157
        %v1450 = vunpack.c.l.b16 %v1158
        %v1451 = vunpack.c.l.b16 %v1159
        %v1452 = vunpack.c.l.b16 %v1160
        %v1453 = vunpack.c.l.b16 %v1161
        %v1454 = vunpack.c.l.b16 %v1162
        %v1455 = vunpack.c.l.b16 %v1163
        %v1456 = vunpack.c.l.b16 %v1164
        %v1457 = vunpack.c.l.b16 %v1165
        %v1458 = vunpack.c.l.b16 %v1166
        %v1459 = vunpack.c.l.b16 %v1167
        %v1460 = vunpack.c.l.b16 %v1168
        %v1461 = vunpack.c.l.b16 %v1169
        %v1462 = vunpack.c.l.b16 %v1170
        %v1463 = vunpack.c.l.b16 %v1171
        %v1464 = vunpack.c.l.b16 %v1172
        %v1465 = vunpack.c.l.b16 %v1173
        %v1466 = vunpack.c.l.b16 %v1174
        %v1467 = vunpack.c.l.b16 %v1175
        %v1468 = vunpack.c.l.b16 %v1176
        %v1469 = vunpack.c.l.b16 %v1177
        %v1470 = vunpack.c.l.b16 %v1178
        %v1471 = vunpack.c.l.b16 %v1179
        %v1472 = vunpack.c.l.b16 %v1180
        %v1473 = vunpack.c.l.b16 %v1181
        %v1474 = vunpack.c.l.b16 %v1182
        %v1475 = vunpack.c.l.b16 %v1183
        %v1476 = vunpack.c.l.b16 %v1184
        %v1477 = vunpack.c.l.b16 %v1185
        %v1478 = vunpack.c.l.b16 %v1186
        %v1479 = vunpack.c.l.b16 %v1187
        %v1480 = vunpack.c.l.b16 %v1188
        %v1481 = vunpack.c.l.b16 %v1189
        %v1482 = vpack.c.b16 %v1339, %v1338
        %v1483 = vpack.c.b16 %v1341, %v1340
        %v1484 = vpack.c.b16 %v1343, %v1342
        %v1485 = vpack.c.b16 %v1345, %v1344
        %v1486 = vpack.c.b16 %v1347, %v1346
        %v1487 = vpack.c.b16 %v1349, %v1348
        %v1488 = vpack.c.b16 %v1351, %v1350
        %v1489 = vpack.c.b16 %v1353, %v1352
        %v1490 = vpack.c.b16 %v1355, %v1354
        %v1491 = vpack.c.b16 %v1357, %v1356
        %v1492 = vpack.c.b16 %v1359, %v1358
        %v1493 = vpack.c.b16 %v1361, %v1360
        %v1494 = vpack.c.b16 %v1363, %v1362
        %v1495 = vpack.c.b16 %v1365, %v1364
        %v1496 = vpack.c.b16 %v1367, %v1366
        %v1497 = vpack.c.b16 %v1369, %v1368
        %v1498 = vpack.c.b16 %v1371, %v1370
        %v1499 = vpack.c.b16 %v1373, %v1372
        %v1500 = vpack.c.b16 %v1375, %v1374
        %v1501 = vpack.c.b16 %v1377, %v1376
        %v1502 = vpack.c.b16 %v1379, %v1378
        %v1503 = vpack.c.b16 %v1381, %v1380
        %v1504 = vpack.c.b16 %v1383, %v1382
        %v1505 = vpack.c.b16 %v1385, %v1384
        %v1506 = vpack.c.b16 %v1387, %v1386
        %v1507 = vpack.c.b16 %v1389, %v1388
        %v1508 = vpack.c.b16 %v1391, %v1390
        %v1509 = vpack.c.b16 %v1393, %v1392
        %v1510 = vpack.c.b16 %v1395, %v1394
        %v1511 = vpack.c.b16 %v1397, %v1396
        %v1512 = vpack.c.b16 %v1399, %v1398
        %v1513 = vpack.c.b16 %v1401, %v1400
        %v1514 = vpack.c.b16 %v1403, %v1402
        %v1515 = vpack.c.b16 %v1405, %v1404
        %v1516 = vpack.c.b16 %v1407, %v1406
        %v1517 = vpack.c.b16 %v1409, %v1408
        %v1518 = vpack.c.b16 %v1411, %v1410
        %v1519 = vpack.c.b16 %v1413, %v1412
        %v1520 = vpack.c.b16 %v1415, %v1414
        %v1521 = vpack.c.b16 %v1417, %v1416
        %v1522 = vpack.c.b16 %v1419, %v1418
        %v1523 = vpack.c.b16 %v1421, %v1420
        %v1524 = vpack.c.b16 %v1423, %v1422
        %v1525 = vpack.c.b16 %v1425, %v1424
        %v1526 = vpack.c.b16 %v1427, %v1426
        %v1527 = vpack.c.b16 %v1429, %v1428
        %v1528 = vpack.c.b16 %v1431, %v1430
        %v1529 = vpack.c.b16 %v1433, %v1432
        %v1530 = vpack.c.b16 %v1435, %v1434
        %v1531 = vpack.c.b16 %v1437, %v1436
        %v1532 = vpack.c.b16 %v1439, %v1438
        %v1533 = vpack.c.b16 %v1441, %v1440
        %v1534 = vpack.c.b16 %v1443, %v1442
        %v1535 = vpack.c.b16 %v1445, %v1444
        %v1536 = vpack.c.b16 %v1447, %v1446
        %v1537 = vpack.c.b16 %v1449, %v1448
        %v1538 = vpack.c.b16 %v1451, %v1450
        %v1539 = vpack.c.b16 %v1453, %v1452
        %v1540 = vpack.c.b16 %v1455, %v1454
        %v1541 = vpack.c.b16 %v1457, %v1456
        %v1542 = vpack.c.b16 %v1459, %v1458
        %v1543 = vpack.c.b16 %v1461, %v1460
        %v1544 = vpack.c.b16 %v1463, %v1462
        %v1545 = vpack.c.b16 %v1465, %v1464
        %v1546 = vpack.c.b16 %v1467, %v1466
        %v1547 = vpack.c.b16 %v1469, %v1468
        %v1548 = vpack.c.b16 %v1471, %v1470
        %v1549 = vpack.c.b16 %v1473, %v1472
        %v1550 = vpack.c.b16 %v1475, %v1474
        %v1551 = vpack.c.b16 %v1477, %v1476
        %v1552 = vpack.c.b16 %v1479, %v1478
        %v1553 = vpack.c.b16 %v1481, %v1480
        %1626 = vmatpush.bf16.msra.mxu0 %v1489
        %1627 = vmatpush.bf16.msra.mxu0 %v1488
        %1628 = vmatpush.bf16.msra.mxu0 %v1487
        %1629 = vmatpush.bf16.msra.mxu0 %v1486
        %1630 = vmatpush.bf16.msra.mxu0 %v1485
        %1631 = vmatpush.bf16.msra.mxu0 %v1484
        %1632 = vmatpush.bf16.msra.mxu0 %v1483
        %1633 = vmatpush.bf16.msra.mxu0 %v1482
        %1634 = vmatmul.bf16.gmra.mxu0 %v399
        %v1635 = vpop.f32.mrf.mxu0
        %v1636 = vadd.f32 %v1192, %v1635
        %v1637 = vpop.f32.mrf.mxu0
        %v1638 = vadd.f32 %v1192, %v1637
        %1639 = vmatmul.bf16.gmra.mxu0 %v400
        %v1640 = vpop.f32.mrf.mxu0
        %v1641 = vadd.f32 %v1192, %v1640
        %v1642 = vpop.f32.mrf.mxu0
        %v1643 = vadd.f32 %v1192, %v1642
        %1644 = vmatmul.bf16.gmra.mxu0 %v401
        %v1645 = vpop.f32.mrf.mxu0
        %v1646 = vadd.f32 %v1192, %v1645
        %v1647 = vpop.f32.mrf.mxu0
        %v1648 = vadd.f32 %v1192, %v1647
        %1649 = vmatmul.bf16.gmra.mxu0 %v402
        %v1650 = vpop.f32.mrf.mxu0
        %v1651 = vadd.f32 %v1192, %v1650
        %v1652 = vpop.f32.mrf.mxu0
        %v1653 = vadd.f32 %v1192, %v1652
        %1654 = vmatmul.bf16.gmra.mxu0 %v403
        %v1655 = vpop.f32.mrf.mxu0
        %v1656 = vadd.f32 %v1192, %v1655
        %v1657 = vpop.f32.mrf.mxu0
        %v1658 = vadd.f32 %v1192, %v1657
        %1659 = vmatmul.bf16.gmra.mxu0 %v404
        %v1660 = vpop.f32.mrf.mxu0
        %v1661 = vadd.f32 %v1192, %v1660
        %v1662 = vpop.f32.mrf.mxu0
        %v1663 = vadd.f32 %v1192, %v1662
        %1664 = vmatmul.bf16.gmra.mxu0 %v405
        %v1665 = vpop.f32.mrf.mxu0
        %v1666 = vadd.f32 %v1192, %v1665
        %v1667 = vpop.f32.mrf.mxu0
        %v1668 = vadd.f32 %v1192, %v1667
        %1669 = vmatmul.bf16.gmra.mxu0 %v406
        %v1670 = vpop.f32.mrf.mxu0
        %v1671 = vadd.f32 %v1192, %v1670
        %v1672 = vpop.f32.mrf.mxu0
        %v1673 = vadd.f32 %v1192, %v1672
        %1674 = vmatmul.bf16.gmra.mxu0 %v407
        %v1675 = vpop.f32.mrf.mxu0
        %v1676 = vadd.f32 %v1192, %v1675
        %v1677 = vpop.f32.mrf.mxu0
        %v1678 = vadd.f32 %v1192, %v1677
        %1679 = vmatmul.bf16.gmra.mxu0 %v408
        %v1680 = vpop.f32.mrf.mxu0
        %v1681 = vadd.f32 %v1192, %v1680
        %v1682 = vpop.f32.mrf.mxu0
        %v1683 = vadd.f32 %v1192, %v1682
        %1684 = vmatmul.bf16.gmra.mxu0 %v409
        %v1685 = vpop.f32.mrf.mxu0
        %v1686 = vadd.f32 %v1192, %v1685
        %v1687 = vpop.f32.mrf.mxu0
        %v1688 = vadd.f32 %v1192, %v1687
        %1689 = vmatmul.bf16.gmra.mxu0 %v410
        %v1690 = vpop.f32.mrf.mxu0
        %v1691 = vadd.f32 %v1192, %v1690
        %v1692 = vpop.f32.mrf.mxu0
        %v1693 = vadd.f32 %v1192, %v1692
        %1694 = vmatmul.bf16.gmra.mxu0 %v411
        %v1695 = vpop.f32.mrf.mxu0
        %v1696 = vadd.f32 %v1192, %v1695
        %v1697 = vpop.f32.mrf.mxu0
        %v1698 = vadd.f32 %v1192, %v1697
        %1699 = vmatmul.bf16.gmra.mxu0 %v412
        %v1700 = vpop.f32.mrf.mxu0
        %v1701 = vadd.f32 %v1192, %v1700
        %v1702 = vpop.f32.mrf.mxu0
        %v1703 = vadd.f32 %v1192, %v1702
        %1704 = vmatmul.bf16.gmra.mxu0 %v413
        %v1705 = vpop.f32.mrf.mxu0
        %v1706 = vadd.f32 %v1192, %v1705
        %v1707 = vpop.f32.mrf.mxu0
        %v1708 = vadd.f32 %v1192, %v1707
        %1709 = vmatmul.bf16.gmra.mxu0 %v414
        %v1710 = vpop.f32.mrf.mxu0
        %v1711 = vadd.f32 %v1192, %v1710
        %v1712 = vpop.f32.mrf.mxu0
        %v1713 = vadd.f32 %v1192, %v1712
        %1714 = vmatmul.bf16.gmra.mxu0 %v415
        %v1715 = vpop.f32.mrf.mxu0
        %v1716 = vadd.f32 %v1192, %v1715
        %v1717 = vpop.f32.mrf.mxu0
        %v1718 = vadd.f32 %v1192, %v1717
        %1719 = vmatmul.bf16.gmra.mxu0 %v416
        %v1720 = vpop.f32.mrf.mxu0
        %v1721 = vadd.f32 %v1192, %v1720
        %v1722 = vpop.f32.mrf.mxu0
        %v1723 = vadd.f32 %v1192, %v1722
        %1724 = vdwg.mxu0
        %1725 = vmatpush.bf16.msra.mxu0 %v1497
        %1726 = vmatpush.bf16.msra.mxu0 %v1496
        %1727 = vmatpush.bf16.msra.mxu0 %v1495
        %1728 = vmatpush.bf16.msra.mxu0 %v1494
        %1729 = vmatpush.bf16.msra.mxu0 %v1493
        %1730 = vmatpush.bf16.msra.mxu0 %v1492
        %1731 = vmatpush.bf16.msra.mxu0 %v1491
        %1732 = vmatpush.bf16.msra.mxu0 %v1490
        %1733 = vmatmul.bf16.gmra.mxu0 %v450
        %v1734 = vpop.f32.mrf.mxu0
        %v1735 = vadd.f32 %v1636, %v1734
        %v1736 = vpop.f32.mrf.mxu0
        %v1737 = vadd.f32 %v1638, %v1736
        %1738 = vmatmul.bf16.gmra.mxu0 %v458
        %v1739 = vpop.f32.mrf.mxu0
        %v1740 = vadd.f32 %v1641, %v1739
        %v1741 = vpop.f32.mrf.mxu0
        %v1742 = vadd.f32 %v1643, %v1741
        %1743 = vmatmul.bf16.gmra.mxu0 %v466
        %v1744 = vpop.f32.mrf.mxu0
        %v1745 = vadd.f32 %v1646, %v1744
        %v1746 = vpop.f32.mrf.mxu0
        %v1747 = vadd.f32 %v1648, %v1746
        %1748 = vmatmul.bf16.gmra.mxu0 %v474
        %v1749 = vpop.f32.mrf.mxu0
        %v1750 = vadd.f32 %v1651, %v1749
        %v1751 = vpop.f32.mrf.mxu0
        %v1752 = vadd.f32 %v1653, %v1751
        %1753 = vmatmul.bf16.gmra.mxu0 %v482
        %v1754 = vpop.f32.mrf.mxu0
        %v1755 = vadd.f32 %v1656, %v1754
        %v1756 = vpop.f32.mrf.mxu0
        %v1757 = vadd.f32 %v1658, %v1756
        %1758 = vmatmul.bf16.gmra.mxu0 %v490
        %v1759 = vpop.f32.mrf.mxu0
        %v1760 = vadd.f32 %v1661, %v1759
        %v1761 = vpop.f32.mrf.mxu0
        %v1762 = vadd.f32 %v1663, %v1761
        %1763 = vmatmul.bf16.gmra.mxu0 %v498
        %v1764 = vpop.f32.mrf.mxu0
        %v1765 = vadd.f32 %v1666, %v1764
        %v1766 = vpop.f32.mrf.mxu0
        %v1767 = vadd.f32 %v1668, %v1766
        %1768 = vmatmul.bf16.gmra.mxu0 %v506
        %v1769 = vpop.f32.mrf.mxu0
        %v1770 = vadd.f32 %v1671, %v1769
        %v1771 = vpop.f32.mrf.mxu0
        %v1772 = vadd.f32 %v1673, %v1771
        %1773 = vmatmul.bf16.gmra.mxu0 %v514
        %v1774 = vpop.f32.mrf.mxu0
        %v1775 = vadd.f32 %v1676, %v1774
        %v1776 = vpop.f32.mrf.mxu0
        %v1777 = vadd.f32 %v1678, %v1776
        %1778 = vmatmul.bf16.gmra.mxu0 %v522
        %v1779 = vpop.f32.mrf.mxu0
        %v1780 = vadd.f32 %v1681, %v1779
        %v1781 = vpop.f32.mrf.mxu0
        %v1782 = vadd.f32 %v1683, %v1781
        %1783 = vmatmul.bf16.gmra.mxu0 %v530
        %v1784 = vpop.f32.mrf.mxu0
        %v1785 = vadd.f32 %v1686, %v1784
        %v1786 = vpop.f32.mrf.mxu0
        %v1787 = vadd.f32 %v1688, %v1786
        %1788 = vmatmul.bf16.gmra.mxu0 %v538
        %v1789 = vpop.f32.mrf.mxu0
        %v1790 = vadd.f32 %v1691, %v1789
        %v1791 = vpop.f32.mrf.mxu0
        %v1792 = vadd.f32 %v1693, %v1791
        %1793 = vmatmul.bf16.gmra.mxu0 %v546
        %v1794 = vpop.f32.mrf.mxu0
        %v1795 = vadd.f32 %v1696, %v1794
        %v1796 = vpop.f32.mrf.mxu0
        %v1797 = vadd.f32 %v1698, %v1796
        %1798 = vmatmul.bf16.gmra.mxu0 %v554
        %v1799 = vpop.f32.mrf.mxu0
        %v1800 = vadd.f32 %v1701, %v1799
        %v1801 = vpop.f32.mrf.mxu0
        %v1802 = vadd.f32 %v1703, %v1801
        %1803 = vmatmul.bf16.gmra.mxu0 %v562
        %v1804 = vpop.f32.mrf.mxu0
        %v1805 = vadd.f32 %v1706, %v1804
        %v1806 = vpop.f32.mrf.mxu0
        %v1807 = vadd.f32 %v1708, %v1806
        %1808 = vmatmul.bf16.gmra.mxu0 %v570
        %v1809 = vpop.f32.mrf.mxu0
        %v1810 = vadd.f32 %v1711, %v1809
        %v1811 = vpop.f32.mrf.mxu0
        %v1812 = vadd.f32 %v1713, %v1811
        %1813 = vmatmul.bf16.gmra.mxu0 %v578
        %v1814 = vpop.f32.mrf.mxu0
        %v1815 = vadd.f32 %v1716, %v1814
        %v1816 = vpop.f32.mrf.mxu0
        %v1817 = vadd.f32 %v1718, %v1816
        %1818 = vmatmul.bf16.gmra.mxu0 %v586
        %v1819 = vpop.f32.mrf.mxu0
        %v1820 = vadd.f32 %v1721, %v1819
        %v1821 = vpop.f32.mrf.mxu0
        %v1822 = vadd.f32 %v1723, %v1821
        %1823 = vdwg.mxu0
        %1824 = vmatpush.bf16.msra.mxu0 %v1505
        %1825 = vmatpush.bf16.msra.mxu0 %v1504
        %1826 = vmatpush.bf16.msra.mxu0 %v1503
        %1827 = vmatpush.bf16.msra.mxu0 %v1502
        %1828 = vmatpush.bf16.msra.mxu0 %v1501
        %1829 = vmatpush.bf16.msra.mxu0 %v1500
        %1830 = vmatpush.bf16.msra.mxu0 %v1499
        %1831 = vmatpush.bf16.msra.mxu0 %v1498
        %1832 = vmatmul.bf16.gmra.mxu0 %v611
        %v1833 = vpop.f32.mrf.mxu0
        %v1834 = vadd.f32 %v1735, %v1833
        %v1835 = vpop.f32.mrf.mxu0
        %v1836 = vadd.f32 %v1737, %v1835
        %1837 = vmatmul.bf16.gmra.mxu0 %v613
        %v1838 = vpop.f32.mrf.mxu0
        %v1839 = vadd.f32 %v1740, %v1838
        %v1840 = vpop.f32.mrf.mxu0
        %v1841 = vadd.f32 %v1742, %v1840
        %1842 = vmatmul.bf16.gmra.mxu0 %v615
        %v1843 = vpop.f32.mrf.mxu0
        %v1844 = vadd.f32 %v1745, %v1843
        %v1845 = vpop.f32.mrf.mxu0
        %v1846 = vadd.f32 %v1747, %v1845
        %1847 = vmatmul.bf16.gmra.mxu0 %v617
        %v1848 = vpop.f32.mrf.mxu0
        %v1849 = vadd.f32 %v1750, %v1848
        %v1850 = vpop.f32.mrf.mxu0
        %v1851 = vadd.f32 %v1752, %v1850
        %1852 = vmatmul.bf16.gmra.mxu0 %v619
        %v1853 = vpop.f32.mrf.mxu0
        %v1854 = vadd.f32 %v1755, %v1853
        %v1855 = vpop.f32.mrf.mxu0
        %v1856 = vadd.f32 %v1757, %v1855
        %1857 = vmatmul.bf16.gmra.mxu0 %v621
        %v1858 = vpop.f32.mrf.mxu0
        %v1859 = vadd.f32 %v1760, %v1858
        %v1860 = vpop.f32.mrf.mxu0
        %v1861 = vadd.f32 %v1762, %v1860
        %1862 = vmatmul.bf16.gmra.mxu0 %v623
        %v1863 = vpop.f32.mrf.mxu0
        %v1864 = vadd.f32 %v1765, %v1863
        %v1865 = vpop.f32.mrf.mxu0
        %v1866 = vadd.f32 %v1767, %v1865
        %1867 = vmatmul.bf16.gmra.mxu0 %v625
        %v1868 = vpop.f32.mrf.mxu0
        %v1869 = vadd.f32 %v1770, %v1868
        %v1870 = vpop.f32.mrf.mxu0
        %v1871 = vadd.f32 %v1772, %v1870
        %1872 = vmatmul.bf16.gmra.mxu0 %v627
        %v1873 = vpop.f32.mrf.mxu0
        %v1874 = vadd.f32 %v1775, %v1873
        %v1875 = vpop.f32.mrf.mxu0
        %v1876 = vadd.f32 %v1777, %v1875
        %1877 = vmatmul.bf16.gmra.mxu0 %v629
        %v1878 = vpop.f32.mrf.mxu0
        %v1879 = vadd.f32 %v1780, %v1878
        %v1880 = vpop.f32.mrf.mxu0
        %v1881 = vadd.f32 %v1782, %v1880
        %1882 = vmatmul.bf16.gmra.mxu0 %v631
        %v1883 = vpop.f32.mrf.mxu0
        %v1884 = vadd.f32 %v1785, %v1883
        %v1885 = vpop.f32.mrf.mxu0
        %v1886 = vadd.f32 %v1787, %v1885
        %1887 = vmatmul.bf16.gmra.mxu0 %v633
        %v1888 = vpop.f32.mrf.mxu0
        %v1889 = vadd.f32 %v1790, %v1888
        %v1890 = vpop.f32.mrf.mxu0
        %v1891 = vadd.f32 %v1792, %v1890
        %1892 = vmatmul.bf16.gmra.mxu0 %v635
        %v1893 = vpop.f32.mrf.mxu0
        %v1894 = vadd.f32 %v1795, %v1893
        %v1895 = vpop.f32.mrf.mxu0
        %v1896 = vadd.f32 %v1797, %v1895
        %1897 = vmatmul.bf16.gmra.mxu0 %v637
        %v1898 = vpop.f32.mrf.mxu0
        %v1899 = vadd.f32 %v1800, %v1898
        %v1900 = vpop.f32.mrf.mxu0
        %v1901 = vadd.f32 %v1802, %v1900
        %1902 = vmatmul.bf16.gmra.mxu0 %v639
        %v1903 = vpop.f32.mrf.mxu0
        %v1904 = vadd.f32 %v1805, %v1903
        %v1905 = vpop.f32.mrf.mxu0
        %v1906 = vadd.f32 %v1807, %v1905
        %1907 = vmatmul.bf16.gmra.mxu0 %v641
        %v1908 = vpop.f32.mrf.mxu0
        %v1909 = vadd.f32 %v1810, %v1908
        %v1910 = vpop.f32.mrf.mxu0
        %v1911 = vadd.f32 %v1812, %v1910
        %1912 = vmatmul.bf16.gmra.mxu0 %v643
        %v1913 = vpop.f32.mrf.mxu0
        %v1914 = vadd.f32 %v1815, %v1913
        %v1915 = vpop.f32.mrf.mxu0
        %v1916 = vadd.f32 %v1817, %v1915
        %1917 = vmatmul.bf16.gmra.mxu0 %v645
        %v1918 = vpop.f32.mrf.mxu0
        %v1919 = vadd.f32 %v1820, %v1918
        %v1920 = vpop.f32.mrf.mxu0
        %v1921 = vadd.f32 %v1822, %v1920
        %1922 = vdwg.mxu0
        %1923 = vmatpush.bf16.msra.mxu0 %v1513
        %1924 = vmatpush.bf16.msra.mxu0 %v1512
        %1925 = vmatpush.bf16.msra.mxu0 %v1511
        %1926 = vmatpush.bf16.msra.mxu0 %v1510
        %1927 = vmatpush.bf16.msra.mxu0 %v1509
        %1928 = vmatpush.bf16.msra.mxu0 %v1508
        %1929 = vmatpush.bf16.msra.mxu0 %v1507
        %1930 = vmatpush.bf16.msra.mxu0 %v1506
        %1931 = vmatmul.bf16.gmra.mxu0 %v676
        %v1932 = vpop.f32.mrf.mxu0
        %v1933 = vadd.f32 %v1834, %v1932
        %v1934 = vpop.f32.mrf.mxu0
        %v1935 = vadd.f32 %v1836, %v1934
        %1936 = vmatmul.bf16.gmra.mxu0 %v615
        %v1937 = vpop.f32.mrf.mxu0
        %v1938 = vadd.f32 %v1839, %v1937
        %v1939 = vpop.f32.mrf.mxu0
        %v1940 = vadd.f32 %v1841, %v1939
        %1941 = vmatmul.bf16.gmra.mxu0 %v617
        %v1942 = vpop.f32.mrf.mxu0
        %v1943 = vadd.f32 %v1844, %v1942
        %v1944 = vpop.f32.mrf.mxu0
        %v1945 = vadd.f32 %v1846, %v1944
        %1946 = vmatmul.bf16.gmra.mxu0 %v619
        %v1947 = vpop.f32.mrf.mxu0
        %v1948 = vadd.f32 %v1849, %v1947
        %v1949 = vpop.f32.mrf.mxu0
        %v1950 = vadd.f32 %v1851, %v1949
        %1951 = vmatmul.bf16.gmra.mxu0 %v621
        %v1952 = vpop.f32.mrf.mxu0
        %v1953 = vadd.f32 %v1854, %v1952
        %v1954 = vpop.f32.mrf.mxu0
        %v1955 = vadd.f32 %v1856, %v1954
        %1956 = vmatmul.bf16.gmra.mxu0 %v623
        %v1957 = vpop.f32.mrf.mxu0
        %v1958 = vadd.f32 %v1859, %v1957
        %v1959 = vpop.f32.mrf.mxu0
        %v1960 = vadd.f32 %v1861, %v1959
        %1961 = vmatmul.bf16.gmra.mxu0 %v625
        %v1962 = vpop.f32.mrf.mxu0
        %v1963 = vadd.f32 %v1864, %v1962
        %v1964 = vpop.f32.mrf.mxu0
        %v1965 = vadd.f32 %v1866, %v1964
        %1966 = vmatmul.bf16.gmra.mxu0 %v627
        %v1967 = vpop.f32.mrf.mxu0
        %v1968 = vadd.f32 %v1869, %v1967
        %v1969 = vpop.f32.mrf.mxu0
        %v1970 = vadd.f32 %v1871, %v1969
        %1971 = vmatmul.bf16.gmra.mxu0 %v629
        %v1972 = vpop.f32.mrf.mxu0
        %v1973 = vadd.f32 %v1874, %v1972
        %v1974 = vpop.f32.mrf.mxu0
        %v1975 = vadd.f32 %v1876, %v1974
        %1976 = vmatmul.bf16.gmra.mxu0 %v631
        %v1977 = vpop.f32.mrf.mxu0
        %v1978 = vadd.f32 %v1879, %v1977
        %v1979 = vpop.f32.mrf.mxu0
        %v1980 = vadd.f32 %v1881, %v1979
        %1981 = vmatmul.bf16.gmra.mxu0 %v633
        %v1982 = vpop.f32.mrf.mxu0
        %v1983 = vadd.f32 %v1884, %v1982
        %v1984 = vpop.f32.mrf.mxu0
        %v1985 = vadd.f32 %v1886, %v1984
        %1986 = vmatmul.bf16.gmra.mxu0 %v635
        %v1987 = vpop.f32.mrf.mxu0
        %v1988 = vadd.f32 %v1889, %v1987
        %v1989 = vpop.f32.mrf.mxu0
        %v1990 = vadd.f32 %v1891, %v1989
        %1991 = vmatmul.bf16.gmra.mxu0 %v637
        %v1992 = vpop.f32.mrf.mxu0
        %v1993 = vadd.f32 %v1894, %v1992
        %v1994 = vpop.f32.mrf.mxu0
        %v1995 = vadd.f32 %v1896, %v1994
        %1996 = vmatmul.bf16.gmra.mxu0 %v639
        %v1997 = vpop.f32.mrf.mxu0
        %v1998 = vadd.f32 %v1899, %v1997
        %v1999 = vpop.f32.mrf.mxu0
        %v2000 = vadd.f32 %v1901, %v1999
        %2001 = vmatmul.bf16.gmra.mxu0 %v641
        %v2002 = vpop.f32.mrf.mxu0
        %v2003 = vadd.f32 %v1904, %v2002
        %v2004 = vpop.f32.mrf.mxu0
        %v2005 = vadd.f32 %v1906, %v2004
        %2006 = vmatmul.bf16.gmra.mxu0 %v643
        %v2007 = vpop.f32.mrf.mxu0
        %v2008 = vadd.f32 %v1909, %v2007
        %v2009 = vpop.f32.mrf.mxu0
        %v2010 = vadd.f32 %v1911, %v2009
        %2011 = vmatmul.bf16.gmra.mxu0 %v678
        %v2012 = vpop.f32.mrf.mxu0
        %v2013 = vadd.f32 %v1914, %v2012
        %v2014 = vpop.f32.mrf.mxu0
        %v2015 = vadd.f32 %v1916, %v2014
        %2016 = vmatmul.bf16.gmra.mxu0 %v680
        %v2017 = vpop.f32.mrf.mxu0
        %v2018 = vadd.f32 %v1919, %v2017
        %v2019 = vpop.f32.mrf.mxu0
        %v2020 = vadd.f32 %v1921, %v2019
        %2021 = vdwg.mxu0
        %2022 = vmatpush.bf16.msra.mxu0 %v1521
        %2023 = vmatpush.bf16.msra.mxu0 %v1520
        %2024 = vmatpush.bf16.msra.mxu0 %v1519
        %2025 = vmatpush.bf16.msra.mxu0 %v1518
        %2026 = vmatpush.bf16.msra.mxu0 %v1517
        %2027 = vmatpush.bf16.msra.mxu0 %v1516
        %2028 = vmatpush.bf16.msra.mxu0 %v1515
        %2029 = vmatpush.bf16.msra.mxu0 %v1514
        %2030 = vmatmul.bf16.gmra.mxu0 %v699
        %v2031 = vpop.f32.mrf.mxu0
        %v2032 = vadd.f32 %v1933, %v2031
        %v2033 = vpop.f32.mrf.mxu0
        %v2034 = vadd.f32 %v1935, %v2033
        %2035 = vmatmul.bf16.gmra.mxu0 %v703
        %v2036 = vpop.f32.mrf.mxu0
        %v2037 = vadd.f32 %v1938, %v2036
        %v2038 = vpop.f32.mrf.mxu0
        %v2039 = vadd.f32 %v1940, %v2038
        %2040 = vmatmul.bf16.gmra.mxu0 %v707
        %v2041 = vpop.f32.mrf.mxu0
        %v2042 = vadd.f32 %v1943, %v2041
        %v2043 = vpop.f32.mrf.mxu0
        %v2044 = vadd.f32 %v1945, %v2043
        %2045 = vmatmul.bf16.gmra.mxu0 %v711
        %v2046 = vpop.f32.mrf.mxu0
        %v2047 = vadd.f32 %v1948, %v2046
        %v2048 = vpop.f32.mrf.mxu0
        %v2049 = vadd.f32 %v1950, %v2048
        %2050 = vmatmul.bf16.gmra.mxu0 %v715
        %v2051 = vpop.f32.mrf.mxu0
        %v2052 = vadd.f32 %v1953, %v2051
        %v2053 = vpop.f32.mrf.mxu0
        %v2054 = vadd.f32 %v1955, %v2053
        %2055 = vmatmul.bf16.gmra.mxu0 %v719
        %v2056 = vpop.f32.mrf.mxu0
        %v2057 = vadd.f32 %v1958, %v2056
        %v2058 = vpop.f32.mrf.mxu0
        %v2059 = vadd.f32 %v1960, %v2058
        %2060 = vmatmul.bf16.gmra.mxu0 %v723
        %v2061 = vpop.f32.mrf.mxu0
        %v2062 = vadd.f32 %v1963, %v2061
        %v2063 = vpop.f32.mrf.mxu0
        %v2064 = vadd.f32 %v1965, %v2063
        %2065 = vmatmul.bf16.gmra.mxu0 %v727
        %v2066 = vpop.f32.mrf.mxu0
        %v2067 = vadd.f32 %v1968, %v2066
        %v2068 = vpop.f32.mrf.mxu0
        %v2069 = vadd.f32 %v1970, %v2068
        %2070 = vmatmul.bf16.gmra.mxu0 %v731
        %v2071 = vpop.f32.mrf.mxu0
        %v2072 = vadd.f32 %v1973, %v2071
        %v2073 = vpop.f32.mrf.mxu0
        %v2074 = vadd.f32 %v1975, %v2073
        %2075 = vmatmul.bf16.gmra.mxu0 %v735
        %v2076 = vpop.f32.mrf.mxu0
        %v2077 = vadd.f32 %v1978, %v2076
        %v2078 = vpop.f32.mrf.mxu0
        %v2079 = vadd.f32 %v1980, %v2078
        %2080 = vmatmul.bf16.gmra.mxu0 %v739
        %v2081 = vpop.f32.mrf.mxu0
        %v2082 = vadd.f32 %v1983, %v2081
        %v2083 = vpop.f32.mrf.mxu0
        %v2084 = vadd.f32 %v1985, %v2083
        %2085 = vmatmul.bf16.gmra.mxu0 %v743
        %v2086 = vpop.f32.mrf.mxu0
        %v2087 = vadd.f32 %v1988, %v2086
        %v2088 = vpop.f32.mrf.mxu0
        %v2089 = vadd.f32 %v1990, %v2088
        %2090 = vmatmul.bf16.gmra.mxu0 %v747
        %v2091 = vpop.f32.mrf.mxu0
        %v2092 = vadd.f32 %v1993, %v2091
        %v2093 = vpop.f32.mrf.mxu0
        %v2094 = vadd.f32 %v1995, %v2093
        %2095 = vmatmul.bf16.gmra.mxu0 %v751
        %v2096 = vpop.f32.mrf.mxu0
        %v2097 = vadd.f32 %v1998, %v2096
        %v2098 = vpop.f32.mrf.mxu0
        %v2099 = vadd.f32 %v2000, %v2098
        %2100 = vmatmul.bf16.gmra.mxu0 %v755
        %v2101 = vpop.f32.mrf.mxu0
        %v2102 = vadd.f32 %v2003, %v2101
        %v2103 = vpop.f32.mrf.mxu0
        %v2104 = vadd.f32 %v2005, %v2103
        %2105 = vmatmul.bf16.gmra.mxu0 %v759
        %v2106 = vpop.f32.mrf.mxu0
        %v2107 = vadd.f32 %v2008, %v2106
        %v2108 = vpop.f32.mrf.mxu0
        %v2109 = vadd.f32 %v2010, %v2108
        %2110 = vmatmul.bf16.gmra.mxu0 %v768
        %v2111 = vpop.f32.mrf.mxu0
        %v2112 = vadd.f32 %v2013, %v2111
        %v2113 = vpop.f32.mrf.mxu0
        %v2114 = vadd.f32 %v2015, %v2113
        %2115 = vmatmul.bf16.gmra.mxu0 %v777
        %v2116 = vpop.f32.mrf.mxu0
        %v2117 = vadd.f32 %v2018, %v2116
        %v2118 = vpop.f32.mrf.mxu0
        %v2119 = vadd.f32 %v2020, %v2118
        %2120 = vdwg.mxu0
        %2121 = vmatpush.bf16.msra.mxu0 %v1529
        %2122 = vmatpush.bf16.msra.mxu0 %v1528
        %2123 = vmatpush.bf16.msra.mxu0 %v1527
        %2124 = vmatpush.bf16.msra.mxu0 %v1526
        %2125 = vmatpush.bf16.msra.mxu0 %v1525
        %2126 = vmatpush.bf16.msra.mxu0 %v1524
        %2127 = vmatpush.bf16.msra.mxu0 %v1523
        %2128 = vmatpush.bf16.msra.mxu0 %v1522
        %2129 = vmatmul.bf16.gmra.mxu0 %v802
        %v2130 = vpop.f32.mrf.mxu0
        %v2131 = vadd.f32 %v2032, %v2130
        %v2132 = vpop.f32.mrf.mxu0
        %v2133 = vadd.f32 %v2034, %v2132
        %2134 = vmatmul.bf16.gmra.mxu0 %v804
        %v2135 = vpop.f32.mrf.mxu0
        %v2136 = vadd.f32 %v2037, %v2135
        %v2137 = vpop.f32.mrf.mxu0
        %v2138 = vadd.f32 %v2039, %v2137
        %2139 = vmatmul.bf16.gmra.mxu0 %v806
        %v2140 = vpop.f32.mrf.mxu0
        %v2141 = vadd.f32 %v2042, %v2140
        %v2142 = vpop.f32.mrf.mxu0
        %v2143 = vadd.f32 %v2044, %v2142
        %2144 = vmatmul.bf16.gmra.mxu0 %v808
        %v2145 = vpop.f32.mrf.mxu0
        %v2146 = vadd.f32 %v2047, %v2145
        %v2147 = vpop.f32.mrf.mxu0
        %v2148 = vadd.f32 %v2049, %v2147
        %2149 = vmatmul.bf16.gmra.mxu0 %v810
        %v2150 = vpop.f32.mrf.mxu0
        %v2151 = vadd.f32 %v2052, %v2150
        %v2152 = vpop.f32.mrf.mxu0
        %v2153 = vadd.f32 %v2054, %v2152
        %2154 = vmatmul.bf16.gmra.mxu0 %v812
        %v2155 = vpop.f32.mrf.mxu0
        %v2156 = vadd.f32 %v2057, %v2155
        %v2157 = vpop.f32.mrf.mxu0
        %v2158 = vadd.f32 %v2059, %v2157
        %2159 = vmatmul.bf16.gmra.mxu0 %v814
        %v2160 = vpop.f32.mrf.mxu0
        %v2161 = vadd.f32 %v2062, %v2160
        %v2162 = vpop.f32.mrf.mxu0
        %v2163 = vadd.f32 %v2064, %v2162
        %2164 = vmatmul.bf16.gmra.mxu0 %v816
        %v2165 = vpop.f32.mrf.mxu0
        %v2166 = vadd.f32 %v2067, %v2165
        %v2167 = vpop.f32.mrf.mxu0
        %v2168 = vadd.f32 %v2069, %v2167
        %2169 = vmatmul.bf16.gmra.mxu0 %v818
        %v2170 = vpop.f32.mrf.mxu0
        %v2171 = vadd.f32 %v2072, %v2170
        %v2172 = vpop.f32.mrf.mxu0
        %v2173 = vadd.f32 %v2074, %v2172
        %2174 = vmatmul.bf16.gmra.mxu0 %v820
        %v2175 = vpop.f32.mrf.mxu0
        %v2176 = vadd.f32 %v2077, %v2175
        %v2177 = vpop.f32.mrf.mxu0
        %v2178 = vadd.f32 %v2079, %v2177
        %2179 = vmatmul.bf16.gmra.mxu0 %v822
        %v2180 = vpop.f32.mrf.mxu0
        %v2181 = vadd.f32 %v2082, %v2180
        %v2182 = vpop.f32.mrf.mxu0
        %v2183 = vadd.f32 %v2084, %v2182
        %2184 = vmatmul.bf16.gmra.mxu0 %v824
        %v2185 = vpop.f32.mrf.mxu0
        %v2186 = vadd.f32 %v2087, %v2185
        %v2187 = vpop.f32.mrf.mxu0
        %v2188 = vadd.f32 %v2089, %v2187
        %2189 = vmatmul.bf16.gmra.mxu0 %v826
        %v2190 = vpop.f32.mrf.mxu0
        %v2191 = vadd.f32 %v2092, %v2190
        %v2192 = vpop.f32.mrf.mxu0
        %v2193 = vadd.f32 %v2094, %v2192
        %2194 = vmatmul.bf16.gmra.mxu0 %v828
        %v2195 = vpop.f32.mrf.mxu0
        %v2196 = vadd.f32 %v2097, %v2195
        %v2197 = vpop.f32.mrf.mxu0
        %v2198 = vadd.f32 %v2099, %v2197
        %2199 = vmatmul.bf16.gmra.mxu0 %v830
        %v2200 = vpop.f32.mrf.mxu0
        %v2201 = vadd.f32 %v2102, %v2200
        %v2202 = vpop.f32.mrf.mxu0
        %v2203 = vadd.f32 %v2104, %v2202
        %2204 = vmatmul.bf16.gmra.mxu0 %v832
        %v2205 = vpop.f32.mrf.mxu0
        %v2206 = vadd.f32 %v2107, %v2205
        %v2207 = vpop.f32.mrf.mxu0
        %v2208 = vadd.f32 %v2109, %v2207
        %2209 = vmatmul.bf16.gmra.mxu0 %v834
        %v2210 = vpop.f32.mrf.mxu0
        %v2211 = vadd.f32 %v2112, %v2210
        %v2212 = vpop.f32.mrf.mxu0
        %v2213 = vadd.f32 %v2114, %v2212
        %2214 = vmatmul.bf16.gmra.mxu0 %v836
        %v2215 = vpop.f32.mrf.mxu0
        %v2216 = vadd.f32 %v2117, %v2215
        %v2217 = vpop.f32.mrf.mxu0
        %v2218 = vadd.f32 %v2119, %v2217
        %2219 = vdwg.mxu0
        %2220 = vmatpush.bf16.msra.mxu0 %v1537
        %2221 = vmatpush.bf16.msra.mxu0 %v1536
        %2222 = vmatpush.bf16.msra.mxu0 %v1535
        %2223 = vmatpush.bf16.msra.mxu0 %v1534
        %2224 = vmatpush.bf16.msra.mxu0 %v1533
        %2225 = vmatpush.bf16.msra.mxu0 %v1532
        %2226 = vmatpush.bf16.msra.mxu0 %v1531
        %2227 = vmatpush.bf16.msra.mxu0 %v1530
        %2228 = vmatmul.bf16.gmra.mxu0 %v867
        %v2229 = vpop.f32.mrf.mxu0
        %v2230 = vadd.f32 %v2131, %v2229
        %v2231 = vpop.f32.mrf.mxu0
        %v2232 = vadd.f32 %v2133, %v2231
        %2233 = vmatmul.bf16.gmra.mxu0 %v806
        %v2234 = vpop.f32.mrf.mxu0
        %v2235 = vadd.f32 %v2136, %v2234
        %v2236 = vpop.f32.mrf.mxu0
        %v2237 = vadd.f32 %v2138, %v2236
        %2238 = vmatmul.bf16.gmra.mxu0 %v808
        %v2239 = vpop.f32.mrf.mxu0
        %v2240 = vadd.f32 %v2141, %v2239
        %v2241 = vpop.f32.mrf.mxu0
        %v2242 = vadd.f32 %v2143, %v2241
        %2243 = vmatmul.bf16.gmra.mxu0 %v810
        %v2244 = vpop.f32.mrf.mxu0
        %v2245 = vadd.f32 %v2146, %v2244
        %v2246 = vpop.f32.mrf.mxu0
        %v2247 = vadd.f32 %v2148, %v2246
        %2248 = vmatmul.bf16.gmra.mxu0 %v812
        %v2249 = vpop.f32.mrf.mxu0
        %v2250 = vadd.f32 %v2151, %v2249
        %v2251 = vpop.f32.mrf.mxu0
        %v2252 = vadd.f32 %v2153, %v2251
        %2253 = vmatmul.bf16.gmra.mxu0 %v814
        %v2254 = vpop.f32.mrf.mxu0
        %v2255 = vadd.f32 %v2156, %v2254
        %v2256 = vpop.f32.mrf.mxu0
        %v2257 = vadd.f32 %v2158, %v2256
        %2258 = vmatmul.bf16.gmra.mxu0 %v816
        %v2259 = vpop.f32.mrf.mxu0
        %v2260 = vadd.f32 %v2161, %v2259
        %v2261 = vpop.f32.mrf.mxu0
        %v2262 = vadd.f32 %v2163, %v2261
        %2263 = vmatmul.bf16.gmra.mxu0 %v818
        %v2264 = vpop.f32.mrf.mxu0
        %v2265 = vadd.f32 %v2166, %v2264
        %v2266 = vpop.f32.mrf.mxu0
        %v2267 = vadd.f32 %v2168, %v2266
        %2268 = vmatmul.bf16.gmra.mxu0 %v820
        %v2269 = vpop.f32.mrf.mxu0
        %v2270 = vadd.f32 %v2171, %v2269
        %v2271 = vpop.f32.mrf.mxu0
        %v2272 = vadd.f32 %v2173, %v2271
        %2273 = vmatmul.bf16.gmra.mxu0 %v822
        %v2274 = vpop.f32.mrf.mxu0
        %v2275 = vadd.f32 %v2176, %v2274
        %v2276 = vpop.f32.mrf.mxu0
        %v2277 = vadd.f32 %v2178, %v2276
        %2278 = vmatmul.bf16.gmra.mxu0 %v824
        %v2279 = vpop.f32.mrf.mxu0
        %v2280 = vadd.f32 %v2181, %v2279
        %v2281 = vpop.f32.mrf.mxu0
        %v2282 = vadd.f32 %v2183, %v2281
        %2283 = vmatmul.bf16.gmra.mxu0 %v826
        %v2284 = vpop.f32.mrf.mxu0
        %v2285 = vadd.f32 %v2186, %v2284
        %v2286 = vpop.f32.mrf.mxu0
        %v2287 = vadd.f32 %v2188, %v2286
        %2288 = vmatmul.bf16.gmra.mxu0 %v828
        %v2289 = vpop.f32.mrf.mxu0
        %v2290 = vadd.f32 %v2191, %v2289
        %v2291 = vpop.f32.mrf.mxu0
        %v2292 = vadd.f32 %v2193, %v2291
        %2293 = vmatmul.bf16.gmra.mxu0 %v830
        %v2294 = vpop.f32.mrf.mxu0
        %v2295 = vadd.f32 %v2196, %v2294
        %v2296 = vpop.f32.mrf.mxu0
        %v2297 = vadd.f32 %v2198, %v2296
        %2298 = vmatmul.bf16.gmra.mxu0 %v832
        %v2299 = vpop.f32.mrf.mxu0
        %v2300 = vadd.f32 %v2201, %v2299
        %v2301 = vpop.f32.mrf.mxu0
        %v2302 = vadd.f32 %v2203, %v2301
        %2303 = vmatmul.bf16.gmra.mxu0 %v834
        %v2304 = vpop.f32.mrf.mxu0
        %v2305 = vadd.f32 %v2206, %v2304
        %v2306 = vpop.f32.mrf.mxu0
        %v2307 = vadd.f32 %v2208, %v2306
        %2308 = vmatmul.bf16.gmra.mxu0 %v869
        %v2309 = vpop.f32.mrf.mxu0
        %v2310 = vadd.f32 %v2211, %v2309
        %v2311 = vpop.f32.mrf.mxu0
        %v2312 = vadd.f32 %v2213, %v2311
        %2313 = vmatmul.bf16.gmra.mxu0 %v871
        %v2314 = vpop.f32.mrf.mxu0
        %v2315 = vadd.f32 %v2216, %v2314
        %v2316 = vpop.f32.mrf.mxu0
        %v2317 = vadd.f32 %v2218, %v2316
        %2318 = vdwg.mxu0
        %2319 = vmatpush.bf16.msra.mxu0 %v1545
        %2320 = vmatpush.bf16.msra.mxu0 %v1544
        %2321 = vmatpush.bf16.msra.mxu0 %v1543
        %2322 = vmatpush.bf16.msra.mxu0 %v1542
        %2323 = vmatpush.bf16.msra.mxu0 %v1541
        %2324 = vmatpush.bf16.msra.mxu0 %v1540
        %2325 = vmatpush.bf16.msra.mxu0 %v1539
        %2326 = vmatpush.bf16.msra.mxu0 %v1538
        %2327 = vmatmul.bf16.gmra.mxu0 %v890
        %v2328 = vpop.f32.mrf.mxu0
        %v2329 = vadd.f32 %v2230, %v2328
        %v2330 = vpop.f32.mrf.mxu0
        %v2331 = vadd.f32 %v2232, %v2330
        %2332 = vmatmul.bf16.gmra.mxu0 %v894
        %v2333 = vpop.f32.mrf.mxu0
        %v2334 = vadd.f32 %v2235, %v2333
        %v2335 = vpop.f32.mrf.mxu0
        %v2336 = vadd.f32 %v2237, %v2335
        %2337 = vmatmul.bf16.gmra.mxu0 %v898
        %v2338 = vpop.f32.mrf.mxu0
        %v2339 = vadd.f32 %v2240, %v2338
        %v2340 = vpop.f32.mrf.mxu0
        %v2341 = vadd.f32 %v2242, %v2340
        %2342 = vmatmul.bf16.gmra.mxu0 %v902
        %v2343 = vpop.f32.mrf.mxu0
        %v2344 = vadd.f32 %v2245, %v2343
        %v2345 = vpop.f32.mrf.mxu0
        %v2346 = vadd.f32 %v2247, %v2345
        %2347 = vmatmul.bf16.gmra.mxu0 %v906
        %v2348 = vpop.f32.mrf.mxu0
        %v2349 = vadd.f32 %v2250, %v2348
        %v2350 = vpop.f32.mrf.mxu0
        %v2351 = vadd.f32 %v2252, %v2350
        %2352 = vmatmul.bf16.gmra.mxu0 %v910
        %v2353 = vpop.f32.mrf.mxu0
        %v2354 = vadd.f32 %v2255, %v2353
        %v2355 = vpop.f32.mrf.mxu0
        %v2356 = vadd.f32 %v2257, %v2355
        %2357 = vmatmul.bf16.gmra.mxu0 %v914
        %v2358 = vpop.f32.mrf.mxu0
        %v2359 = vadd.f32 %v2260, %v2358
        %v2360 = vpop.f32.mrf.mxu0
        %v2361 = vadd.f32 %v2262, %v2360
        %2362 = vmatmul.bf16.gmra.mxu0 %v918
        %v2363 = vpop.f32.mrf.mxu0
        %v2364 = vadd.f32 %v2265, %v2363
        %v2365 = vpop.f32.mrf.mxu0
        %v2366 = vadd.f32 %v2267, %v2365
        %2367 = vmatmul.bf16.gmra.mxu0 %v922
        %v2368 = vpop.f32.mrf.mxu0
        %v2369 = vadd.f32 %v2270, %v2368
        %v2370 = vpop.f32.mrf.mxu0
        %v2371 = vadd.f32 %v2272, %v2370
        %2372 = vmatmul.bf16.gmra.mxu0 %v926
        %v2373 = vpop.f32.mrf.mxu0
        %v2374 = vadd.f32 %v2275, %v2373
        %v2375 = vpop.f32.mrf.mxu0
        %v2376 = vadd.f32 %v2277, %v2375
        %2377 = vmatmul.bf16.gmra.mxu0 %v930
        %v2378 = vpop.f32.mrf.mxu0
        %v2379 = vadd.f32 %v2280, %v2378
        %v2380 = vpop.f32.mrf.mxu0
        %v2381 = vadd.f32 %v2282, %v2380
        %2382 = vmatmul.bf16.gmra.mxu0 %v934
        %v2383 = vpop.f32.mrf.mxu0
        %v2384 = vadd.f32 %v2285, %v2383
        %v2385 = vpop.f32.mrf.mxu0
        %v2386 = vadd.f32 %v2287, %v2385
        %2387 = vmatmul.bf16.gmra.mxu0 %v938
        %v2388 = vpop.f32.mrf.mxu0
        %v2389 = vadd.f32 %v2290, %v2388
        %v2390 = vpop.f32.mrf.mxu0
        %v2391 = vadd.f32 %v2292, %v2390
        %2392 = vmatmul.bf16.gmra.mxu0 %v942
        %v2393 = vpop.f32.mrf.mxu0
        %v2394 = vadd.f32 %v2295, %v2393
        %v2395 = vpop.f32.mrf.mxu0
        %v2396 = vadd.f32 %v2297, %v2395
        %2397 = vmatmul.bf16.gmra.mxu0 %v946
        %v2398 = vpop.f32.mrf.mxu0
        %v2399 = vadd.f32 %v2300, %v2398
        %v2400 = vpop.f32.mrf.mxu0
        %v2401 = vadd.f32 %v2302, %v2400
        %2402 = vmatmul.bf16.gmra.mxu0 %v950
        %v2403 = vpop.f32.mrf.mxu0
        %v2404 = vadd.f32 %v2305, %v2403
        %v2405 = vpop.f32.mrf.mxu0
        %v2406 = vadd.f32 %v2307, %v2405
        %2407 = vmatmul.bf16.gmra.mxu0 %v959
        %v2408 = vpop.f32.mrf.mxu0
        %v2409 = vadd.f32 %v2310, %v2408
        %v2410 = vpop.f32.mrf.mxu0
        %v2411 = vadd.f32 %v2312, %v2410
        %2412 = vmatmul.bf16.gmra.mxu0 %v968
        %v2413 = vpop.f32.mrf.mxu0
        %v2414 = vadd.f32 %v2315, %v2413
        %v2415 = vpop.f32.mrf.mxu0
        %v2416 = vadd.f32 %v2317, %v2415
        %2417 = vdwg.mxu0
        %2418 = vmatpush.bf16.msra.mxu0 %v1553
        %2419 = vmatpush.bf16.msra.mxu0 %v1552
        %2420 = vmatpush.bf16.msra.mxu0 %v1551
        %2421 = vmatpush.bf16.msra.mxu0 %v1550
        %2422 = vmatpush.bf16.msra.mxu0 %v1549
        %2423 = vmatpush.bf16.msra.mxu0 %v1548
        %2424 = vmatpush.bf16.msra.mxu0 %v1547
        %2425 = vmatpush.bf16.msra.mxu0 %v1546
        %2426 = vmatmul.bf16.gmra.mxu0 %v993
        %v2427 = vpop.f32.mrf.mxu0
        %v2428 = vadd.f32 %v2329, %v2427
        %v2429 = vpop.f32.mrf.mxu0
        %v2430 = vadd.f32 %v2331, %v2429
        %2431 = vmatmul.bf16.gmra.mxu0 %v995
        %v2432 = vpop.f32.mrf.mxu0
        %v2433 = vadd.f32 %v2334, %v2432
        %v2434 = vpop.f32.mrf.mxu0
        %v2435 = vadd.f32 %v2336, %v2434
        %2436 = vmatmul.bf16.gmra.mxu0 %v997
        %v2437 = vpop.f32.mrf.mxu0
        %v2438 = vadd.f32 %v2339, %v2437
        %v2439 = vpop.f32.mrf.mxu0
        %v2440 = vadd.f32 %v2341, %v2439
        %2441 = vmatmul.bf16.gmra.mxu0 %v999
        %v2442 = vpop.f32.mrf.mxu0
        %v2443 = vadd.f32 %v2344, %v2442
        %v2444 = vpop.f32.mrf.mxu0
        %v2445 = vadd.f32 %v2346, %v2444
        %2446 = vmatmul.bf16.gmra.mxu0 %v1001
        %v2447 = vpop.f32.mrf.mxu0
        %v2448 = vadd.f32 %v2349, %v2447
        %v2449 = vpop.f32.mrf.mxu0
        %v2450 = vadd.f32 %v2351, %v2449
        %2451 = vmatmul.bf16.gmra.mxu0 %v1003
        %v2452 = vpop.f32.mrf.mxu0
        %v2453 = vadd.f32 %v2354, %v2452
        %v2454 = vpop.f32.mrf.mxu0
        %v2455 = vadd.f32 %v2356, %v2454
        %2456 = vmatmul.bf16.gmra.mxu0 %v1005
        %v2457 = vpop.f32.mrf.mxu0
        %v2458 = vadd.f32 %v2359, %v2457
        %v2459 = vpop.f32.mrf.mxu0
        %v2460 = vadd.f32 %v2361, %v2459
        %2461 = vmatmul.bf16.gmra.mxu0 %v1007
        %v2462 = vpop.f32.mrf.mxu0
        %v2463 = vadd.f32 %v2364, %v2462
        %v2464 = vpop.f32.mrf.mxu0
        %v2465 = vadd.f32 %v2366, %v2464
        %2466 = vmatmul.bf16.gmra.mxu0 %v1009
        %v2467 = vpop.f32.mrf.mxu0
        %v2468 = vadd.f32 %v2369, %v2467
        %v2469 = vpop.f32.mrf.mxu0
        %v2470 = vadd.f32 %v2371, %v2469
        %2471 = vmatmul.bf16.gmra.mxu0 %v1011
        %v2472 = vpop.f32.mrf.mxu0
        %v2473 = vadd.f32 %v2374, %v2472
        %v2474 = vpop.f32.mrf.mxu0
        %v2475 = vadd.f32 %v2376, %v2474
        %2476 = vmatmul.bf16.gmra.mxu0 %v1013
        %v2477 = vpop.f32.mrf.mxu0
        %v2478 = vadd.f32 %v2379, %v2477
        %v2479 = vpop.f32.mrf.mxu0
        %v2480 = vadd.f32 %v2381, %v2479
        %2481 = vmatmul.bf16.gmra.mxu0 %v1015
        %v2482 = vpop.f32.mrf.mxu0
        %v2483 = vadd.f32 %v2384, %v2482
        %v2484 = vpop.f32.mrf.mxu0
        %v2485 = vadd.f32 %v2386, %v2484
        %2486 = vmatmul.bf16.gmra.mxu0 %v1017
        %v2487 = vpop.f32.mrf.mxu0
        %v2488 = vadd.f32 %v2389, %v2487
        %v2489 = vpop.f32.mrf.mxu0
        %v2490 = vadd.f32 %v2391, %v2489
        %2491 = vmatmul.bf16.gmra.mxu0 %v1019
        %v2492 = vpop.f32.mrf.mxu0
        %v2493 = vadd.f32 %v2394, %v2492
        %v2494 = vpop.f32.mrf.mxu0
        %v2495 = vadd.f32 %v2396, %v2494
        %2496 = vmatmul.bf16.gmra.mxu0 %v1021
        %v2497 = vpop.f32.mrf.mxu0
        %v2498 = vadd.f32 %v2399, %v2497
        %v2499 = vpop.f32.mrf.mxu0
        %v2500 = vadd.f32 %v2401, %v2499
        %2501 = vmatmul.bf16.gmra.mxu0 %v1023
        %v2502 = vpop.f32.mrf.mxu0
        %v2503 = vadd.f32 %v2404, %v2502
        %v2504 = vpop.f32.mrf.mxu0
        %v2505 = vadd.f32 %v2406, %v2504
        %2506 = vmatmul.bf16.gmra.mxu0 %v1025
        %v2507 = vpop.f32.mrf.mxu0
        %v2508 = vadd.f32 %v2409, %v2507
        %v2509 = vpop.f32.mrf.mxu0
        %v2510 = vadd.f32 %v2411, %v2509
        %2511 = vmatmul.bf16.gmra.mxu0 %v1027
        %v2512 = vpop.f32.mrf.mxu0
        %v2513 = vadd.f32 %v2414, %v2512
        %v2514 = vpop.f32.mrf.mxu0
        %v2515 = vadd.f32 %v2416, %v2514
        %2516 = vdwg.mxu0
        %v2517 = vmax.f32 %v2428, 0.0
        %v2518 = vmax.f32 %v2430, 0.0
        %v2519 = vmax.f32 %v2433, 0.0
        %v2520 = vmax.f32 %v2435, 0.0
        %v2521 = vmax.f32 %v2438, 0.0
        %v2522 = vmax.f32 %v2440, 0.0
        %v2523 = vmax.f32 %v2443, 0.0
        %v2524 = vmax.f32 %v2445, 0.0
        %v2525 = vmax.f32 %v2448, 0.0
        %v2526 = vmax.f32 %v2450, 0.0
        %v2527 = vmax.f32 %v2453, 0.0
        %v2528 = vmax.f32 %v2455, 0.0
        %v2529 = vmax.f32 %v2458, 0.0
        %v2530 = vmax.f32 %v2460, 0.0
        %v2531 = vmax.f32 %v2463, 0.0
        %v2532 = vmax.f32 %v2465, 0.0
        %v2533 = vmax.f32 %v2468, 0.0
        %v2534 = vmax.f32 %v2470, 0.0
        %v2535 = vmax.f32 %v2473, 0.0
        %v2536 = vmax.f32 %v2475, 0.0
        %v2537 = vmax.f32 %v2478, 0.0
        %v2538 = vmax.f32 %v2480, 0.0
        %v2539 = vmax.f32 %v2483, 0.0
        %v2540 = vmax.f32 %v2485, 0.0
        %v2541 = vmax.f32 %v2488, 0.0
        %v2542 = vmax.f32 %v2490, 0.0
        %v2543 = vmax.f32 %v2493, 0.0
        %v2544 = vmax.f32 %v2495, 0.0
        %v2545 = vmax.f32 %v2498, 0.0
        %v2546 = vmax.f32 %v2500, 0.0
        %v2547 = vmax.f32 %v2503, 0.0
        %v2548 = vmax.f32 %v2505, 0.0
        %v2549 = vmax.f32 %v2508, 0.0
        %v2550 = vmax.f32 %v2510, 0.0
        %v2551 = vmax.f32 %v2513, 0.0
        %v2552 = vmax.f32 %v2515, 0.0
        %v2553 = vld [vmem:[%s5] sm:$0xff]
        %v2554 = vld [vmem:[%s5 + $0x8] sm:$0xff]
        %v2555 = vld [vmem:[%s5 + $0x10] sm:$0xff]
        %v2556 = vld [vmem:[%s5 + $0x18] sm:$0xff]
        %v2557 = vld [vmem:[%s5 + $0x20] sm:$0xff]
        %v2558 = vld [vmem:[%s5 + $0x28] sm:$0xff]
        %v2559 = vld [vmem:[%s5 + $0x30] sm:$0xff]
        %v2560 = vld [vmem:[%s5 + $0x38] sm:$0xff]
        %v2561 = vld [vmem:[%s5 + $0x40] sm:$0xff]
        %v2562 = vld [vmem:[%s5 + $0x48] sm:$0xff]
        %v2563 = vld [vmem:[%s5 + $0x50] sm:$0xff]
        %v2564 = vld [vmem:[%s5 + $0x58] sm:$0xff]
        %v2565 = vld [vmem:[%s5 + $0x60] sm:$0xff]
        %v2566 = vld [vmem:[%s5 + $0x68] sm:$0xff]
        %v2567 = vld [vmem:[%s5 + $0x70] sm:$0xff]
        %v2568 = vld [vmem:[%s5 + $0x78] sm:$0xff]
        %v2569 = vld [vmem:[%s5 + $0x80] sm:$0xff]
        %v2570 = vld [vmem:[%s5 + $0x88] sm:$0xff]
        %v2571 = vld [vmem:[%s5 + $0x90] sm:$0xff]
        %v2572 = vld [vmem:[%s5 + $0x98] sm:$0xff]
        %v2573 = vld [vmem:[%s5 + $0xa0] sm:$0xff]
        %v2574 = vld [vmem:[%s5 + $0xa8] sm:$0xff]
        %v2575 = vld [vmem:[%s5 + $0xb0] sm:$0xff]
        %v2576 = vld [vmem:[%s5 + $0xb8] sm:$0xff]
        %v2577 = vld [vmem:[%s5 + $0xc0] sm:$0xff]
        %v2578 = vld [vmem:[%s5 + $0xc8] sm:$0xff]
        %v2579 = vld [vmem:[%s5 + $0xd0] sm:$0xff]
        %v2580 = vld [vmem:[%s5 + $0xd8] sm:$0xff]
        %v2581 = vld [vmem:[%s5 + $0xe0] sm:$0xff]
        %v2582 = vld [vmem:[%s5 + $0xe8] sm:$0xff]
        %v2583 = vld [vmem:[%s5 + $0xf0] sm:$0xff]
        %v2584 = vld [vmem:[%s5 + $0xf8] sm:$0xff]
        %v2585 = vld [vmem:[%s5 + $0x100] sm:$0xff]
        %v2586 = vld [vmem:[%s5 + $0x108] sm:$0xff]
        %v2587 = vld [vmem:[%s5 + $0x110] sm:$0xff]
        %v2588 = vld [vmem:[%s5 + $0x118] sm:$0xff]
        %2590 = vset.pattern.permute.xlu0 0
        %2591 = vperm.xlu0 %2590, %v2553
        %v2592 = vpop.permute.xlu0 %2591
        %2595 = vset.pattern.permute.xlu0 0
        %2596 = vperm.xlu0 %2595, %v2554
        %v2597 = vpop.permute.xlu0 %2596
        %2600 = vset.pattern.permute.xlu0 0
        %2601 = vperm.xlu0 %2600, %v2555
        %v2602 = vpop.permute.xlu0 %2601
        %2605 = vset.pattern.permute.xlu0 0
        %2606 = vperm.xlu0 %2605, %v2556
        %v2607 = vpop.permute.xlu0 %2606
        %2610 = vset.pattern.permute.xlu0 0
        %2611 = vperm.xlu0 %2610, %v2557
        %v2612 = vpop.permute.xlu0 %2611
        %2615 = vset.pattern.permute.xlu0 0
        %2616 = vperm.xlu0 %2615, %v2558
        %v2617 = vpop.permute.xlu0 %2616
        %2620 = vset.pattern.permute.xlu0 0
        %2621 = vperm.xlu0 %2620, %v2559
        %v2622 = vpop.permute.xlu0 %2621
        %2625 = vset.pattern.permute.xlu0 0
        %2626 = vperm.xlu0 %2625, %v2560
        %v2627 = vpop.permute.xlu0 %2626
        %2630 = vset.pattern.permute.xlu0 0
        %2631 = vperm.xlu0 %2630, %v2561
        %v2632 = vpop.permute.xlu0 %2631
        %2635 = vset.pattern.permute.xlu0 0
        %2636 = vperm.xlu0 %2635, %v2562
        %v2637 = vpop.permute.xlu0 %2636
        %2640 = vset.pattern.permute.xlu0 0
        %2641 = vperm.xlu0 %2640, %v2563
        %v2642 = vpop.permute.xlu0 %2641
        %2645 = vset.pattern.permute.xlu0 0
        %2646 = vperm.xlu0 %2645, %v2564
        %v2647 = vpop.permute.xlu0 %2646
        %2650 = vset.pattern.permute.xlu0 0
        %2651 = vperm.xlu0 %2650, %v2565
        %v2652 = vpop.permute.xlu0 %2651
        %2655 = vset.pattern.permute.xlu0 0
        %2656 = vperm.xlu0 %2655, %v2566
        %v2657 = vpop.permute.xlu0 %2656
        %2660 = vset.pattern.permute.xlu0 0
        %2661 = vperm.xlu0 %2660, %v2567
        %v2662 = vpop.permute.xlu0 %2661
        %2665 = vset.pattern.permute.xlu0 0
        %2666 = vperm.xlu0 %2665, %v2568
        %v2667 = vpop.permute.xlu0 %2666
        %2670 = vset.pattern.permute.xlu0 0
        %2671 = vperm.xlu0 %2670, %v2569
        %v2672 = vpop.permute.xlu0 %2671
        %2675 = vset.pattern.permute.xlu0 0
        %2676 = vperm.xlu0 %2675, %v2570
        %v2677 = vpop.permute.xlu0 %2676
        %2680 = vset.pattern.permute.xlu0 0
        %2681 = vperm.xlu0 %2680, %v2571
        %v2682 = vpop.permute.xlu0 %2681
        %2685 = vset.pattern.permute.xlu0 0
        %2686 = vperm.xlu0 %2685, %v2572
        %v2687 = vpop.permute.xlu0 %2686
        %2690 = vset.pattern.permute.xlu0 0
        %2691 = vperm.xlu0 %2690, %v2573
        %v2692 = vpop.permute.xlu0 %2691
        %2695 = vset.pattern.permute.xlu0 0
        %2696 = vperm.xlu0 %2695, %v2574
        %v2697 = vpop.permute.xlu0 %2696
        %2700 = vset.pattern.permute.xlu0 0
        %2701 = vperm.xlu0 %2700, %v2575
        %v2702 = vpop.permute.xlu0 %2701
        %2705 = vset.pattern.permute.xlu0 0
        %2706 = vperm.xlu0 %2705, %v2576
        %v2707 = vpop.permute.xlu0 %2706
        %2710 = vset.pattern.permute.xlu0 0
        %2711 = vperm.xlu0 %2710, %v2577
        %v2712 = vpop.permute.xlu0 %2711
        %2715 = vset.pattern.permute.xlu0 0
        %2716 = vperm.xlu0 %2715, %v2578
        %v2717 = vpop.permute.xlu0 %2716
        %2720 = vset.pattern.permute.xlu0 0
        %2721 = vperm.xlu0 %2720, %v2579
        %v2722 = vpop.permute.xlu0 %2721
        %2725 = vset.pattern.permute.xlu0 0
        %2726 = vperm.xlu0 %2725, %v2580
        %v2727 = vpop.permute.xlu0 %2726
        %2730 = vset.pattern.permute.xlu0 0
        %2731 = vperm.xlu0 %2730, %v2581
        %v2732 = vpop.permute.xlu0 %2731
        %2735 = vset.pattern.permute.xlu0 0
        %2736 = vperm.xlu0 %2735, %v2582
        %v2737 = vpop.permute.xlu0 %2736
        %2740 = vset.pattern.permute.xlu0 0
        %2741 = vperm.xlu0 %2740, %v2583
        %v2742 = vpop.permute.xlu0 %2741
        %2745 = vset.pattern.permute.xlu0 0
        %2746 = vperm.xlu0 %2745, %v2584
        %v2747 = vpop.permute.xlu0 %2746
        %2750 = vset.pattern.permute.xlu0 0
        %2751 = vperm.xlu0 %2750, %v2585
        %v2752 = vpop.permute.xlu0 %2751
        %2755 = vset.pattern.permute.xlu0 0
        %2756 = vperm.xlu0 %2755, %v2586
        %v2757 = vpop.permute.xlu0 %2756
        %2760 = vset.pattern.permute.xlu0 0
        %2761 = vperm.xlu0 %2760, %v2587
        %v2762 = vpop.permute.xlu0 %2761
        %2765 = vset.pattern.permute.xlu0 0
        %2766 = vperm.xlu0 %2765, %v2588
        %v2767 = vpop.permute.xlu0 %2766
        %v2769 = vmul.f32 %v2517, %v2592
        %v2770 = vmul.f32 %v2518, %v2597
        %v2771 = vmul.f32 %v2519, %v2602
        %v2772 = vmul.f32 %v2520, %v2607
        %v2773 = vmul.f32 %v2521, %v2612
        %v2774 = vmul.f32 %v2522, %v2617
        %v2775 = vmul.f32 %v2523, %v2622
        %v2776 = vmul.f32 %v2524, %v2627
        %v2777 = vmul.f32 %v2525, %v2632
        %v2778 = vmul.f32 %v2526, %v2637
        %v2779 = vmul.f32 %v2527, %v2642
        %v2780 = vmul.f32 %v2528, %v2647
        %v2781 = vmul.f32 %v2529, %v2652
        %v2782 = vmul.f32 %v2530, %v2657
        %v2783 = vmul.f32 %v2531, %v2662
        %v2784 = vmul.f32 %v2532, %v2667
        %v2785 = vmul.f32 %v2533, %v2672
        %v2786 = vmul.f32 %v2534, %v2677
        %v2787 = vmul.f32 %v2535, %v2682
        %v2788 = vmul.f32 %v2536, %v2687
        %v2789 = vmul.f32 %v2537, %v2692
        %v2790 = vmul.f32 %v2538, %v2697
        %v2791 = vmul.f32 %v2539, %v2702
        %v2792 = vmul.f32 %v2540, %v2707
        %v2793 = vmul.f32 %v2541, %v2712
        %v2794 = vmul.f32 %v2542, %v2717
        %v2795 = vmul.f32 %v2543, %v2722
        %v2796 = vmul.f32 %v2544, %v2727
        %v2797 = vmul.f32 %v2545, %v2732
        %v2798 = vmul.f32 %v2546, %v2737
        %v2799 = vmul.f32 %v2547, %v2742
        %v2800 = vmul.f32 %v2548, %v2747
        %v2801 = vmul.f32 %v2549, %v2752
        %v2802 = vmul.f32 %v2550, %v2757
        %v2803 = vmul.f32 %v2551, %v2762
        %v2804 = vmul.f32 %v2552, %v2767
        %2805 = vst [vmem:[#allocation2] sm:$0xf] 0
        %2806 = vst [vmem:[#allocation2 + $0x4] sm:$0xf] 0
        %2807 = vst [vmem:[#allocation2 + $0x8] sm:$0xf] 0
        %2808 = vst [vmem:[#allocation2 + $0xc] sm:$0xf] 0
        %2809 = vst [vmem:[#allocation2 + $0xa0] sm:$0xf] 0
        %2810 = vst [vmem:[#allocation2 + $0xa4] sm:$0xf] 0
        %2811 = vst [vmem:[#allocation2 + $0xa8] sm:$0xf] 0
        %2812 = vst [vmem:[#allocation2 + $0xac] sm:$0xf] 0
        %v2813 = vpack.c.bf16 %v2769, %v2769
        %v2814 = vpack.c.bf16 %v2770, %v2770
        %v2815 = vpack.c.bf16 %v2771, %v2771
        %v2816 = vpack.c.bf16 %v2772, %v2772
        %v2817 = vpack.c.bf16 %v2773, %v2773
        %v2818 = vpack.c.bf16 %v2774, %v2774
        %v2819 = vpack.c.bf16 %v2775, %v2775
        %v2820 = vpack.c.bf16 %v2776, %v2776
        %v2821 = vpack.c.bf16 %v2777, %v2777
        %v2822 = vpack.c.bf16 %v2778, %v2778
        %v2823 = vpack.c.bf16 %v2779, %v2779
        %v2824 = vpack.c.bf16 %v2780, %v2780
        %v2825 = vpack.c.bf16 %v2781, %v2781
        %v2826 = vpack.c.bf16 %v2782, %v2782
        %v2827 = vpack.c.bf16 %v2783, %v2783
        %v2828 = vpack.c.bf16 %v2784, %v2784
        %v2829 = vpack.c.bf16 %v2785, %v2785
        %v2830 = vpack.c.bf16 %v2786, %v2786
        %v2831 = vpack.c.bf16 %v2787, %v2787
        %v2832 = vpack.c.bf16 %v2788, %v2788
        %v2833 = vpack.c.bf16 %v2789, %v2789
        %v2834 = vpack.c.bf16 %v2790, %v2790
        %v2835 = vpack.c.bf16 %v2791, %v2791
        %v2836 = vpack.c.bf16 %v2792, %v2792
        %v2837 = vpack.c.bf16 %v2793, %v2793
        %v2838 = vpack.c.bf16 %v2794, %v2794
        %v2839 = vpack.c.bf16 %v2795, %v2795
        %v2840 = vpack.c.bf16 %v2796, %v2796
        %v2841 = vpack.c.bf16 %v2797, %v2797
        %v2842 = vpack.c.bf16 %v2798, %v2798
        %v2843 = vpack.c.bf16 %v2799, %v2799
        %v2844 = vpack.c.bf16 %v2800, %v2800
        %v2845 = vpack.c.bf16 %v2801, %v2801
        %v2846 = vpack.c.bf16 %v2802, %v2802
        %v2847 = vpack.c.bf16 %v2803, %v2803
        %v2848 = vpack.c.bf16 %v2804, %v2804
        %2849 = vst [vmem:[#allocation2 + $0x10] sm:$0xf] %v2813
        %2850 = vst [vmem:[#allocation2 + $0x14] sm:$0xf] %v2814
        %2851 = vst [vmem:[#allocation2 + $0x18] sm:$0xf] %v2815
        %2852 = vst [vmem:[#allocation2 + $0x1c] sm:$0xf] %v2816
        %2853 = vst [vmem:[#allocation2 + $0x20] sm:$0xf] %v2817
        %2854 = vst [vmem:[#allocation2 + $0x24] sm:$0xf] %v2818
        %2855 = vst [vmem:[#allocation2 + $0x28] sm:$0xf] %v2819
        %2856 = vst [vmem:[#allocation2 + $0x2c] sm:$0xf] %v2820
        %2857 = vst [vmem:[#allocation2 + $0x30] sm:$0xf] %v2821
        %2858 = vst [vmem:[#allocation2 + $0x34] sm:$0xf] %v2822
        %2859 = vst [vmem:[#allocation2 + $0x38] sm:$0xf] %v2823
        %2860 = vst [vmem:[#allocation2 + $0x3c] sm:$0xf] %v2824
        %2861 = vst [vmem:[#allocation2 + $0x40] sm:$0xf] %v2825
        %2862 = vst [vmem:[#allocation2 + $0x44] sm:$0xf] %v2826
        %2863 = vst [vmem:[#allocation2 + $0x48] sm:$0xf] %v2827
        %2864 = vst [vmem:[#allocation2 + $0x4c] sm:$0xf] %v2828
        %2865 = vst [vmem:[#allocation2 + $0x50] sm:$0xf] %v2829
        %2866 = vst [vmem:[#allocation2 + $0x54] sm:$0xf] %v2830
        %2867 = vst [vmem:[#allocation2 + $0x58] sm:$0xf] %v2831
        %2868 = vst [vmem:[#allocation2 + $0x5c] sm:$0xf] %v2832
        %2869 = vst [vmem:[#allocation2 + $0x60] sm:$0xf] %v2833
        %2870 = vst [vmem:[#allocation2 + $0x64] sm:$0xf] %v2834
        %2871 = vst [vmem:[#allocation2 + $0x68] sm:$0xf] %v2835
        %2872 = vst [vmem:[#allocation2 + $0x6c] sm:$0xf] %v2836
        %2873 = vst [vmem:[#allocation2 + $0x70] sm:$0xf] %v2837
        %2874 = vst [vmem:[#allocation2 + $0x74] sm:$0xf] %v2838
        %2875 = vst [vmem:[#allocation2 + $0x78] sm:$0xf] %v2839
        %2876 = vst [vmem:[#allocation2 + $0x7c] sm:$0xf] %v2840
        %2877 = vst [vmem:[#allocation2 + $0x80] sm:$0xf] %v2841
        %2878 = vst [vmem:[#allocation2 + $0x84] sm:$0xf] %v2842
        %2879 = vst [vmem:[#allocation2 + $0x88] sm:$0xf] %v2843
        %2880 = vst [vmem:[#allocation2 + $0x8c] sm:$0xf] %v2844
        %2881 = vst [vmem:[#allocation2 + $0x90] sm:$0xf] %v2845
        %2882 = vst [vmem:[#allocation2 + $0x94] sm:$0xf] %v2846
        %2883 = vst [vmem:[#allocation2 + $0x98] sm:$0xf] %v2847
        %2884 = vst [vmem:[#allocation2 + $0x9c] sm:$0xf] %v2848
        %v2885 = vld [vmem:[#allocation2 + $0x4] sm:$0xc]
        %v2886 = vld [vmem:[#allocation2 + $0x8] sm:$0xf]
        %v2887 = vld [vmem:[#allocation2 + $0xc] sm:$0xf]
        %v2888 = vld [vmem:[#allocation2 + $0x10] sm:$0xf]
        %v2889 = vld [vmem:[#allocation2 + $0x14] sm:$0xf]
        %v2890 = vld [vmem:[#allocation2 + $0x18] sm:$0xf]
        %v2891 = vld [vmem:[#allocation2 + $0x1c] sm:$0xf]
        %v2892 = vld [vmem:[#allocation2 + $0x20] sm:$0xf]
        %v2893 = vld [vmem:[#allocation2 + $0x24] sm:$0xf]
        %v2894 = vld [vmem:[#allocation2 + $0x28] sm:$0xf]
        %v2895 = vld [vmem:[#allocation2 + $0x2c] sm:$0xf]
        %v2896 = vld [vmem:[#allocation2 + $0x30] sm:$0xf]
        %v2897 = vld [vmem:[#allocation2 + $0x34] sm:$0xf]
        %v2898 = vld [vmem:[#allocation2 + $0x38] sm:$0xf]
        %v2899 = vld [vmem:[#allocation2 + $0x3c] sm:$0xf]
        %v2900 = vld [vmem:[#allocation2 + $0x40] sm:$0xf]
        %v2901 = vld [vmem:[#allocation2 + $0x44] sm:$0xf]
        %v2902 = vld [vmem:[#allocation2 + $0x48] sm:$0xf]
        %v2903 = vld [vmem:[#allocation2 + $0x4c] sm:$0xf]
        %v2904 = vld [vmem:[#allocation2 + $0x50] sm:$0xf]
        %v2905 = vld [vmem:[#allocation2 + $0x54] sm:$0xf]
        %v2906 = vld [vmem:[#allocation2 + $0x58] sm:$0xf]
        %v2907 = vld [vmem:[#allocation2 + $0x5c] sm:$0xf]
        %v2908 = vld [vmem:[#allocation2 + $0x60] sm:$0xf]
        %v2909 = vld [vmem:[#allocation2 + $0x64] sm:$0xf]
        %v2910 = vld [vmem:[#allocation2 + $0x68] sm:$0xf]
        %v2911 = vld [vmem:[#allocation2 + $0x6c] sm:$0xf]
        %v2912 = vld [vmem:[#allocation2 + $0x70] sm:$0xf]
        %v2913 = vld [vmem:[#allocation2 + $0x74] sm:$0xf]
        %v2914 = vld [vmem:[#allocation2 + $0x78] sm:$0xf]
        %v2915 = vld [vmem:[#allocation2 + $0x7c] sm:$0xf]
        %v2916 = vld [vmem:[#allocation2 + $0x80] sm:$0xf]
        %v2917 = vld [vmem:[#allocation2 + $0x84] sm:$0xf]
        %v2918 = vld [vmem:[#allocation2 + $0x88] sm:$0xf]
        %v2919 = vld [vmem:[#allocation2 + $0x8c] sm:$0xf]
        %v2920 = vld [vmem:[#allocation2 + $0x90] sm:$0xf]
        %v2921 = vld [vmem:[#allocation2 + $0x94] sm:$0x7]
        %v2922 = vld [vmem:[#allocation2 + $0x4] sm:$0x8]
        %v2923 = vld [vmem:[#allocation2 + $0x94] sm:$0xf]
        %v2924 = vld [vmem:[#allocation2 + $0xc] sm:$0x8]
        %v2925 = vld [vmem:[#allocation2 + $0x98] sm:$0xf]
        %v2926 = vld [vmem:[#allocation2 + $0x9c] sm:$0xf]
        %v2927 = vld [vmem:[#allocation2 + $0xa0] sm:$0x1]
        %v2928 = vld [vmem:[#allocation2 + $0xa0] sm:$0xf]
        %v2929 = vld [vmem:[#allocation2 + $0xa4] sm:$0xf]
        %v2930 = vld [vmem:[#allocation2 + $0xa8] sm:$0x1]
        %v2931 = vld [vmem:[#allocation2 + $0x18] sm:$0xe]
        %v2932 = vld [vmem:[#allocation2 + $0xa8] sm:$0x3]
        %v2970 = vunpack.c.l.b16 %v2885
        %v2971 = vunpack.c.l.b16 %v2886
        %v2972 = vunpack.c.l.b16 %v2887
        %v2973 = vunpack.c.l.b16 %v2888
        %v2974 = vunpack.c.l.b16 %v2889
        %v2975 = vunpack.c.l.b16 %v2890
        %v2976 = vunpack.c.l.b16 %v2891
        %v2977 = vunpack.c.l.b16 %v2892
        %v2978 = vunpack.c.l.b16 %v2893
        %v2979 = vunpack.c.l.b16 %v2894
        %v2980 = vunpack.c.l.b16 %v2895
        %v2981 = vunpack.c.l.b16 %v2896
        %v2982 = vunpack.c.l.b16 %v2897
        %v2983 = vunpack.c.l.b16 %v2898
        %v2984 = vunpack.c.l.b16 %v2899
        %v2985 = vunpack.c.l.b16 %v2900
        %v2986 = vunpack.c.l.b16 %v2901
        %v2987 = vunpack.c.l.b16 %v2902
        %v2988 = vunpack.c.l.b16 %v2903
        %v2989 = vunpack.c.l.b16 %v2904
        %v2990 = vunpack.c.l.b16 %v2905
        %v2991 = vunpack.c.l.b16 %v2906
        %v2992 = vunpack.c.l.b16 %v2907
        %v2993 = vunpack.c.l.b16 %v2908
        %v2994 = vunpack.c.l.b16 %v2909
        %v2995 = vunpack.c.l.b16 %v2910
        %v2996 = vunpack.c.l.b16 %v2911
        %v2997 = vunpack.c.l.b16 %v2912
        %v2998 = vunpack.c.l.b16 %v2913
        %v2999 = vunpack.c.l.b16 %v2914
        %v3000 = vunpack.c.l.b16 %v2915
        %v3001 = vunpack.c.l.b16 %v2916
        %v3002 = vunpack.c.l.b16 %v2917
        %v3003 = vunpack.c.l.b16 %v2918
        %v3004 = vunpack.c.l.b16 %v2919
        %v3005 = vunpack.c.l.b16 %v2920
        %v3006 = vunpack.c.l.b16 %v2921
        %v3007 = vpack.c.b16 %v2971, %v2970
        %v3008 = vpack.c.b16 %v2973, %v2972
        %v3009 = vpack.c.b16 %v2975, %v2974
        %v3010 = vpack.c.b16 %v2977, %v2976
        %v3011 = vpack.c.b16 %v2979, %v2978
        %v3012 = vpack.c.b16 %v2981, %v2980
        %v3013 = vpack.c.b16 %v2983, %v2982
        %v3014 = vpack.c.b16 %v2985, %v2984
        %v3015 = vpack.c.b16 %v2987, %v2986
        %v3016 = vpack.c.b16 %v2989, %v2988
        %v3017 = vpack.c.b16 %v2991, %v2990
        %v3018 = vpack.c.b16 %v2993, %v2992
        %v3019 = vpack.c.b16 %v2995, %v2994
        %v3020 = vpack.c.b16 %v2997, %v2996
        %v3021 = vpack.c.b16 %v2999, %v2998
        %v3022 = vpack.c.b16 %v3001, %v3000
        %v3023 = vpack.c.b16 %v3003, %v3002
        %v3024 = vpack.c.b16 %v3005, %v3004
        %v3025 = vpack.c.b16 %v3006, %v3006
        %v3027 = vunpack.c.l.b16 %v2922
        %v3028 = vpack.c.b16 %v2971, %v3027
        %v3030 = vshrl.u32 %v3028, 16
        %v3032 = vshll.u32 %v3028, 16
        %v3034 = vrot.slane %v3032, 1
        %v3035 = vor.u32 %v3030, %v3034
        %v3037 = vshll.u32 %v3008, 16
        %v3039 = vrot.slane %v3037, 1
        %v3040 = vsel %vm438, %v3035, %v3039
        %v3041 = vshrl.u32 %v3008, 16
        %v3043 = vor.u32 %v3041, %v3039
        %v3045 = vshll.u32 %v3009, 16
        %v3047 = vrot.slane %v3045, 1
        %v3048 = vsel %vm438, %v3043, %v3047
        %v3049 = vshrl.u32 %v3009, 16
        %v3051 = vor.u32 %v3049, %v3047
        %v3053 = vshll.u32 %v3010, 16
        %v3055 = vrot.slane %v3053, 1
        %v3056 = vsel %vm438, %v3051, %v3055
        %v3057 = vshrl.u32 %v3010, 16
        %v3059 = vor.u32 %v3057, %v3055
        %v3061 = vshll.u32 %v3011, 16
        %v3063 = vrot.slane %v3061, 1
        %v3064 = vsel %vm438, %v3059, %v3063
        %v3065 = vshrl.u32 %v3011, 16
        %v3067 = vor.u32 %v3065, %v3063
        %v3069 = vshll.u32 %v3012, 16
        %v3071 = vrot.slane %v3069, 1
        %v3072 = vsel %vm438, %v3067, %v3071
        %v3073 = vshrl.u32 %v3012, 16
        %v3075 = vor.u32 %v3073, %v3071
        %v3077 = vshll.u32 %v3013, 16
        %v3079 = vrot.slane %v3077, 1
        %v3080 = vsel %vm438, %v3075, %v3079
        %v3081 = vshrl.u32 %v3013, 16
        %v3083 = vor.u32 %v3081, %v3079
        %v3085 = vshll.u32 %v3014, 16
        %v3087 = vrot.slane %v3085, 1
        %v3088 = vsel %vm438, %v3083, %v3087
        %v3089 = vshrl.u32 %v3014, 16
        %v3091 = vor.u32 %v3089, %v3087
        %v3093 = vshll.u32 %v3015, 16
        %v3095 = vrot.slane %v3093, 1
        %v3096 = vsel %vm438, %v3091, %v3095
        %v3097 = vshrl.u32 %v3015, 16
        %v3099 = vor.u32 %v3097, %v3095
        %v3101 = vshll.u32 %v3016, 16
        %v3103 = vrot.slane %v3101, 1
        %v3104 = vsel %vm438, %v3099, %v3103
        %v3105 = vshrl.u32 %v3016, 16
        %v3107 = vor.u32 %v3105, %v3103
        %v3109 = vshll.u32 %v3017, 16
        %v3111 = vrot.slane %v3109, 1
        %v3112 = vsel %vm438, %v3107, %v3111
        %v3113 = vshrl.u32 %v3017, 16
        %v3115 = vor.u32 %v3113, %v3111
        %v3117 = vshll.u32 %v3018, 16
        %v3119 = vrot.slane %v3117, 1
        %v3120 = vsel %vm438, %v3115, %v3119
        %v3121 = vshrl.u32 %v3018, 16
        %v3123 = vor.u32 %v3121, %v3119
        %v3125 = vshll.u32 %v3019, 16
        %v3127 = vrot.slane %v3125, 1
        %v3128 = vsel %vm438, %v3123, %v3127
        %v3129 = vshrl.u32 %v3019, 16
        %v3131 = vor.u32 %v3129, %v3127
        %v3133 = vshll.u32 %v3020, 16
        %v3135 = vrot.slane %v3133, 1
        %v3136 = vsel %vm438, %v3131, %v3135
        %v3137 = vshrl.u32 %v3020, 16
        %v3139 = vor.u32 %v3137, %v3135
        %v3141 = vshll.u32 %v3021, 16
        %v3143 = vrot.slane %v3141, 1
        %v3144 = vsel %vm438, %v3139, %v3143
        %v3145 = vshrl.u32 %v3021, 16
        %v3147 = vor.u32 %v3145, %v3143
        %v3149 = vshll.u32 %v3022, 16
        %v3151 = vrot.slane %v3149, 1
        %v3152 = vsel %vm438, %v3147, %v3151
        %v3153 = vshrl.u32 %v3022, 16
        %v3155 = vor.u32 %v3153, %v3151
        %v3157 = vshll.u32 %v3023, 16
        %v3159 = vrot.slane %v3157, 1
        %v3160 = vsel %vm438, %v3155, %v3159
        %v3161 = vshrl.u32 %v3023, 16
        %v3163 = vor.u32 %v3161, %v3159
        %v3165 = vshll.u32 %v3024, 16
        %v3167 = vrot.slane %v3165, 1
        %v3168 = vsel %vm438, %v3163, %v3167
        %v3169 = vshrl.u32 %v3024, 16
        %v3171 = vor.u32 %v3169, %v3167
        %v3173 = vshll.u32 %v3025, 16
        %v3175 = vrot.slane %v3173, 1
        %v3176 = vsel %vm438, %v3171, %v3175
        %v3177 = vshrl.u32 %v3025, 16
        %v3179 = vor.u32 %v3177, %v3175
        %v3181 = vunpack.c.l.b16 %v2923
        %v3182 = vpack.c.b16 %v3181, %v3181
        %v3183 = vrot.slane %v3028, 1
        %v3184 = vrot.slane %v3008, 1
        %v3185 = vsel %vm608, %v3183, %v3184
        %v3186 = vrot.slane %v3009, 1
        %v3187 = vsel %vm608, %v3184, %v3186
        %v3188 = vrot.slane %v3010, 1
        %v3189 = vsel %vm608, %v3186, %v3188
        %v3190 = vrot.slane %v3011, 1
        %v3191 = vsel %vm608, %v3188, %v3190
        %v3192 = vrot.slane %v3012, 1
        %v3193 = vsel %vm608, %v3190, %v3192
        %v3194 = vrot.slane %v3013, 1
        %v3195 = vsel %vm608, %v3192, %v3194
        %v3196 = vrot.slane %v3014, 1
        %v3197 = vsel %vm608, %v3194, %v3196
        %v3198 = vrot.slane %v3015, 1
        %v3199 = vsel %vm608, %v3196, %v3198
        %v3200 = vrot.slane %v3016, 1
        %v3201 = vsel %vm608, %v3198, %v3200
        %v3202 = vrot.slane %v3017, 1
        %v3203 = vsel %vm608, %v3200, %v3202
        %v3204 = vrot.slane %v3018, 1
        %v3205 = vsel %vm608, %v3202, %v3204
        %v3206 = vrot.slane %v3019, 1
        %v3207 = vsel %vm608, %v3204, %v3206
        %v3208 = vrot.slane %v3020, 1
        %v3209 = vsel %vm608, %v3206, %v3208
        %v3210 = vrot.slane %v3021, 1
        %v3211 = vsel %vm608, %v3208, %v3210
        %v3212 = vrot.slane %v3022, 1
        %v3213 = vsel %vm608, %v3210, %v3212
        %v3214 = vrot.slane %v3023, 1
        %v3215 = vsel %vm608, %v3212, %v3214
        %v3216 = vrot.slane %v3024, 1
        %v3217 = vsel %vm608, %v3214, %v3216
        %v3218 = vrot.slane %v3182, 1
        %v3219 = vsel %vm608, %v3216, %v3218
        %v3223 = vunpack.c.l.b16 %v2924
        %v3224 = vunpack.c.l.b16 %v2925
        %v3225 = vunpack.c.l.b16 %v2926
        %v3226 = vpack.c.b16 %v2973, %v3223
        %v3227 = vpack.c.b16 %v3224, %v3181
        %v3228 = vpack.c.b16 %v3225, %v3225
        %v3229 = vrot.slane %v3226, 1
        %v3230 = vsel %vm608, %v3229, %v3186
        %v3231 = vrot.slane %v3227, 1
        %v3232 = vsel %vm608, %v3216, %v3231
        %v3233 = vrot.slane %v3228, 1
        %v3234 = vsel %vm608, %v3231, %v3233
        %v3235 = vpack.c.b16 %v2974, %v2973
        %v3236 = vpack.c.b16 %v2976, %v2975
        %v3237 = vpack.c.b16 %v2978, %v2977
        %v3238 = vpack.c.b16 %v2980, %v2979
        %v3239 = vpack.c.b16 %v2982, %v2981
        %v3240 = vpack.c.b16 %v2984, %v2983
        %v3241 = vpack.c.b16 %v2986, %v2985
        %v3242 = vpack.c.b16 %v2988, %v2987
        %v3243 = vpack.c.b16 %v2990, %v2989
        %v3244 = vpack.c.b16 %v2992, %v2991
        %v3245 = vpack.c.b16 %v2994, %v2993
        %v3246 = vpack.c.b16 %v2996, %v2995
        %v3247 = vpack.c.b16 %v2998, %v2997
        %v3248 = vpack.c.b16 %v3000, %v2999
        %v3249 = vpack.c.b16 %v3002, %v3001
        %v3250 = vpack.c.b16 %v3004, %v3003
        %v3251 = vpack.c.b16 %v3181, %v3005
        %v3252 = vpack.c.b16 %v3225, %v3224
        %vm3253 = vsmask.f32 2304
        %v3255 = vshrl.u32 %v3235, 16
        %v3257 = vrot.slane %v3255, 5
        %v3258 = vshll.u32 %v3235, 16
        %v3260 = vrot.slane %v3258, 6
        %v3261 = vor.u32 %v3257, %v3260
        %v3263 = vshrl.u32 %v3236, 16
        %v3265 = vrot.slane %v3263, 5
        %v3266 = vshll.u32 %v3236, 16
        %v3268 = vrot.slane %v3266, 6
        %v3269 = vor.u32 %v3265, %v3268
        %v3270 = vsel %vm3253, %v3261, %v3269
        %v3272 = vshrl.u32 %v3237, 16
        %v3274 = vrot.slane %v3272, 5
        %v3275 = vshll.u32 %v3237, 16
        %v3277 = vrot.slane %v3275, 6
        %v3278 = vor.u32 %v3274, %v3277
        %v3279 = vsel %vm3253, %v3269, %v3278
        %v3281 = vshrl.u32 %v3238, 16
        %v3283 = vrot.slane %v3281, 5
        %v3284 = vshll.u32 %v3238, 16
        %v3286 = vrot.slane %v3284, 6
        %v3287 = vor.u32 %v3283, %v3286
        %v3288 = vsel %vm3253, %v3278, %v3287
        %v3290 = vshrl.u32 %v3239, 16
        %v3292 = vrot.slane %v3290, 5
        %v3293 = vshll.u32 %v3239, 16
        %v3295 = vrot.slane %v3293, 6
        %v3296 = vor.u32 %v3292, %v3295
        %v3297 = vsel %vm3253, %v3287, %v3296
        %v3299 = vshrl.u32 %v3240, 16
        %v3301 = vrot.slane %v3299, 5
        %v3302 = vshll.u32 %v3240, 16
        %v3304 = vrot.slane %v3302, 6
        %v3305 = vor.u32 %v3301, %v3304
        %v3306 = vsel %vm3253, %v3296, %v3305
        %v3308 = vshrl.u32 %v3241, 16
        %v3310 = vrot.slane %v3308, 5
        %v3311 = vshll.u32 %v3241, 16
        %v3313 = vrot.slane %v3311, 6
        %v3314 = vor.u32 %v3310, %v3313
        %v3315 = vsel %vm3253, %v3305, %v3314
        %v3317 = vshrl.u32 %v3242, 16
        %v3319 = vrot.slane %v3317, 5
        %v3320 = vshll.u32 %v3242, 16
        %v3322 = vrot.slane %v3320, 6
        %v3323 = vor.u32 %v3319, %v3322
        %v3324 = vsel %vm3253, %v3314, %v3323
        %v3326 = vshrl.u32 %v3243, 16
        %v3328 = vrot.slane %v3326, 5
        %v3329 = vshll.u32 %v3243, 16
        %v3331 = vrot.slane %v3329, 6
        %v3332 = vor.u32 %v3328, %v3331
        %v3333 = vsel %vm3253, %v3323, %v3332
        %v3335 = vshrl.u32 %v3244, 16
        %v3337 = vrot.slane %v3335, 5
        %v3338 = vshll.u32 %v3244, 16
        %v3340 = vrot.slane %v3338, 6
        %v3341 = vor.u32 %v3337, %v3340
        %v3342 = vsel %vm3253, %v3332, %v3341
        %v3344 = vshrl.u32 %v3245, 16
        %v3346 = vrot.slane %v3344, 5
        %v3347 = vshll.u32 %v3245, 16
        %v3349 = vrot.slane %v3347, 6
        %v3350 = vor.u32 %v3346, %v3349
        %v3351 = vsel %vm3253, %v3341, %v3350
        %v3353 = vshrl.u32 %v3246, 16
        %v3355 = vrot.slane %v3353, 5
        %v3356 = vshll.u32 %v3246, 16
        %v3358 = vrot.slane %v3356, 6
        %v3359 = vor.u32 %v3355, %v3358
        %v3360 = vsel %vm3253, %v3350, %v3359
        %v3362 = vshrl.u32 %v3247, 16
        %v3364 = vrot.slane %v3362, 5
        %v3365 = vshll.u32 %v3247, 16
        %v3367 = vrot.slane %v3365, 6
        %v3368 = vor.u32 %v3364, %v3367
        %v3369 = vsel %vm3253, %v3359, %v3368
        %v3371 = vshrl.u32 %v3248, 16
        %v3373 = vrot.slane %v3371, 5
        %v3374 = vshll.u32 %v3248, 16
        %v3376 = vrot.slane %v3374, 6
        %v3377 = vor.u32 %v3373, %v3376
        %v3378 = vsel %vm3253, %v3368, %v3377
        %v3380 = vshrl.u32 %v3249, 16
        %v3382 = vrot.slane %v3380, 5
        %v3383 = vshll.u32 %v3249, 16
        %v3385 = vrot.slane %v3383, 6
        %v3386 = vor.u32 %v3382, %v3385
        %v3387 = vsel %vm3253, %v3377, %v3386
        %v3389 = vshrl.u32 %v3250, 16
        %v3391 = vrot.slane %v3389, 5
        %v3392 = vshll.u32 %v3250, 16
        %v3394 = vrot.slane %v3392, 6
        %v3395 = vor.u32 %v3391, %v3394
        %v3396 = vsel %vm3253, %v3386, %v3395
        %v3398 = vshrl.u32 %v3251, 16
        %v3400 = vrot.slane %v3398, 5
        %v3401 = vshll.u32 %v3251, 16
        %v3403 = vrot.slane %v3401, 6
        %v3404 = vor.u32 %v3400, %v3403
        %v3405 = vsel %vm3253, %v3395, %v3404
        %v3407 = vshrl.u32 %v3252, 16
        %v3409 = vrot.slane %v3407, 5
        %v3410 = vshll.u32 %v3252, 16
        %v3412 = vrot.slane %v3410, 6
        %v3413 = vor.u32 %v3409, %v3412
        %v3414 = vsel %vm3253, %v3404, %v3413
        %v3416 = vunpack.c.l.b16 %v2927
        %v3417 = vpack.c.b16 %v3416, %v3416
        %vm3418 = vcmask 1041408
        %v3419 = vrot.slane %v3235, 6
        %v3420 = vrot.slane %v3236, 6
        %v3421 = vsel %vm3418, %v3419, %v3420
        %v3422 = vrot.slane %v3237, 6
        %v3423 = vsel %vm3418, %v3420, %v3422
        %v3424 = vrot.slane %v3238, 6
        %v3425 = vsel %vm3418, %v3422, %v3424
        %v3426 = vrot.slane %v3239, 6
        %v3427 = vsel %vm3418, %v3424, %v3426
        %v3428 = vrot.slane %v3240, 6
        %v3429 = vsel %vm3418, %v3426, %v3428
        %v3430 = vrot.slane %v3241, 6
        %v3431 = vsel %vm3418, %v3428, %v3430
        %v3432 = vrot.slane %v3242, 6
        %v3433 = vsel %vm3418, %v3430, %v3432
        %v3434 = vrot.slane %v3243, 6
        %v3435 = vsel %vm3418, %v3432, %v3434
        %v3436 = vrot.slane %v3244, 6
        %v3437 = vsel %vm3418, %v3434, %v3436
        %v3438 = vrot.slane %v3245, 6
        %v3439 = vsel %vm3418, %v3436, %v3438
        %v3440 = vrot.slane %v3246, 6
        %v3441 = vsel %vm3418, %v3438, %v3440
        %v3442 = vrot.slane %v3247, 6
        %v3443 = vsel %vm3418, %v3440, %v3442
        %v3444 = vrot.slane %v3248, 6
        %v3445 = vsel %vm3418, %v3442, %v3444
        %v3446 = vrot.slane %v3249, 6
        %v3447 = vsel %vm3418, %v3444, %v3446
        %v3448 = vrot.slane %v3250, 6
        %v3449 = vsel %vm3418, %v3446, %v3448
        %v3450 = vrot.slane %v3251, 6
        %v3451 = vsel %vm3418, %v3448, %v3450
        %v3452 = vrot.slane %v3252, 6
        %v3453 = vsel %vm3418, %v3450, %v3452
        %v3454 = vrot.slane %v3417, 6
        %v3455 = vsel %vm3418, %v3452, %v3454
        %v3459 = vunpack.c.l.b16 %v2928
        %v3460 = vunpack.c.l.b16 %v2929
        %v3461 = vunpack.c.l.b16 %v2930
        %v3462 = vpack.c.b16 %v3460, %v3459
        %v3463 = vpack.c.b16 %v3461, %v3461
        %v3464 = vrot.slane %v3462, 6
        %v3465 = vsel %vm3418, %v3452, %v3464
        %v3466 = vrot.slane %v3463, 6
        %v3467 = vsel %vm3418, %v3464, %v3466
        %v3469 = vunpack.c.l.b16 %v2931
        %v3470 = vpack.c.b16 %v2976, %v3469
        %vm3471 = vsmask.f32 1280
        %v3473 = vshrl.u32 %v3470, 16
        %v3475 = vrot.slane %v3473, 6
        %v3476 = vshll.u32 %v3470, 16
        %v3478 = vrot.slane %v3476, 7
        %v3479 = vor.u32 %v3475, %v3478
        %v3480 = vrot.slane %v3272, 6
        %v3481 = vrot.slane %v3275, 7
        %v3482 = vor.u32 %v3480, %v3481
        %v3483 = vsel %vm3471, %v3479, %v3482
        %v3484 = vrot.slane %v3281, 6
        %v3485 = vrot.slane %v3284, 7
        %v3486 = vor.u32 %v3484, %v3485
        %v3487 = vsel %vm3471, %v3482, %v3486
        %v3488 = vrot.slane %v3290, 6
        %v3489 = vrot.slane %v3293, 7
        %v3490 = vor.u32 %v3488, %v3489
        %v3491 = vsel %vm3471, %v3486, %v3490
        %v3492 = vrot.slane %v3299, 6
        %v3493 = vrot.slane %v3302, 7
        %v3494 = vor.u32 %v3492, %v3493
        %v3495 = vsel %vm3471, %v3490, %v3494
        %v3496 = vrot.slane %v3308, 6
        %v3497 = vrot.slane %v3311, 7
        %v3498 = vor.u32 %v3496, %v3497
        %v3499 = vsel %vm3471, %v3494, %v3498
        %v3500 = vrot.slane %v3317, 6
        %v3501 = vrot.slane %v3320, 7
        %v3502 = vor.u32 %v3500, %v3501
        %v3503 = vsel %vm3471, %v3498, %v3502
        %v3504 = vrot.slane %v3326, 6
        %v3505 = vrot.slane %v3329, 7
        %v3506 = vor.u32 %v3504, %v3505
        %v3507 = vsel %vm3471, %v3502, %v3506
        %v3508 = vrot.slane %v3335, 6
        %v3509 = vrot.slane %v3338, 7
        %v3510 = vor.u32 %v3508, %v3509
        %v3511 = vsel %vm3471, %v3506, %v3510
        %v3512 = vrot.slane %v3344, 6
        %v3513 = vrot.slane %v3347, 7
        %v3514 = vor.u32 %v3512, %v3513
        %v3515 = vsel %vm3471, %v3510, %v3514
        %v3516 = vrot.slane %v3353, 6
        %v3517 = vrot.slane %v3356, 7
        %v3518 = vor.u32 %v3516, %v3517
        %v3519 = vsel %vm3471, %v3514, %v3518
        %v3520 = vrot.slane %v3362, 6
        %v3521 = vrot.slane %v3365, 7
        %v3522 = vor.u32 %v3520, %v3521
        %v3523 = vsel %vm3471, %v3518, %v3522
        %v3524 = vrot.slane %v3371, 6
        %v3525 = vrot.slane %v3374, 7
        %v3526 = vor.u32 %v3524, %v3525
        %v3527 = vsel %vm3471, %v3522, %v3526
        %v3528 = vrot.slane %v3380, 6
        %v3529 = vrot.slane %v3383, 7
        %v3530 = vor.u32 %v3528, %v3529
        %v3531 = vsel %vm3471, %v3526, %v3530
        %v3532 = vrot.slane %v3389, 6
        %v3533 = vrot.slane %v3392, 7
        %v3534 = vor.u32 %v3532, %v3533
        %v3535 = vsel %vm3471, %v3530, %v3534
        %v3536 = vrot.slane %v3398, 6
        %v3537 = vrot.slane %v3401, 7
        %v3538 = vor.u32 %v3536, %v3537
        %v3539 = vsel %vm3471, %v3534, %v3538
        %v3540 = vrot.slane %v3407, 6
        %v3541 = vrot.slane %v3410, 7
        %v3542 = vor.u32 %v3540, %v3541
        %v3543 = vsel %vm3471, %v3538, %v3542
        %v3545 = vshrl.u32 %v3462, 16
        %v3547 = vrot.slane %v3545, 6
        %v3548 = vshll.u32 %v3462, 16
        %v3550 = vrot.slane %v3548, 7
        %v3551 = vor.u32 %v3547, %v3550
        %v3552 = vsel %vm3471, %v3542, %v3551
        %v3554 = vshrl.u32 %v3463, 16
        %v3556 = vrot.slane %v3554, 6
        %v3557 = vshll.u32 %v3463, 16
        %v3559 = vrot.slane %v3557, 7
        %v3560 = vor.u32 %v3556, %v3559
        %v3561 = vsel %vm3471, %v3551, %v3560
        %v3563 = vunpack.c.l.b16 %v2932
        %v3564 = vpack.c.b16 %v3563, %v3563
        %vm3565 = vcmask 1040384
        %v3566 = vrot.slane %v3470, 7
        %v3567 = vrot.slane %v3237, 7
        %v3568 = vsel %vm3565, %v3566, %v3567
        %v3569 = vrot.slane %v3238, 7
        %v3570 = vsel %vm3565, %v3567, %v3569
        %v3571 = vrot.slane %v3239, 7
        %v3572 = vsel %vm3565, %v3569, %v3571
        %v3573 = vrot.slane %v3240, 7
        %v3574 = vsel %vm3565, %v3571, %v3573
        %v3575 = vrot.slane %v3241, 7
        %v3576 = vsel %vm3565, %v3573, %v3575
        %v3577 = vrot.slane %v3242, 7
        %v3578 = vsel %vm3565, %v3575, %v3577
        %v3579 = vrot.slane %v3243, 7
        %v3580 = vsel %vm3565, %v3577, %v3579
        %v3581 = vrot.slane %v3244, 7
        %v3582 = vsel %vm3565, %v3579, %v3581
        %v3583 = vrot.slane %v3245, 7
        %v3584 = vsel %vm3565, %v3581, %v3583
        %v3585 = vrot.slane %v3246, 7
        %v3586 = vsel %vm3565, %v3583, %v3585
        %v3587 = vrot.slane %v3247, 7
        %v3588 = vsel %vm3565, %v3585, %v3587
        %v3589 = vrot.slane %v3248, 7
        %v3590 = vsel %vm3565, %v3587, %v3589
        %v3591 = vrot.slane %v3249, 7
        %v3592 = vsel %vm3565, %v3589, %v3591
        %v3593 = vrot.slane %v3250, 7
        %v3594 = vsel %vm3565, %v3591, %v3593
        %v3595 = vrot.slane %v3251, 7
        %v3596 = vsel %vm3565, %v3593, %v3595
        %v3597 = vrot.slane %v3252, 7
        %v3598 = vsel %vm3565, %v3595, %v3597
        %v3599 = vrot.slane %v3462, 7
        %v3600 = vsel %vm3565, %v3597, %v3599
        %v3601 = vrot.slane %v3564, 7
        %v3602 = vsel %vm3565, %v3599, %v3601
        %v3603 = vld [vmem:[%s3] sm:$0xf]
        %v3604 = vld [vmem:[%s3 + $0x4] sm:$0xf]
        %v3605 = vld [vmem:[%s3 + $0x8] sm:$0xf]
        %v3606 = vld [vmem:[%s3 + $0xc] sm:$0xf]
        %v3607 = vld [vmem:[%s3 + $0x10] sm:$0xf]
        %v3608 = vld [vmem:[%s3 + $0x14] sm:$0xf]
        %v3609 = vld [vmem:[%s3 + $0x18] sm:$0xf]
        %v3610 = vld [vmem:[%s3 + $0x1c] sm:$0xf]
        %v3611 = vld [vmem:[%s3 + $0x20] sm:$0xf]
        %v3612 = vld [vmem:[%s3 + $0x24] sm:$0xf]
        %v3613 = vld [vmem:[%s3 + $0x28] sm:$0xf]
        %v3614 = vld [vmem:[%s3 + $0x2c] sm:$0xf]
        %v3615 = vld [vmem:[%s3 + $0x30] sm:$0xf]
        %v3616 = vld [vmem:[%s3 + $0x34] sm:$0xf]
        %v3617 = vld [vmem:[%s3 + $0x38] sm:$0xf]
        %v3618 = vld [vmem:[%s3 + $0x3c] sm:$0xf]
        %v3619 = vld [vmem:[%s3 + $0x40] sm:$0xf]
        %v3620 = vld [vmem:[%s3 + $0x44] sm:$0xf]
        %v3621 = vld [vmem:[%s3 + $0x48] sm:$0xf]
        %v3622 = vld [vmem:[%s3 + $0x4c] sm:$0xf]
        %v3623 = vld [vmem:[%s3 + $0x50] sm:$0xf]
        %v3624 = vld [vmem:[%s3 + $0x54] sm:$0xf]
        %v3625 = vld [vmem:[%s3 + $0x58] sm:$0xf]
        %v3626 = vld [vmem:[%s3 + $0x5c] sm:$0xf]
        %v3627 = vld [vmem:[%s3 + $0x60] sm:$0xf]
        %v3628 = vld [vmem:[%s3 + $0x64] sm:$0xf]
        %v3629 = vld [vmem:[%s3 + $0x68] sm:$0xf]
        %v3630 = vld [vmem:[%s3 + $0x6c] sm:$0xf]
        %v3631 = vld [vmem:[%s3 + $0x70] sm:$0xf]
        %v3632 = vld [vmem:[%s3 + $0x74] sm:$0xf]
        %v3633 = vld [vmem:[%s3 + $0x78] sm:$0xf]
        %v3634 = vld [vmem:[%s3 + $0x7c] sm:$0xf]
        %v3635 = vld [vmem:[%s3 + $0x80] sm:$0xf]
        %v3636 = vld [vmem:[%s3 + $0x84] sm:$0xf]
        %v3637 = vld [vmem:[%s3 + $0x88] sm:$0xf]
        %v3638 = vld [vmem:[%s3 + $0x8c] sm:$0xf]
        %v3639 = vld [vmem:[%s3 + $0x90] sm:$0xf]
        %v3640 = vld [vmem:[%s3 + $0x94] sm:$0xf]
        %v3641 = vld [vmem:[%s3 + $0x98] sm:$0xf]
        %v3642 = vld [vmem:[%s3 + $0x9c] sm:$0xf]
        %v3643 = vld [vmem:[%s3 + $0xa0] sm:$0xf]
        %v3644 = vld [vmem:[%s3 + $0xa4] sm:$0xf]
        %v3645 = vld [vmem:[%s3 + $0xa8] sm:$0xf]
        %v3646 = vld [vmem:[%s3 + $0xac] sm:$0xf]
        %v3647 = vld [vmem:[%s3 + $0xb0] sm:$0xf]
        %v3648 = vld [vmem:[%s3 + $0xb4] sm:$0xf]
        %v3649 = vld [vmem:[%s3 + $0xb8] sm:$0xf]
        %v3650 = vld [vmem:[%s3 + $0xbc] sm:$0xf]
        %v3651 = vld [vmem:[%s3 + $0xc0] sm:$0xf]
        %v3652 = vld [vmem:[%s3 + $0xc4] sm:$0xf]
        %v3653 = vld [vmem:[%s3 + $0xc8] sm:$0xf]
        %v3654 = vld [vmem:[%s3 + $0xcc] sm:$0xf]
        %v3655 = vld [vmem:[%s3 + $0xd0] sm:$0xf]
        %v3656 = vld [vmem:[%s3 + $0xd4] sm:$0xf]
        %v3657 = vld [vmem:[%s3 + $0xd8] sm:$0xf]
        %v3658 = vld [vmem:[%s3 + $0xdc] sm:$0xf]
        %v3659 = vld [vmem:[%s3 + $0xe0] sm:$0xf]
        %v3660 = vld [vmem:[%s3 + $0xe4] sm:$0xf]
        %v3661 = vld [vmem:[%s3 + $0xe8] sm:$0xf]
        %v3662 = vld [vmem:[%s3 + $0xec] sm:$0xf]
        %v3663 = vld [vmem:[%s3 + $0xf0] sm:$0xf]
        %v3664 = vld [vmem:[%s3 + $0xf4] sm:$0xf]
        %v3665 = vld [vmem:[%s3 + $0xf8] sm:$0xf]
        %v3666 = vld [vmem:[%s3 + $0xfc] sm:$0xf]
        %v3667 = vld [vmem:[%s3 + $0x100] sm:$0xf]
        %v3668 = vld [vmem:[%s3 + $0x104] sm:$0xf]
        %v3669 = vld [vmem:[%s3 + $0x108] sm:$0xf]
        %v3670 = vld [vmem:[%s3 + $0x10c] sm:$0xf]
        %v3671 = vld [vmem:[%s3 + $0x110] sm:$0xf]
        %v3672 = vld [vmem:[%s3 + $0x114] sm:$0xf]
        %v3673 = vld [vmem:[%s3 + $0x118] sm:$0xf]
        %v3674 = vld [vmem:[%s3 + $0x11c] sm:$0xf]
        %v3675 = vld [vmem:[%s3 + $0x120] sm:$0xf]
        %v3676 = vld [vmem:[%s3 + $0x124] sm:$0xf]
        %v3677 = vld [vmem:[%s3 + $0x128] sm:$0xf]
        %v3678 = vld [vmem:[%s3 + $0x12c] sm:$0xf]
        %v3679 = vld [vmem:[%s3 + $0x130] sm:$0xf]
        %v3680 = vld [vmem:[%s3 + $0x134] sm:$0xf]
        %v3681 = vld [vmem:[%s3 + $0x138] sm:$0xf]
        %v3682 = vld [vmem:[%s3 + $0x13c] sm:$0xf]
        %v3683 = vld [vmem:[%s3 + $0x140] sm:$0xf]
        %v3684 = vld [vmem:[%s3 + $0x144] sm:$0xf]
        %v3685 = vld [vmem:[%s3 + $0x148] sm:$0xf]
        %v3686 = vld [vmem:[%s3 + $0x14c] sm:$0xf]
        %v3687 = vld [vmem:[%s3 + $0x150] sm:$0xf]
        %v3688 = vld [vmem:[%s3 + $0x154] sm:$0xf]
        %v3689 = vld [vmem:[%s3 + $0x158] sm:$0xf]
        %v3690 = vld [vmem:[%s3 + $0x15c] sm:$0xf]
        %v3691 = vld [vmem:[%s3 + $0x160] sm:$0xf]
        %v3692 = vld [vmem:[%s3 + $0x164] sm:$0xf]
        %v3693 = vld [vmem:[%s3 + $0x168] sm:$0xf]
        %v3694 = vld [vmem:[%s3 + $0x16c] sm:$0xf]
        %v3695 = vld [vmem:[%s3 + $0x170] sm:$0xf]
        %v3696 = vld [vmem:[%s3 + $0x174] sm:$0xf]
        %v3697 = vld [vmem:[%s3 + $0x178] sm:$0xf]
        %v3698 = vld [vmem:[%s3 + $0x17c] sm:$0xf]
        %v3699 = vld [vmem:[%s3 + $0x180] sm:$0xf]
        %v3700 = vld [vmem:[%s3 + $0x184] sm:$0xf]
        %v3701 = vld [vmem:[%s3 + $0x188] sm:$0xf]
        %v3702 = vld [vmem:[%s3 + $0x18c] sm:$0xf]
        %v3703 = vld [vmem:[%s3 + $0x190] sm:$0xf]
        %v3704 = vld [vmem:[%s3 + $0x194] sm:$0xf]
        %v3705 = vld [vmem:[%s3 + $0x198] sm:$0xf]
        %v3706 = vld [vmem:[%s3 + $0x19c] sm:$0xf]
        %v3707 = vld [vmem:[%s3 + $0x1a0] sm:$0xf]
        %v3708 = vld [vmem:[%s3 + $0x1a4] sm:$0xf]
        %v3709 = vld [vmem:[%s3 + $0x1a8] sm:$0xf]
        %v3710 = vld [vmem:[%s3 + $0x1ac] sm:$0xf]
        %v3711 = vld [vmem:[%s3 + $0x1b0] sm:$0xf]
        %v3712 = vld [vmem:[%s3 + $0x1b4] sm:$0xf]
        %v3713 = vld [vmem:[%s3 + $0x1b8] sm:$0xf]
        %v3714 = vld [vmem:[%s3 + $0x1bc] sm:$0xf]
        %v3715 = vld [vmem:[%s3 + $0x1c0] sm:$0xf]
        %v3716 = vld [vmem:[%s3 + $0x1c4] sm:$0xf]
        %v3717 = vld [vmem:[%s3 + $0x1c8] sm:$0xf]
        %v3718 = vld [vmem:[%s3 + $0x1cc] sm:$0xf]
        %v3719 = vld [vmem:[%s3 + $0x1d0] sm:$0xf]
        %v3720 = vld [vmem:[%s3 + $0x1d4] sm:$0xf]
        %v3721 = vld [vmem:[%s3 + $0x1d8] sm:$0xf]
        %v3722 = vld [vmem:[%s3 + $0x1dc] sm:$0xf]
        %v3723 = vld [vmem:[%s3 + $0x1e0] sm:$0xf]
        %v3724 = vld [vmem:[%s3 + $0x1e4] sm:$0xf]
        %v3725 = vld [vmem:[%s3 + $0x1e8] sm:$0xf]
        %v3726 = vld [vmem:[%s3 + $0x1ec] sm:$0xf]
        %v3727 = vld [vmem:[%s3 + $0x1f0] sm:$0xf]
        %v3728 = vld [vmem:[%s3 + $0x1f4] sm:$0xf]
        %v3729 = vld [vmem:[%s3 + $0x1f8] sm:$0xf]
        %v3730 = vld [vmem:[%s3 + $0x1fc] sm:$0xf]
        %v3731 = vld [vmem:[%s3 + $0x200] sm:$0xf]
        %v3732 = vld [vmem:[%s3 + $0x204] sm:$0xf]
        %v3733 = vld [vmem:[%s3 + $0x208] sm:$0xf]
        %v3734 = vld [vmem:[%s3 + $0x20c] sm:$0xf]
        %v3735 = vld [vmem:[%s3 + $0x210] sm:$0xf]
        %v3736 = vld [vmem:[%s3 + $0x214] sm:$0xf]
        %v3737 = vld [vmem:[%s3 + $0x218] sm:$0xf]
        %v3738 = vld [vmem:[%s3 + $0x21c] sm:$0xf]
        %v3739 = vld [vmem:[%s3 + $0x220] sm:$0xf]
        %v3740 = vld [vmem:[%s3 + $0x224] sm:$0xf]
        %v3741 = vld [vmem:[%s3 + $0x228] sm:$0xf]
        %v3742 = vld [vmem:[%s3 + $0x22c] sm:$0xf]
        %v3743 = vld [vmem:[%s3 + $0x230] sm:$0xf]
        %v3744 = vld [vmem:[%s3 + $0x234] sm:$0xf]
        %v3745 = vld [vmem:[%s3 + $0x238] sm:$0xf]
        %v3746 = vld [vmem:[%s3 + $0x23c] sm:$0xf]
        %v3747 = vld [vmem:[%s4] sm:$0x1]
        %v3749 = vperm.slane %v3747, 0
        %v3752 = vshrl.u32 %v3007, 16
        %v3754 = vrot.slane %v3752, 2
        %v3755 = vshll.u32 %v3007, 16
        %v3757 = vrot.slane %v3755, 3
        %v3758 = vor.u32 %v3754, %v3757
        %v3759 = vrot.slane %v3041, 2
        %v3760 = vrot.slane %v3037, 3
        %v3761 = vor.u32 %v3759, %v3760
        %v3762 = vsel %vm878, %v3758, %v3761
        %v3764 = vshrl.u32 %v3040, 16
        %v3766 = vrot.slane %v3764, 2
        %v3767 = vshll.u32 %v3040, 16
        %v3769 = vrot.slane %v3767, 3
        %v3770 = vor.u32 %v3766, %v3769
        %v3772 = vshrl.u32 %v3048, 16
        %v3774 = vrot.slane %v3772, 2
        %v3775 = vshll.u32 %v3048, 16
        %v3777 = vrot.slane %v3775, 3
        %v3778 = vor.u32 %v3774, %v3777
        %v3779 = vsel %vm878, %v3770, %v3778
        %v3781 = vshrl.u32 %v3185, 16
        %v3783 = vrot.slane %v3781, 2
        %v3784 = vshll.u32 %v3185, 16
        %v3786 = vrot.slane %v3784, 3
        %v3787 = vor.u32 %v3783, %v3786
        %v3789 = vshrl.u32 %v3187, 16
        %v3791 = vrot.slane %v3789, 2
        %v3792 = vshll.u32 %v3187, 16
        %v3794 = vrot.slane %v3792, 3
        %v3795 = vor.u32 %v3791, %v3794
        %v3796 = vsel %vm878, %v3787, %v3795
        %v3798 = vshrl.u32 %v3230, 16
        %v3800 = vrot.slane %v3798, 2
        %v3801 = vshll.u32 %v3230, 16
        %v3803 = vrot.slane %v3801, 3
        %v3804 = vor.u32 %v3800, %v3803
        %v3806 = vshrl.u32 %v3189, 16
        %v3808 = vrot.slane %v3806, 2
        %v3809 = vshll.u32 %v3189, 16
        %v3811 = vrot.slane %v3809, 3
        %v3812 = vor.u32 %v3808, %v3811
        %v3813 = vsel %vm878, %v3804, %v3812
        %v3815 = vshrl.u32 %v3261, 16
        %v3817 = vrot.slane %v3815, 2
        %v3818 = vshll.u32 %v3261, 16
        %v3820 = vrot.slane %v3818, 3
        %v3821 = vor.u32 %v3817, %v3820
        %v3823 = vshrl.u32 %v3270, 16
        %v3825 = vrot.slane %v3823, 2
        %v3826 = vshll.u32 %v3270, 16
        %v3828 = vrot.slane %v3826, 3
        %v3829 = vor.u32 %v3825, %v3828
        %v3830 = vsel %vm878, %v3821, %v3829
        %v3832 = vshrl.u32 %v3419, 16
        %v3834 = vrot.slane %v3832, 2
        %v3835 = vshll.u32 %v3419, 16
        %v3837 = vrot.slane %v3835, 3
        %v3838 = vor.u32 %v3834, %v3837
        %v3840 = vshrl.u32 %v3421, 16
        %v3842 = vrot.slane %v3840, 2
        %v3843 = vshll.u32 %v3421, 16
        %v3845 = vrot.slane %v3843, 3
        %v3846 = vor.u32 %v3842, %v3845
        %v3847 = vsel %vm878, %v3838, %v3846
        %v3849 = vshrl.u32 %v3420, 16
        %v3851 = vrot.slane %v3849, 2
        %v3852 = vshll.u32 %v3420, 16
        %v3854 = vrot.slane %v3852, 3
        %v3855 = vor.u32 %v3851, %v3854
        %v3857 = vshrl.u32 %v3423, 16
        %v3859 = vrot.slane %v3857, 2
        %v3860 = vshll.u32 %v3423, 16
        %v3862 = vrot.slane %v3860, 3
        %v3863 = vor.u32 %v3859, %v3862
        %v3864 = vsel %vm878, %v3855, %v3863
        %v3866 = vshrl.u32 %v3479, 16
        %v3868 = vrot.slane %v3866, 2
        %v3869 = vshll.u32 %v3479, 16
        %v3871 = vrot.slane %v3869, 3
        %v3872 = vor.u32 %v3868, %v3871
        %v3874 = vshrl.u32 %v3483, 16
        %v3876 = vrot.slane %v3874, 2
        %v3877 = vshll.u32 %v3483, 16
        %v3879 = vrot.slane %v3877, 3
        %v3880 = vor.u32 %v3876, %v3879
        %v3881 = vsel %vm878, %v3872, %v3880
        %v3883 = vshrl.u32 %v3566, 16
        %v3885 = vrot.slane %v3883, 2
        %v3886 = vshll.u32 %v3566, 16
        %v3888 = vrot.slane %v3886, 3
        %v3889 = vor.u32 %v3885, %v3888
        %v3891 = vshrl.u32 %v3568, 16
        %v3893 = vrot.slane %v3891, 2
        %v3894 = vshll.u32 %v3568, 16
        %v3896 = vrot.slane %v3894, 3
        %v3897 = vor.u32 %v3893, %v3896
        %v3898 = vsel %vm878, %v3889, %v3897
        %v3899 = vrot.slane %v3049, 2
        %v3900 = vrot.slane %v3045, 3
        %v3901 = vor.u32 %v3899, %v3900
        %v3902 = vsel %vm878, %v3761, %v3901
        %v3904 = vshrl.u32 %v3056, 16
        %v3906 = vrot.slane %v3904, 2
        %v3907 = vshll.u32 %v3056, 16
        %v3909 = vrot.slane %v3907, 3
        %v3910 = vor.u32 %v3906, %v3909
        %v3911 = vsel %vm878, %v3778, %v3910
        %v3912 = vsel %vm878, %v3795, %v3812
        %v3914 = vshrl.u32 %v3191, 16
        %v3916 = vrot.slane %v3914, 2
        %v3917 = vshll.u32 %v3191, 16
        %v3919 = vrot.slane %v3917, 3
        %v3920 = vor.u32 %v3916, %v3919
        %v3921 = vsel %vm878, %v3812, %v3920
        %v3923 = vshrl.u32 %v3279, 16
        %v3925 = vrot.slane %v3923, 2
        %v3926 = vshll.u32 %v3279, 16
        %v3928 = vrot.slane %v3926, 3
        %v3929 = vor.u32 %v3925, %v3928
        %v3930 = vsel %vm878, %v3829, %v3929
        %v3931 = vsel %vm878, %v3846, %v3863
        %v3933 = vshrl.u32 %v3425, 16
        %v3935 = vrot.slane %v3933, 2
        %v3936 = vshll.u32 %v3425, 16
        %v3938 = vrot.slane %v3936, 3
        %v3939 = vor.u32 %v3935, %v3938
        %v3940 = vsel %vm878, %v3863, %v3939
        %v3942 = vshrl.u32 %v3487, 16
        %v3944 = vrot.slane %v3942, 2
        %v3945 = vshll.u32 %v3487, 16
        %v3947 = vrot.slane %v3945, 3
        %v3948 = vor.u32 %v3944, %v3947
        %v3949 = vsel %vm878, %v3880, %v3948
        %v3951 = vshrl.u32 %v3570, 16
        %v3953 = vrot.slane %v3951, 2
        %v3954 = vshll.u32 %v3570, 16
        %v3956 = vrot.slane %v3954, 3
        %v3957 = vor.u32 %v3953, %v3956
        %v3958 = vsel %vm878, %v3897, %v3957
        %v3959 = vrot.slane %v3057, 2
        %v3960 = vrot.slane %v3053, 3
        %v3961 = vor.u32 %v3959, %v3960
        %v3962 = vsel %vm878, %v3901, %v3961
        %v3964 = vshrl.u32 %v3064, 16
        %v3966 = vrot.slane %v3964, 2
        %v3967 = vshll.u32 %v3064, 16
        %v3969 = vrot.slane %v3967, 3
        %v3970 = vor.u32 %v3966, %v3969
        %v3971 = vsel %vm878, %v3910, %v3970
        %v3973 = vshrl.u32 %v3193, 16
        %v3975 = vrot.slane %v3973, 2
        %v3976 = vshll.u32 %v3193, 16
        %v3978 = vrot.slane %v3976, 3
        %v3979 = vor.u32 %v3975, %v3978
        %v3980 = vsel %vm878, %v3920, %v3979
        %v3982 = vshrl.u32 %v3288, 16
        %v3984 = vrot.slane %v3982, 2
        %v3985 = vshll.u32 %v3288, 16
        %v3987 = vrot.slane %v3985, 3
        %v3988 = vor.u32 %v3984, %v3987
        %v3989 = vsel %vm878, %v3929, %v3988
        %v3991 = vshrl.u32 %v3427, 16
        %v3993 = vrot.slane %v3991, 2
        %v3994 = vshll.u32 %v3427, 16
        %v3996 = vrot.slane %v3994, 3
        %v3997 = vor.u32 %v3993, %v3996
        %v3998 = vsel %vm878, %v3939, %v3997
        %v4000 = vshrl.u32 %v3491, 16
        %v4002 = vrot.slane %v4000, 2
        %v4003 = vshll.u32 %v3491, 16
        %v4005 = vrot.slane %v4003, 3
        %v4006 = vor.u32 %v4002, %v4005
        %v4007 = vsel %vm878, %v3948, %v4006
        %v4009 = vshrl.u32 %v3572, 16
        %v4011 = vrot.slane %v4009, 2
        %v4012 = vshll.u32 %v3572, 16
        %v4014 = vrot.slane %v4012, 3
        %v4015 = vor.u32 %v4011, %v4014
        %v4016 = vsel %vm878, %v3957, %v4015
        %v4017 = vrot.slane %v3065, 2
        %v4018 = vrot.slane %v3061, 3
        %v4019 = vor.u32 %v4017, %v4018
        %v4020 = vsel %vm878, %v3961, %v4019
        %v4022 = vshrl.u32 %v3072, 16
        %v4024 = vrot.slane %v4022, 2
        %v4025 = vshll.u32 %v3072, 16
        %v4027 = vrot.slane %v4025, 3
        %v4028 = vor.u32 %v4024, %v4027
        %v4029 = vsel %vm878, %v3970, %v4028
        %v4031 = vshrl.u32 %v3195, 16
        %v4033 = vrot.slane %v4031, 2
        %v4034 = vshll.u32 %v3195, 16
        %v4036 = vrot.slane %v4034, 3
        %v4037 = vor.u32 %v4033, %v4036
        %v4038 = vsel %vm878, %v3979, %v4037
        %v4040 = vshrl.u32 %v3297, 16
        %v4042 = vrot.slane %v4040, 2
        %v4043 = vshll.u32 %v3297, 16
        %v4045 = vrot.slane %v4043, 3
        %v4046 = vor.u32 %v4042, %v4045
        %v4047 = vsel %vm878, %v3988, %v4046
        %v4049 = vshrl.u32 %v3429, 16
        %v4051 = vrot.slane %v4049, 2
        %v4052 = vshll.u32 %v3429, 16
        %v4054 = vrot.slane %v4052, 3
        %v4055 = vor.u32 %v4051, %v4054
        %v4056 = vsel %vm878, %v3997, %v4055
        %v4058 = vshrl.u32 %v3495, 16
        %v4060 = vrot.slane %v4058, 2
        %v4061 = vshll.u32 %v3495, 16
        %v4063 = vrot.slane %v4061, 3
        %v4064 = vor.u32 %v4060, %v4063
        %v4065 = vsel %vm878, %v4006, %v4064
        %v4067 = vshrl.u32 %v3574, 16
        %v4069 = vrot.slane %v4067, 2
        %v4070 = vshll.u32 %v3574, 16
        %v4072 = vrot.slane %v4070, 3
        %v4073 = vor.u32 %v4069, %v4072
        %v4074 = vsel %vm878, %v4015, %v4073
        %v4075 = vrot.slane %v3073, 2
        %v4076 = vrot.slane %v3069, 3
        %v4077 = vor.u32 %v4075, %v4076
        %v4078 = vsel %vm878, %v4019, %v4077
        %v4080 = vshrl.u32 %v3080, 16
        %v4082 = vrot.slane %v4080, 2
        %v4083 = vshll.u32 %v3080, 16
        %v4085 = vrot.slane %v4083, 3
        %v4086 = vor.u32 %v4082, %v4085
        %v4087 = vsel %vm878, %v4028, %v4086
        %v4089 = vshrl.u32 %v3197, 16
        %v4091 = vrot.slane %v4089, 2
        %v4092 = vshll.u32 %v3197, 16
        %v4094 = vrot.slane %v4092, 3
        %v4095 = vor.u32 %v4091, %v4094
        %v4096 = vsel %vm878, %v4037, %v4095
        %v4098 = vshrl.u32 %v3306, 16
        %v4100 = vrot.slane %v4098, 2
        %v4101 = vshll.u32 %v3306, 16
        %v4103 = vrot.slane %v4101, 3
        %v4104 = vor.u32 %v4100, %v4103
        %v4105 = vsel %vm878, %v4046, %v4104
        %v4107 = vshrl.u32 %v3431, 16
        %v4109 = vrot.slane %v4107, 2
        %v4110 = vshll.u32 %v3431, 16
        %v4112 = vrot.slane %v4110, 3
        %v4113 = vor.u32 %v4109, %v4112
        %v4114 = vsel %vm878, %v4055, %v4113
        %v4116 = vshrl.u32 %v3499, 16
        %v4118 = vrot.slane %v4116, 2
        %v4119 = vshll.u32 %v3499, 16
        %v4121 = vrot.slane %v4119, 3
        %v4122 = vor.u32 %v4118, %v4121
        %v4123 = vsel %vm878, %v4064, %v4122
        %v4125 = vshrl.u32 %v3576, 16
        %v4127 = vrot.slane %v4125, 2
        %v4128 = vshll.u32 %v3576, 16
        %v4130 = vrot.slane %v4128, 3
        %v4131 = vor.u32 %v4127, %v4130
        %v4132 = vsel %vm878, %v4073, %v4131
        %v4133 = vrot.slane %v3081, 2
        %v4134 = vrot.slane %v3077, 3
        %v4135 = vor.u32 %v4133, %v4134
        %v4136 = vsel %vm878, %v4077, %v4135
        %v4138 = vshrl.u32 %v3088, 16
        %v4140 = vrot.slane %v4138, 2
        %v4141 = vshll.u32 %v3088, 16
        %v4143 = vrot.slane %v4141, 3
        %v4144 = vor.u32 %v4140, %v4143
        %v4145 = vsel %vm878, %v4086, %v4144
        %v4147 = vshrl.u32 %v3199, 16
        %v4149 = vrot.slane %v4147, 2
        %v4150 = vshll.u32 %v3199, 16
        %v4152 = vrot.slane %v4150, 3
        %v4153 = vor.u32 %v4149, %v4152
        %v4154 = vsel %vm878, %v4095, %v4153
        %v4156 = vshrl.u32 %v3315, 16
        %v4158 = vrot.slane %v4156, 2
        %v4159 = vshll.u32 %v3315, 16
        %v4161 = vrot.slane %v4159, 3
        %v4162 = vor.u32 %v4158, %v4161
        %v4163 = vsel %vm878, %v4104, %v4162
        %v4165 = vshrl.u32 %v3433, 16
        %v4167 = vrot.slane %v4165, 2
        %v4168 = vshll.u32 %v3433, 16
        %v4170 = vrot.slane %v4168, 3
        %v4171 = vor.u32 %v4167, %v4170
        %v4172 = vsel %vm878, %v4113, %v4171
        %v4174 = vshrl.u32 %v3503, 16
        %v4176 = vrot.slane %v4174, 2
        %v4177 = vshll.u32 %v3503, 16
        %v4179 = vrot.slane %v4177, 3
        %v4180 = vor.u32 %v4176, %v4179
        %v4181 = vsel %vm878, %v4122, %v4180
        %v4183 = vshrl.u32 %v3578, 16
        %v4185 = vrot.slane %v4183, 2
        %v4186 = vshll.u32 %v3578, 16
        %v4188 = vrot.slane %v4186, 3
        %v4189 = vor.u32 %v4185, %v4188
        %v4190 = vsel %vm878, %v4131, %v4189
        %v4191 = vrot.slane %v3089, 2
        %v4192 = vrot.slane %v3085, 3
        %v4193 = vor.u32 %v4191, %v4192
        %v4194 = vsel %vm878, %v4135, %v4193
        %v4196 = vshrl.u32 %v3096, 16
        %v4198 = vrot.slane %v4196, 2
        %v4199 = vshll.u32 %v3096, 16
        %v4201 = vrot.slane %v4199, 3
        %v4202 = vor.u32 %v4198, %v4201
        %v4203 = vsel %vm878, %v4144, %v4202
        %v4205 = vshrl.u32 %v3201, 16
        %v4207 = vrot.slane %v4205, 2
        %v4208 = vshll.u32 %v3201, 16
        %v4210 = vrot.slane %v4208, 3
        %v4211 = vor.u32 %v4207, %v4210
        %v4212 = vsel %vm878, %v4153, %v4211
        %v4214 = vshrl.u32 %v3324, 16
        %v4216 = vrot.slane %v4214, 2
        %v4217 = vshll.u32 %v3324, 16
        %v4219 = vrot.slane %v4217, 3
        %v4220 = vor.u32 %v4216, %v4219
        %v4221 = vsel %vm878, %v4162, %v4220
        %v4223 = vshrl.u32 %v3435, 16
        %v4225 = vrot.slane %v4223, 2
        %v4226 = vshll.u32 %v3435, 16
        %v4228 = vrot.slane %v4226, 3
        %v4229 = vor.u32 %v4225, %v4228
        %v4230 = vsel %vm878, %v4171, %v4229
        %v4232 = vshrl.u32 %v3507, 16
        %v4234 = vrot.slane %v4232, 2
        %v4235 = vshll.u32 %v3507, 16
        %v4237 = vrot.slane %v4235, 3
        %v4238 = vor.u32 %v4234, %v4237
        %v4239 = vsel %vm878, %v4180, %v4238
        %v4241 = vshrl.u32 %v3580, 16
        %v4243 = vrot.slane %v4241, 2
        %v4244 = vshll.u32 %v3580, 16
        %v4246 = vrot.slane %v4244, 3
        %v4247 = vor.u32 %v4243, %v4246
        %v4248 = vsel %vm878, %v4189, %v4247
        %v4249 = vrot.slane %v3097, 2
        %v4250 = vrot.slane %v3093, 3
        %v4251 = vor.u32 %v4249, %v4250
        %v4252 = vsel %vm878, %v4193, %v4251
        %v4254 = vshrl.u32 %v3104, 16
        %v4256 = vrot.slane %v4254, 2
        %v4257 = vshll.u32 %v3104, 16
        %v4259 = vrot.slane %v4257, 3
        %v4260 = vor.u32 %v4256, %v4259
        %v4261 = vsel %vm878, %v4202, %v4260
        %v4263 = vshrl.u32 %v3203, 16
        %v4265 = vrot.slane %v4263, 2
        %v4266 = vshll.u32 %v3203, 16
        %v4268 = vrot.slane %v4266, 3
        %v4269 = vor.u32 %v4265, %v4268
        %v4270 = vsel %vm878, %v4211, %v4269
        %v4272 = vshrl.u32 %v3333, 16
        %v4274 = vrot.slane %v4272, 2
        %v4275 = vshll.u32 %v3333, 16
        %v4277 = vrot.slane %v4275, 3
        %v4278 = vor.u32 %v4274, %v4277
        %v4279 = vsel %vm878, %v4220, %v4278
        %v4281 = vshrl.u32 %v3437, 16
        %v4283 = vrot.slane %v4281, 2
        %v4284 = vshll.u32 %v3437, 16
        %v4286 = vrot.slane %v4284, 3
        %v4287 = vor.u32 %v4283, %v4286
        %v4288 = vsel %vm878, %v4229, %v4287
        %v4290 = vshrl.u32 %v3511, 16
        %v4292 = vrot.slane %v4290, 2
        %v4293 = vshll.u32 %v3511, 16
        %v4295 = vrot.slane %v4293, 3
        %v4296 = vor.u32 %v4292, %v4295
        %v4297 = vsel %vm878, %v4238, %v4296
        %v4299 = vshrl.u32 %v3582, 16
        %v4301 = vrot.slane %v4299, 2
        %v4302 = vshll.u32 %v3582, 16
        %v4304 = vrot.slane %v4302, 3
        %v4305 = vor.u32 %v4301, %v4304
        %v4306 = vsel %vm878, %v4247, %v4305
        %v4307 = vrot.slane %v3105, 2
        %v4308 = vrot.slane %v3101, 3
        %v4309 = vor.u32 %v4307, %v4308
        %v4310 = vsel %vm878, %v4251, %v4309
        %v4312 = vshrl.u32 %v3112, 16
        %v4314 = vrot.slane %v4312, 2
        %v4315 = vshll.u32 %v3112, 16
        %v4317 = vrot.slane %v4315, 3
        %v4318 = vor.u32 %v4314, %v4317
        %v4319 = vsel %vm878, %v4260, %v4318
        %v4321 = vshrl.u32 %v3205, 16
        %v4323 = vrot.slane %v4321, 2
        %v4324 = vshll.u32 %v3205, 16
        %v4326 = vrot.slane %v4324, 3
        %v4327 = vor.u32 %v4323, %v4326
        %v4328 = vsel %vm878, %v4269, %v4327
        %v4330 = vshrl.u32 %v3342, 16
        %v4332 = vrot.slane %v4330, 2
        %v4333 = vshll.u32 %v3342, 16
        %v4335 = vrot.slane %v4333, 3
        %v4336 = vor.u32 %v4332, %v4335
        %v4337 = vsel %vm878, %v4278, %v4336
        %v4339 = vshrl.u32 %v3439, 16
        %v4341 = vrot.slane %v4339, 2
        %v4342 = vshll.u32 %v3439, 16
        %v4344 = vrot.slane %v4342, 3
        %v4345 = vor.u32 %v4341, %v4344
        %v4346 = vsel %vm878, %v4287, %v4345
        %v4348 = vshrl.u32 %v3515, 16
        %v4350 = vrot.slane %v4348, 2
        %v4351 = vshll.u32 %v3515, 16
        %v4353 = vrot.slane %v4351, 3
        %v4354 = vor.u32 %v4350, %v4353
        %v4355 = vsel %vm878, %v4296, %v4354
        %v4357 = vshrl.u32 %v3584, 16
        %v4359 = vrot.slane %v4357, 2
        %v4360 = vshll.u32 %v3584, 16
        %v4362 = vrot.slane %v4360, 3
        %v4363 = vor.u32 %v4359, %v4362
        %v4364 = vsel %vm878, %v4305, %v4363
        %v4365 = vrot.slane %v3113, 2
        %v4366 = vrot.slane %v3109, 3
        %v4367 = vor.u32 %v4365, %v4366
        %v4368 = vsel %vm878, %v4309, %v4367
        %v4370 = vshrl.u32 %v3120, 16
        %v4372 = vrot.slane %v4370, 2
        %v4373 = vshll.u32 %v3120, 16
        %v4375 = vrot.slane %v4373, 3
        %v4376 = vor.u32 %v4372, %v4375
        %v4377 = vsel %vm878, %v4318, %v4376
        %v4379 = vshrl.u32 %v3207, 16
        %v4381 = vrot.slane %v4379, 2
        %v4382 = vshll.u32 %v3207, 16
        %v4384 = vrot.slane %v4382, 3
        %v4385 = vor.u32 %v4381, %v4384
        %v4386 = vsel %vm878, %v4327, %v4385
        %v4388 = vshrl.u32 %v3351, 16
        %v4390 = vrot.slane %v4388, 2
        %v4391 = vshll.u32 %v3351, 16
        %v4393 = vrot.slane %v4391, 3
        %v4394 = vor.u32 %v4390, %v4393
        %v4395 = vsel %vm878, %v4336, %v4394
        %v4397 = vshrl.u32 %v3441, 16
        %v4399 = vrot.slane %v4397, 2
        %v4400 = vshll.u32 %v3441, 16
        %v4402 = vrot.slane %v4400, 3
        %v4403 = vor.u32 %v4399, %v4402
        %v4404 = vsel %vm878, %v4345, %v4403
        %v4406 = vshrl.u32 %v3519, 16
        %v4408 = vrot.slane %v4406, 2
        %v4409 = vshll.u32 %v3519, 16
        %v4411 = vrot.slane %v4409, 3
        %v4412 = vor.u32 %v4408, %v4411
        %v4413 = vsel %vm878, %v4354, %v4412
        %v4415 = vshrl.u32 %v3586, 16
        %v4417 = vrot.slane %v4415, 2
        %v4418 = vshll.u32 %v3586, 16
        %v4420 = vrot.slane %v4418, 3
        %v4421 = vor.u32 %v4417, %v4420
        %v4422 = vsel %vm878, %v4363, %v4421
        %v4423 = vrot.slane %v3121, 2
        %v4424 = vrot.slane %v3117, 3
        %v4425 = vor.u32 %v4423, %v4424
        %v4426 = vsel %vm878, %v4367, %v4425
        %v4428 = vshrl.u32 %v3128, 16
        %v4430 = vrot.slane %v4428, 2
        %v4431 = vshll.u32 %v3128, 16
        %v4433 = vrot.slane %v4431, 3
        %v4434 = vor.u32 %v4430, %v4433
        %v4435 = vsel %vm878, %v4376, %v4434
        %v4437 = vshrl.u32 %v3209, 16
        %v4439 = vrot.slane %v4437, 2
        %v4440 = vshll.u32 %v3209, 16
        %v4442 = vrot.slane %v4440, 3
        %v4443 = vor.u32 %v4439, %v4442
        %v4444 = vsel %vm878, %v4385, %v4443
        %v4446 = vshrl.u32 %v3360, 16
        %v4448 = vrot.slane %v4446, 2
        %v4449 = vshll.u32 %v3360, 16
        %v4451 = vrot.slane %v4449, 3
        %v4452 = vor.u32 %v4448, %v4451
        %v4453 = vsel %vm878, %v4394, %v4452
        %v4455 = vshrl.u32 %v3443, 16
        %v4457 = vrot.slane %v4455, 2
        %v4458 = vshll.u32 %v3443, 16
        %v4460 = vrot.slane %v4458, 3
        %v4461 = vor.u32 %v4457, %v4460
        %v4462 = vsel %vm878, %v4403, %v4461
        %v4464 = vshrl.u32 %v3523, 16
        %v4466 = vrot.slane %v4464, 2
        %v4467 = vshll.u32 %v3523, 16
        %v4469 = vrot.slane %v4467, 3
        %v4470 = vor.u32 %v4466, %v4469
        %v4471 = vsel %vm878, %v4412, %v4470
        %v4473 = vshrl.u32 %v3588, 16
        %v4475 = vrot.slane %v4473, 2
        %v4476 = vshll.u32 %v3588, 16
        %v4478 = vrot.slane %v4476, 3
        %v4479 = vor.u32 %v4475, %v4478
        %v4480 = vsel %vm878, %v4421, %v4479
        %v4481 = vrot.slane %v3129, 2
        %v4482 = vrot.slane %v3125, 3
        %v4483 = vor.u32 %v4481, %v4482
        %v4484 = vsel %vm878, %v4425, %v4483
        %v4486 = vshrl.u32 %v3136, 16
        %v4488 = vrot.slane %v4486, 2
        %v4489 = vshll.u32 %v3136, 16
        %v4491 = vrot.slane %v4489, 3
        %v4492 = vor.u32 %v4488, %v4491
        %v4493 = vsel %vm878, %v4434, %v4492
        %v4495 = vshrl.u32 %v3211, 16
        %v4497 = vrot.slane %v4495, 2
        %v4498 = vshll.u32 %v3211, 16
        %v4500 = vrot.slane %v4498, 3
        %v4501 = vor.u32 %v4497, %v4500
        %v4502 = vsel %vm878, %v4443, %v4501
        %v4504 = vshrl.u32 %v3369, 16
        %v4506 = vrot.slane %v4504, 2
        %v4507 = vshll.u32 %v3369, 16
        %v4509 = vrot.slane %v4507, 3
        %v4510 = vor.u32 %v4506, %v4509
        %v4511 = vsel %vm878, %v4452, %v4510
        %v4513 = vshrl.u32 %v3445, 16
        %v4515 = vrot.slane %v4513, 2
        %v4516 = vshll.u32 %v3445, 16
        %v4518 = vrot.slane %v4516, 3
        %v4519 = vor.u32 %v4515, %v4518
        %v4520 = vsel %vm878, %v4461, %v4519
        %v4522 = vshrl.u32 %v3527, 16
        %v4524 = vrot.slane %v4522, 2
        %v4525 = vshll.u32 %v3527, 16
        %v4527 = vrot.slane %v4525, 3
        %v4528 = vor.u32 %v4524, %v4527
        %v4529 = vsel %vm878, %v4470, %v4528
        %v4531 = vshrl.u32 %v3590, 16
        %v4533 = vrot.slane %v4531, 2
        %v4534 = vshll.u32 %v3590, 16
        %v4536 = vrot.slane %v4534, 3
        %v4537 = vor.u32 %v4533, %v4536
        %v4538 = vsel %vm878, %v4479, %v4537
        %v4539 = vrot.slane %v3137, 2
        %v4540 = vrot.slane %v3133, 3
        %v4541 = vor.u32 %v4539, %v4540
        %v4542 = vsel %vm878, %v4483, %v4541
        %v4544 = vshrl.u32 %v3144, 16
        %v4546 = vrot.slane %v4544, 2
        %v4547 = vshll.u32 %v3144, 16
        %v4549 = vrot.slane %v4547, 3
        %v4550 = vor.u32 %v4546, %v4549
        %v4551 = vsel %vm878, %v4492, %v4550
        %v4553 = vshrl.u32 %v3213, 16
        %v4555 = vrot.slane %v4553, 2
        %v4556 = vshll.u32 %v3213, 16
        %v4558 = vrot.slane %v4556, 3
        %v4559 = vor.u32 %v4555, %v4558
        %v4560 = vsel %vm878, %v4501, %v4559
        %v4562 = vshrl.u32 %v3378, 16
        %v4564 = vrot.slane %v4562, 2
        %v4565 = vshll.u32 %v3378, 16
        %v4567 = vrot.slane %v4565, 3
        %v4568 = vor.u32 %v4564, %v4567
        %v4569 = vsel %vm878, %v4510, %v4568
        %v4571 = vshrl.u32 %v3447, 16
        %v4573 = vrot.slane %v4571, 2
        %v4574 = vshll.u32 %v3447, 16
        %v4576 = vrot.slane %v4574, 3
        %v4577 = vor.u32 %v4573, %v4576
        %v4578 = vsel %vm878, %v4519, %v4577
        %v4580 = vshrl.u32 %v3531, 16
        %v4582 = vrot.slane %v4580, 2
        %v4583 = vshll.u32 %v3531, 16
        %v4585 = vrot.slane %v4583, 3
        %v4586 = vor.u32 %v4582, %v4585
        %v4587 = vsel %vm878, %v4528, %v4586
        %v4589 = vshrl.u32 %v3592, 16
        %v4591 = vrot.slane %v4589, 2
        %v4592 = vshll.u32 %v3592, 16
        %v4594 = vrot.slane %v4592, 3
        %v4595 = vor.u32 %v4591, %v4594
        %v4596 = vsel %vm878, %v4537, %v4595
        %v4597 = vrot.slane %v3145, 2
        %v4598 = vrot.slane %v3141, 3
        %v4599 = vor.u32 %v4597, %v4598
        %v4600 = vsel %vm878, %v4541, %v4599
        %v4602 = vshrl.u32 %v3152, 16
        %v4604 = vrot.slane %v4602, 2
        %v4605 = vshll.u32 %v3152, 16
        %v4607 = vrot.slane %v4605, 3
        %v4608 = vor.u32 %v4604, %v4607
        %v4609 = vsel %vm878, %v4550, %v4608
        %v4611 = vshrl.u32 %v3215, 16
        %v4613 = vrot.slane %v4611, 2
        %v4614 = vshll.u32 %v3215, 16
        %v4616 = vrot.slane %v4614, 3
        %v4617 = vor.u32 %v4613, %v4616
        %v4618 = vsel %vm878, %v4559, %v4617
        %v4620 = vshrl.u32 %v3387, 16
        %v4622 = vrot.slane %v4620, 2
        %v4623 = vshll.u32 %v3387, 16
        %v4625 = vrot.slane %v4623, 3
        %v4626 = vor.u32 %v4622, %v4625
        %v4627 = vsel %vm878, %v4568, %v4626
        %v4629 = vshrl.u32 %v3449, 16
        %v4631 = vrot.slane %v4629, 2
        %v4632 = vshll.u32 %v3449, 16
        %v4634 = vrot.slane %v4632, 3
        %v4635 = vor.u32 %v4631, %v4634
        %v4636 = vsel %vm878, %v4577, %v4635
        %v4638 = vshrl.u32 %v3535, 16
        %v4640 = vrot.slane %v4638, 2
        %v4641 = vshll.u32 %v3535, 16
        %v4643 = vrot.slane %v4641, 3
        %v4644 = vor.u32 %v4640, %v4643
        %v4645 = vsel %vm878, %v4586, %v4644
        %v4647 = vshrl.u32 %v3594, 16
        %v4649 = vrot.slane %v4647, 2
        %v4650 = vshll.u32 %v3594, 16
        %v4652 = vrot.slane %v4650, 3
        %v4653 = vor.u32 %v4649, %v4652
        %v4654 = vsel %vm878, %v4595, %v4653
        %v4655 = vrot.slane %v3153, 2
        %v4656 = vrot.slane %v3149, 3
        %v4657 = vor.u32 %v4655, %v4656
        %v4658 = vsel %vm878, %v4599, %v4657
        %v4660 = vshrl.u32 %v3160, 16
        %v4662 = vrot.slane %v4660, 2
        %v4663 = vshll.u32 %v3160, 16
        %v4665 = vrot.slane %v4663, 3
        %v4666 = vor.u32 %v4662, %v4665
        %v4667 = vsel %vm878, %v4608, %v4666
        %v4669 = vshrl.u32 %v3217, 16
        %v4671 = vrot.slane %v4669, 2
        %v4672 = vshll.u32 %v3217, 16
        %v4674 = vrot.slane %v4672, 3
        %v4675 = vor.u32 %v4671, %v4674
        %v4676 = vsel %vm878, %v4617, %v4675
        %v4678 = vshrl.u32 %v3396, 16
        %v4680 = vrot.slane %v4678, 2
        %v4681 = vshll.u32 %v3396, 16
        %v4683 = vrot.slane %v4681, 3
        %v4684 = vor.u32 %v4680, %v4683
        %v4685 = vsel %vm878, %v4626, %v4684
        %v4687 = vshrl.u32 %v3451, 16
        %v4689 = vrot.slane %v4687, 2
        %v4690 = vshll.u32 %v3451, 16
        %v4692 = vrot.slane %v4690, 3
        %v4693 = vor.u32 %v4689, %v4692
        %v4694 = vsel %vm878, %v4635, %v4693
        %v4696 = vshrl.u32 %v3539, 16
        %v4698 = vrot.slane %v4696, 2
        %v4699 = vshll.u32 %v3539, 16
        %v4701 = vrot.slane %v4699, 3
        %v4702 = vor.u32 %v4698, %v4701
        %v4703 = vsel %vm878, %v4644, %v4702
        %v4705 = vshrl.u32 %v3596, 16
        %v4707 = vrot.slane %v4705, 2
        %v4708 = vshll.u32 %v3596, 16
        %v4710 = vrot.slane %v4708, 3
        %v4711 = vor.u32 %v4707, %v4710
        %v4712 = vsel %vm878, %v4653, %v4711
        %v4713 = vrot.slane %v3161, 2
        %v4714 = vrot.slane %v3157, 3
        %v4715 = vor.u32 %v4713, %v4714
        %v4716 = vsel %vm878, %v4657, %v4715
        %v4718 = vshrl.u32 %v3168, 16
        %v4720 = vrot.slane %v4718, 2
        %v4721 = vshll.u32 %v3168, 16
        %v4723 = vrot.slane %v4721, 3
        %v4724 = vor.u32 %v4720, %v4723
        %v4725 = vsel %vm878, %v4666, %v4724
        %v4727 = vshrl.u32 %v3232, 16
        %v4729 = vrot.slane %v4727, 2
        %v4730 = vshll.u32 %v3232, 16
        %v4732 = vrot.slane %v4730, 3
        %v4733 = vor.u32 %v4729, %v4732
        %v4734 = vsel %vm878, %v4675, %v4733
        %v4736 = vshrl.u32 %v3405, 16
        %v4738 = vrot.slane %v4736, 2
        %v4739 = vshll.u32 %v3405, 16
        %v4741 = vrot.slane %v4739, 3
        %v4742 = vor.u32 %v4738, %v4741
        %v4743 = vsel %vm878, %v4684, %v4742
        %v4745 = vshrl.u32 %v3453, 16
        %v4747 = vrot.slane %v4745, 2
        %v4748 = vshll.u32 %v3453, 16
        %v4750 = vrot.slane %v4748, 3
        %v4751 = vor.u32 %v4747, %v4750
        %v4752 = vsel %vm878, %v4693, %v4751
        %v4754 = vshrl.u32 %v3543, 16
        %v4756 = vrot.slane %v4754, 2
        %v4757 = vshll.u32 %v3543, 16
        %v4759 = vrot.slane %v4757, 3
        %v4760 = vor.u32 %v4756, %v4759
        %v4761 = vsel %vm878, %v4702, %v4760
        %v4763 = vshrl.u32 %v3598, 16
        %v4765 = vrot.slane %v4763, 2
        %v4766 = vshll.u32 %v3598, 16
        %v4768 = vrot.slane %v4766, 3
        %v4769 = vor.u32 %v4765, %v4768
        %v4770 = vsel %vm878, %v4711, %v4769
        %v4771 = vrot.slane %v3169, 2
        %v4772 = vrot.slane %v3165, 3
        %v4773 = vor.u32 %v4771, %v4772
        %v4774 = vsel %vm878, %v4715, %v4773
        %v4776 = vshrl.u32 %v3176, 16
        %v4778 = vrot.slane %v4776, 2
        %v4779 = vshll.u32 %v3176, 16
        %v4781 = vrot.slane %v4779, 3
        %v4782 = vor.u32 %v4778, %v4781
        %v4783 = vsel %vm878, %v4724, %v4782
        %v4785 = vshrl.u32 %v3219, 16
        %v4787 = vrot.slane %v4785, 2
        %v4788 = vshll.u32 %v3219, 16
        %v4790 = vrot.slane %v4788, 3
        %v4791 = vor.u32 %v4787, %v4790
        %v4792 = vsel %vm878, %v4675, %v4791
        %v4794 = vshrl.u32 %v3234, 16
        %v4796 = vrot.slane %v4794, 2
        %v4797 = vshll.u32 %v3234, 16
        %v4799 = vrot.slane %v4797, 3
        %v4800 = vor.u32 %v4796, %v4799
        %v4801 = vsel %vm878, %v4733, %v4800
        %v4803 = vshrl.u32 %v3414, 16
        %v4805 = vrot.slane %v4803, 2
        %v4806 = vshll.u32 %v3414, 16
        %v4808 = vrot.slane %v4806, 3
        %v4809 = vor.u32 %v4805, %v4808
        %v4810 = vsel %vm878, %v4742, %v4809
        %v4812 = vshrl.u32 %v3465, 16
        %v4814 = vrot.slane %v4812, 2
        %v4815 = vshll.u32 %v3465, 16
        %v4817 = vrot.slane %v4815, 3
        %v4818 = vor.u32 %v4814, %v4817
        %v4819 = vsel %vm878, %v4751, %v4818
        %v4821 = vshrl.u32 %v3552, 16
        %v4823 = vrot.slane %v4821, 2
        %v4824 = vshll.u32 %v3552, 16
        %v4826 = vrot.slane %v4824, 3
        %v4827 = vor.u32 %v4823, %v4826
        %v4828 = vsel %vm878, %v4760, %v4827
        %v4830 = vshrl.u32 %v3600, 16
        %v4832 = vrot.slane %v4830, 2
        %v4833 = vshll.u32 %v3600, 16
        %v4835 = vrot.slane %v4833, 3
        %v4836 = vor.u32 %v4832, %v4835
        %v4837 = vsel %vm878, %v4769, %v4836
        %v4838 = vrot.slane %v3177, 2
        %v4839 = vrot.slane %v3173, 3
        %v4840 = vor.u32 %v4838, %v4839
        %v4841 = vsel %vm878, %v4773, %v4840
        %v4843 = vshrl.u32 %v3179, 16
        %v4845 = vrot.slane %v4843, 2
        %v4846 = vshll.u32 %v3179, 16
        %v4848 = vrot.slane %v4846, 3
        %v4849 = vor.u32 %v4845, %v4848
        %v4850 = vsel %vm878, %v4782, %v4849
        %v4852 = vshrl.u32 %v3218, 16
        %v4854 = vrot.slane %v4852, 2
        %v4855 = vshll.u32 %v3218, 16
        %v4857 = vrot.slane %v4855, 3
        %v4858 = vor.u32 %v4854, %v4857
        %v4859 = vsel %vm878, %v4791, %v4858
        %v4861 = vshrl.u32 %v3233, 16
        %v4863 = vrot.slane %v4861, 2
        %v4864 = vshll.u32 %v3233, 16
        %v4866 = vrot.slane %v4864, 3
        %v4867 = vor.u32 %v4863, %v4866
        %v4868 = vsel %vm878, %v4800, %v4867
        %v4870 = vshrl.u32 %v3413, 16
        %v4872 = vrot.slane %v4870, 2
        %v4873 = vshll.u32 %v3413, 16
        %v4875 = vrot.slane %v4873, 3
        %v4876 = vor.u32 %v4872, %v4875
        %v4877 = vsel %vm878, %v4809, %v4876
        %v4879 = vshrl.u32 %v3455, 16
        %v4881 = vrot.slane %v4879, 2
        %v4882 = vshll.u32 %v3455, 16
        %v4884 = vrot.slane %v4882, 3
        %v4885 = vor.u32 %v4881, %v4884
        %v4886 = vsel %vm878, %v4751, %v4885
        %v4888 = vshrl.u32 %v3467, 16
        %v4890 = vrot.slane %v4888, 2
        %v4891 = vshll.u32 %v3467, 16
        %v4893 = vrot.slane %v4891, 3
        %v4894 = vor.u32 %v4890, %v4893
        %v4895 = vsel %vm878, %v4818, %v4894
        %v4897 = vshrl.u32 %v3561, 16
        %v4899 = vrot.slane %v4897, 2
        %v4900 = vshll.u32 %v3561, 16
        %v4902 = vrot.slane %v4900, 3
        %v4903 = vor.u32 %v4899, %v4902
        %v4904 = vsel %vm878, %v4827, %v4903
        %v4906 = vshrl.u32 %v3602, 16
        %v4908 = vrot.slane %v4906, 2
        %v4909 = vshll.u32 %v3602, 16
        %v4911 = vrot.slane %v4909, 3
        %v4912 = vor.u32 %v4908, %v4911
        %v4913 = vsel %vm878, %v4836, %v4912
        %v5191 = vunpack.c.l.b16 %v3603
        %v5192 = vunpack.c.l.b16 %v3604
        %v5193 = vunpack.c.l.b16 %v3605
        %v5194 = vunpack.c.l.b16 %v3606
        %v5195 = vunpack.c.l.b16 %v3607
        %v5196 = vunpack.c.l.b16 %v3608
        %v5197 = vunpack.c.l.b16 %v3609
        %v5198 = vunpack.c.l.b16 %v3610
        %v5199 = vunpack.c.l.b16 %v3611
        %v5200 = vunpack.c.l.b16 %v3612
        %v5201 = vunpack.c.l.b16 %v3613
        %v5202 = vunpack.c.l.b16 %v3614
        %v5203 = vunpack.c.l.b16 %v3615
        %v5204 = vunpack.c.l.b16 %v3616
        %v5205 = vunpack.c.l.b16 %v3617
        %v5206 = vunpack.c.l.b16 %v3618
        %v5207 = vunpack.c.l.b16 %v3619
        %v5208 = vunpack.c.l.b16 %v3620
        %v5209 = vunpack.c.l.b16 %v3621
        %v5210 = vunpack.c.l.b16 %v3622
        %v5211 = vunpack.c.l.b16 %v3623
        %v5212 = vunpack.c.l.b16 %v3624
        %v5213 = vunpack.c.l.b16 %v3625
        %v5214 = vunpack.c.l.b16 %v3626
        %v5215 = vunpack.c.l.b16 %v3627
        %v5216 = vunpack.c.l.b16 %v3628
        %v5217 = vunpack.c.l.b16 %v3629
        %v5218 = vunpack.c.l.b16 %v3630
        %v5219 = vunpack.c.l.b16 %v3631
        %v5220 = vunpack.c.l.b16 %v3632
        %v5221 = vunpack.c.l.b16 %v3633
        %v5222 = vunpack.c.l.b16 %v3634
        %v5223 = vunpack.c.l.b16 %v3635
        %v5224 = vunpack.c.l.b16 %v3636
        %v5225 = vunpack.c.l.b16 %v3637
        %v5226 = vunpack.c.l.b16 %v3638
        %v5227 = vunpack.c.l.b16 %v3639
        %v5228 = vunpack.c.l.b16 %v3640
        %v5229 = vunpack.c.l.b16 %v3641
        %v5230 = vunpack.c.l.b16 %v3642
        %v5231 = vunpack.c.l.b16 %v3643
        %v5232 = vunpack.c.l.b16 %v3644
        %v5233 = vunpack.c.l.b16 %v3645
        %v5234 = vunpack.c.l.b16 %v3646
        %v5235 = vunpack.c.l.b16 %v3647
        %v5236 = vunpack.c.l.b16 %v3648
        %v5237 = vunpack.c.l.b16 %v3649
        %v5238 = vunpack.c.l.b16 %v3650
        %v5239 = vunpack.c.l.b16 %v3651
        %v5240 = vunpack.c.l.b16 %v3652
        %v5241 = vunpack.c.l.b16 %v3653
        %v5242 = vunpack.c.l.b16 %v3654
        %v5243 = vunpack.c.l.b16 %v3655
        %v5244 = vunpack.c.l.b16 %v3656
        %v5245 = vunpack.c.l.b16 %v3657
        %v5246 = vunpack.c.l.b16 %v3658
        %v5247 = vunpack.c.l.b16 %v3659
        %v5248 = vunpack.c.l.b16 %v3660
        %v5249 = vunpack.c.l.b16 %v3661
        %v5250 = vunpack.c.l.b16 %v3662
        %v5251 = vunpack.c.l.b16 %v3663
        %v5252 = vunpack.c.l.b16 %v3664
        %v5253 = vunpack.c.l.b16 %v3665
        %v5254 = vunpack.c.l.b16 %v3666
        %v5255 = vunpack.c.l.b16 %v3667
        %v5256 = vunpack.c.l.b16 %v3668
        %v5257 = vunpack.c.l.b16 %v3669
        %v5258 = vunpack.c.l.b16 %v3670
        %v5259 = vunpack.c.l.b16 %v3671
        %v5260 = vunpack.c.l.b16 %v3672
        %v5261 = vunpack.c.l.b16 %v3673
        %v5262 = vunpack.c.l.b16 %v3674
        %v5263 = vunpack.c.l.b16 %v3675
        %v5264 = vunpack.c.l.b16 %v3676
        %v5265 = vunpack.c.l.b16 %v3677
        %v5266 = vunpack.c.l.b16 %v3678
        %v5267 = vunpack.c.l.b16 %v3679
        %v5268 = vunpack.c.l.b16 %v3680
        %v5269 = vunpack.c.l.b16 %v3681
        %v5270 = vunpack.c.l.b16 %v3682
        %v5271 = vunpack.c.l.b16 %v3683
        %v5272 = vunpack.c.l.b16 %v3684
        %v5273 = vunpack.c.l.b16 %v3685
        %v5274 = vunpack.c.l.b16 %v3686
        %v5275 = vunpack.c.l.b16 %v3687
        %v5276 = vunpack.c.l.b16 %v3688
        %v5277 = vunpack.c.l.b16 %v3689
        %v5278 = vunpack.c.l.b16 %v3690
        %v5279 = vunpack.c.l.b16 %v3691
        %v5280 = vunpack.c.l.b16 %v3692
        %v5281 = vunpack.c.l.b16 %v3693
        %v5282 = vunpack.c.l.b16 %v3694
        %v5283 = vunpack.c.l.b16 %v3695
        %v5284 = vunpack.c.l.b16 %v3696
        %v5285 = vunpack.c.l.b16 %v3697
        %v5286 = vunpack.c.l.b16 %v3698
        %v5287 = vunpack.c.l.b16 %v3699
        %v5288 = vunpack.c.l.b16 %v3700
        %v5289 = vunpack.c.l.b16 %v3701
        %v5290 = vunpack.c.l.b16 %v3702
        %v5291 = vunpack.c.l.b16 %v3703
        %v5292 = vunpack.c.l.b16 %v3704
        %v5293 = vunpack.c.l.b16 %v3705
        %v5294 = vunpack.c.l.b16 %v3706
        %v5295 = vunpack.c.l.b16 %v3707
        %v5296 = vunpack.c.l.b16 %v3708
        %v5297 = vunpack.c.l.b16 %v3709
        %v5298 = vunpack.c.l.b16 %v3710
        %v5299 = vunpack.c.l.b16 %v3711
        %v5300 = vunpack.c.l.b16 %v3712
        %v5301 = vunpack.c.l.b16 %v3713
        %v5302 = vunpack.c.l.b16 %v3714
        %v5303 = vunpack.c.l.b16 %v3715
        %v5304 = vunpack.c.l.b16 %v3716
        %v5305 = vunpack.c.l.b16 %v3717
        %v5306 = vunpack.c.l.b16 %v3718
        %v5307 = vunpack.c.l.b16 %v3719
        %v5308 = vunpack.c.l.b16 %v3720
        %v5309 = vunpack.c.l.b16 %v3721
        %v5310 = vunpack.c.l.b16 %v3722
        %v5311 = vunpack.c.l.b16 %v3723
        %v5312 = vunpack.c.l.b16 %v3724
        %v5313 = vunpack.c.l.b16 %v3725
        %v5314 = vunpack.c.l.b16 %v3726
        %v5315 = vunpack.c.l.b16 %v3727
        %v5316 = vunpack.c.l.b16 %v3728
        %v5317 = vunpack.c.l.b16 %v3729
        %v5318 = vunpack.c.l.b16 %v3730
        %v5319 = vunpack.c.l.b16 %v3731
        %v5320 = vunpack.c.l.b16 %v3732
        %v5321 = vunpack.c.l.b16 %v3733
        %v5322 = vunpack.c.l.b16 %v3734
        %v5323 = vunpack.c.l.b16 %v3735
        %v5324 = vunpack.c.l.b16 %v3736
        %v5325 = vunpack.c.l.b16 %v3737
        %v5326 = vunpack.c.l.b16 %v3738
        %v5327 = vunpack.c.l.b16 %v3739
        %v5328 = vunpack.c.l.b16 %v3740
        %v5329 = vunpack.c.l.b16 %v3741
        %v5330 = vunpack.c.l.b16 %v3742
        %v5331 = vunpack.c.l.b16 %v3743
        %v5332 = vunpack.c.l.b16 %v3744
        %v5333 = vunpack.c.l.b16 %v3745
        %v5334 = vunpack.c.l.b16 %v3746
        %v5335 = vpack.c.b16 %v5192, %v5191
        %v5336 = vpack.c.b16 %v5194, %v5193
        %v5337 = vpack.c.b16 %v5196, %v5195
        %v5338 = vpack.c.b16 %v5198, %v5197
        %v5339 = vpack.c.b16 %v5200, %v5199
        %v5340 = vpack.c.b16 %v5202, %v5201
        %v5341 = vpack.c.b16 %v5204, %v5203
        %v5342 = vpack.c.b16 %v5206, %v5205
        %v5343 = vpack.c.b16 %v5208, %v5207
        %v5344 = vpack.c.b16 %v5210, %v5209
        %v5345 = vpack.c.b16 %v5212, %v5211
        %v5346 = vpack.c.b16 %v5214, %v5213
        %v5347 = vpack.c.b16 %v5216, %v5215
        %v5348 = vpack.c.b16 %v5218, %v5217
        %v5349 = vpack.c.b16 %v5220, %v5219
        %v5350 = vpack.c.b16 %v5222, %v5221
        %v5351 = vpack.c.b16 %v5224, %v5223
        %v5352 = vpack.c.b16 %v5226, %v5225
        %v5353 = vpack.c.b16 %v5228, %v5227
        %v5354 = vpack.c.b16 %v5230, %v5229
        %v5355 = vpack.c.b16 %v5232, %v5231
        %v5356 = vpack.c.b16 %v5234, %v5233
        %v5357 = vpack.c.b16 %v5236, %v5235
        %v5358 = vpack.c.b16 %v5238, %v5237
        %v5359 = vpack.c.b16 %v5240, %v5239
        %v5360 = vpack.c.b16 %v5242, %v5241
        %v5361 = vpack.c.b16 %v5244, %v5243
        %v5362 = vpack.c.b16 %v5246, %v5245
        %v5363 = vpack.c.b16 %v5248, %v5247
        %v5364 = vpack.c.b16 %v5250, %v5249
        %v5365 = vpack.c.b16 %v5252, %v5251
        %v5366 = vpack.c.b16 %v5254, %v5253
        %v5367 = vpack.c.b16 %v5256, %v5255
        %v5368 = vpack.c.b16 %v5258, %v5257
        %v5369 = vpack.c.b16 %v5260, %v5259
        %v5370 = vpack.c.b16 %v5262, %v5261
        %v5371 = vpack.c.b16 %v5264, %v5263
        %v5372 = vpack.c.b16 %v5266, %v5265
        %v5373 = vpack.c.b16 %v5268, %v5267
        %v5374 = vpack.c.b16 %v5270, %v5269
        %v5375 = vpack.c.b16 %v5272, %v5271
        %v5376 = vpack.c.b16 %v5274, %v5273
        %v5377 = vpack.c.b16 %v5276, %v5275
        %v5378 = vpack.c.b16 %v5278, %v5277
        %v5379 = vpack.c.b16 %v5280, %v5279
        %v5380 = vpack.c.b16 %v5282, %v5281
        %v5381 = vpack.c.b16 %v5284, %v5283
        %v5382 = vpack.c.b16 %v5286, %v5285
        %v5383 = vpack.c.b16 %v5288, %v5287
        %v5384 = vpack.c.b16 %v5290, %v5289
        %v5385 = vpack.c.b16 %v5292, %v5291
        %v5386 = vpack.c.b16 %v5294, %v5293
        %v5387 = vpack.c.b16 %v5296, %v5295
        %v5388 = vpack.c.b16 %v5298, %v5297
        %v5389 = vpack.c.b16 %v5300, %v5299
        %v5390 = vpack.c.b16 %v5302, %v5301
        %v5391 = vpack.c.b16 %v5304, %v5303
        %v5392 = vpack.c.b16 %v5306, %v5305
        %v5393 = vpack.c.b16 %v5308, %v5307
        %v5394 = vpack.c.b16 %v5310, %v5309
        %v5395 = vpack.c.b16 %v5312, %v5311
        %v5396 = vpack.c.b16 %v5314, %v5313
        %v5397 = vpack.c.b16 %v5316, %v5315
        %v5398 = vpack.c.b16 %v5318, %v5317
        %v5399 = vpack.c.b16 %v5320, %v5319
        %v5400 = vpack.c.b16 %v5322, %v5321
        %v5401 = vpack.c.b16 %v5324, %v5323
        %v5402 = vpack.c.b16 %v5326, %v5325
        %v5403 = vpack.c.b16 %v5328, %v5327
        %v5404 = vpack.c.b16 %v5330, %v5329
        %v5405 = vpack.c.b16 %v5332, %v5331
        %v5406 = vpack.c.b16 %v5334, %v5333
        %5479 = vmatpush.bf16.msra.mxu0 %v5342
        %5480 = vmatpush.bf16.msra.mxu0 %v5341
        %5481 = vmatpush.bf16.msra.mxu0 %v5340
        %5482 = vmatpush.bf16.msra.mxu0 %v5339
        %5483 = vmatpush.bf16.msra.mxu0 %v5338
        %5484 = vmatpush.bf16.msra.mxu0 %v5337
        %5485 = vmatpush.bf16.msra.mxu0 %v5336
        %5486 = vmatpush.bf16.msra.mxu0 %v5335
        %5487 = vmatmul.bf16.gmra.mxu0 %v3762
        %v5488 = vpop.f32.mrf.mxu0
        %v5489 = vadd.f32 %v3749, %v5488
        %v5490 = vpop.f32.mrf.mxu0
        %v5491 = vadd.f32 %v3749, %v5490
        %5492 = vmatmul.bf16.gmra.mxu0 %v3902
        %v5493 = vpop.f32.mrf.mxu0
        %v5494 = vadd.f32 %v3749, %v5493
        %v5495 = vpop.f32.mrf.mxu0
        %v5496 = vadd.f32 %v3749, %v5495
        %5497 = vmatmul.bf16.gmra.mxu0 %v3962
        %v5498 = vpop.f32.mrf.mxu0
        %v5499 = vadd.f32 %v3749, %v5498
        %v5500 = vpop.f32.mrf.mxu0
        %v5501 = vadd.f32 %v3749, %v5500
        %5502 = vmatmul.bf16.gmra.mxu0 %v4020
        %v5503 = vpop.f32.mrf.mxu0
        %v5504 = vadd.f32 %v3749, %v5503
        %v5505 = vpop.f32.mrf.mxu0
        %v5506 = vadd.f32 %v3749, %v5505
        %5507 = vmatmul.bf16.gmra.mxu0 %v4078
        %v5508 = vpop.f32.mrf.mxu0
        %v5509 = vadd.f32 %v3749, %v5508
        %v5510 = vpop.f32.mrf.mxu0
        %v5511 = vadd.f32 %v3749, %v5510
        %5512 = vmatmul.bf16.gmra.mxu0 %v4136
        %v5513 = vpop.f32.mrf.mxu0
        %v5514 = vadd.f32 %v3749, %v5513
        %v5515 = vpop.f32.mrf.mxu0
        %v5516 = vadd.f32 %v3749, %v5515
        %5517 = vmatmul.bf16.gmra.mxu0 %v4194
        %v5518 = vpop.f32.mrf.mxu0
        %v5519 = vadd.f32 %v3749, %v5518
        %v5520 = vpop.f32.mrf.mxu0
        %v5521 = vadd.f32 %v3749, %v5520
        %5522 = vmatmul.bf16.gmra.mxu0 %v4252
        %v5523 = vpop.f32.mrf.mxu0
        %v5524 = vadd.f32 %v3749, %v5523
        %v5525 = vpop.f32.mrf.mxu0
        %v5526 = vadd.f32 %v3749, %v5525
        %5527 = vmatmul.bf16.gmra.mxu0 %v4310
        %v5528 = vpop.f32.mrf.mxu0
        %v5529 = vadd.f32 %v3749, %v5528
        %v5530 = vpop.f32.mrf.mxu0
        %v5531 = vadd.f32 %v3749, %v5530
        %5532 = vmatmul.bf16.gmra.mxu0 %v4368
        %v5533 = vpop.f32.mrf.mxu0
        %v5534 = vadd.f32 %v3749, %v5533
        %v5535 = vpop.f32.mrf.mxu0
        %v5536 = vadd.f32 %v3749, %v5535
        %5537 = vmatmul.bf16.gmra.mxu0 %v4426
        %v5538 = vpop.f32.mrf.mxu0
        %v5539 = vadd.f32 %v3749, %v5538
        %v5540 = vpop.f32.mrf.mxu0
        %v5541 = vadd.f32 %v3749, %v5540
        %5542 = vmatmul.bf16.gmra.mxu0 %v4484
        %v5543 = vpop.f32.mrf.mxu0
        %v5544 = vadd.f32 %v3749, %v5543
        %v5545 = vpop.f32.mrf.mxu0
        %v5546 = vadd.f32 %v3749, %v5545
        %5547 = vmatmul.bf16.gmra.mxu0 %v4542
        %v5548 = vpop.f32.mrf.mxu0
        %v5549 = vadd.f32 %v3749, %v5548
        %v5550 = vpop.f32.mrf.mxu0
        %v5551 = vadd.f32 %v3749, %v5550
        %5552 = vmatmul.bf16.gmra.mxu0 %v4600
        %v5553 = vpop.f32.mrf.mxu0
        %v5554 = vadd.f32 %v3749, %v5553
        %v5555 = vpop.f32.mrf.mxu0
        %v5556 = vadd.f32 %v3749, %v5555
        %5557 = vmatmul.bf16.gmra.mxu0 %v4658
        %v5558 = vpop.f32.mrf.mxu0
        %v5559 = vadd.f32 %v3749, %v5558
        %v5560 = vpop.f32.mrf.mxu0
        %v5561 = vadd.f32 %v3749, %v5560
        %5562 = vmatmul.bf16.gmra.mxu0 %v4716
        %v5563 = vpop.f32.mrf.mxu0
        %v5564 = vadd.f32 %v3749, %v5563
        %v5565 = vpop.f32.mrf.mxu0
        %v5566 = vadd.f32 %v3749, %v5565
        %5567 = vmatmul.bf16.gmra.mxu0 %v4774
        %v5568 = vpop.f32.mrf.mxu0
        %v5569 = vadd.f32 %v3749, %v5568
        %v5570 = vpop.f32.mrf.mxu0
        %v5571 = vadd.f32 %v3749, %v5570
        %5572 = vmatmul.bf16.gmra.mxu0 %v4841
        %v5573 = vpop.f32.mrf.mxu0
        %v5574 = vadd.f32 %v3749, %v5573
        %v5575 = vpop.f32.mrf.mxu0
        %v5576 = vadd.f32 %v3749, %v5575
        %5577 = vdwg.mxu0
        %5578 = vmatpush.bf16.msra.mxu0 %v5350
        %5579 = vmatpush.bf16.msra.mxu0 %v5349
        %5580 = vmatpush.bf16.msra.mxu0 %v5348
        %5581 = vmatpush.bf16.msra.mxu0 %v5347
        %5582 = vmatpush.bf16.msra.mxu0 %v5346
        %5583 = vmatpush.bf16.msra.mxu0 %v5345
        %5584 = vmatpush.bf16.msra.mxu0 %v5344
        %5585 = vmatpush.bf16.msra.mxu0 %v5343
        %5586 = vmatmul.bf16.gmra.mxu0 %v3779
        %v5587 = vpop.f32.mrf.mxu0
        %v5588 = vadd.f32 %v5489, %v5587
        %v5589 = vpop.f32.mrf.mxu0
        %v5590 = vadd.f32 %v5491, %v5589
        %5591 = vmatmul.bf16.gmra.mxu0 %v3911
        %v5592 = vpop.f32.mrf.mxu0
        %v5593 = vadd.f32 %v5494, %v5592
        %v5594 = vpop.f32.mrf.mxu0
        %v5595 = vadd.f32 %v5496, %v5594
        %5596 = vmatmul.bf16.gmra.mxu0 %v3971
        %v5597 = vpop.f32.mrf.mxu0
        %v5598 = vadd.f32 %v5499, %v5597
        %v5599 = vpop.f32.mrf.mxu0
        %v5600 = vadd.f32 %v5501, %v5599
        %5601 = vmatmul.bf16.gmra.mxu0 %v4029
        %v5602 = vpop.f32.mrf.mxu0
        %v5603 = vadd.f32 %v5504, %v5602
        %v5604 = vpop.f32.mrf.mxu0
        %v5605 = vadd.f32 %v5506, %v5604
        %5606 = vmatmul.bf16.gmra.mxu0 %v4087
        %v5607 = vpop.f32.mrf.mxu0
        %v5608 = vadd.f32 %v5509, %v5607
        %v5609 = vpop.f32.mrf.mxu0
        %v5610 = vadd.f32 %v5511, %v5609
        %5611 = vmatmul.bf16.gmra.mxu0 %v4145
        %v5612 = vpop.f32.mrf.mxu0
        %v5613 = vadd.f32 %v5514, %v5612
        %v5614 = vpop.f32.mrf.mxu0
        %v5615 = vadd.f32 %v5516, %v5614
        %5616 = vmatmul.bf16.gmra.mxu0 %v4203
        %v5617 = vpop.f32.mrf.mxu0
        %v5618 = vadd.f32 %v5519, %v5617
        %v5619 = vpop.f32.mrf.mxu0
        %v5620 = vadd.f32 %v5521, %v5619
        %5621 = vmatmul.bf16.gmra.mxu0 %v4261
        %v5622 = vpop.f32.mrf.mxu0
        %v5623 = vadd.f32 %v5524, %v5622
        %v5624 = vpop.f32.mrf.mxu0
        %v5625 = vadd.f32 %v5526, %v5624
        %5626 = vmatmul.bf16.gmra.mxu0 %v4319
        %v5627 = vpop.f32.mrf.mxu0
        %v5628 = vadd.f32 %v5529, %v5627
        %v5629 = vpop.f32.mrf.mxu0
        %v5630 = vadd.f32 %v5531, %v5629
        %5631 = vmatmul.bf16.gmra.mxu0 %v4377
        %v5632 = vpop.f32.mrf.mxu0
        %v5633 = vadd.f32 %v5534, %v5632
        %v5634 = vpop.f32.mrf.mxu0
        %v5635 = vadd.f32 %v5536, %v5634
        %5636 = vmatmul.bf16.gmra.mxu0 %v4435
        %v5637 = vpop.f32.mrf.mxu0
        %v5638 = vadd.f32 %v5539, %v5637
        %v5639 = vpop.f32.mrf.mxu0
        %v5640 = vadd.f32 %v5541, %v5639
        %5641 = vmatmul.bf16.gmra.mxu0 %v4493
        %v5642 = vpop.f32.mrf.mxu0
        %v5643 = vadd.f32 %v5544, %v5642
        %v5644 = vpop.f32.mrf.mxu0
        %v5645 = vadd.f32 %v5546, %v5644
        %5646 = vmatmul.bf16.gmra.mxu0 %v4551
        %v5647 = vpop.f32.mrf.mxu0
        %v5648 = vadd.f32 %v5549, %v5647
        %v5649 = vpop.f32.mrf.mxu0
        %v5650 = vadd.f32 %v5551, %v5649
        %5651 = vmatmul.bf16.gmra.mxu0 %v4609
        %v5652 = vpop.f32.mrf.mxu0
        %v5653 = vadd.f32 %v5554, %v5652
        %v5654 = vpop.f32.mrf.mxu0
        %v5655 = vadd.f32 %v5556, %v5654
        %5656 = vmatmul.bf16.gmra.mxu0 %v4667
        %v5657 = vpop.f32.mrf.mxu0
        %v5658 = vadd.f32 %v5559, %v5657
        %v5659 = vpop.f32.mrf.mxu0
        %v5660 = vadd.f32 %v5561, %v5659
        %5661 = vmatmul.bf16.gmra.mxu0 %v4725
        %v5662 = vpop.f32.mrf.mxu0
        %v5663 = vadd.f32 %v5564, %v5662
        %v5664 = vpop.f32.mrf.mxu0
        %v5665 = vadd.f32 %v5566, %v5664
        %5666 = vmatmul.bf16.gmra.mxu0 %v4783
        %v5667 = vpop.f32.mrf.mxu0
        %v5668 = vadd.f32 %v5569, %v5667
        %v5669 = vpop.f32.mrf.mxu0
        %v5670 = vadd.f32 %v5571, %v5669
        %5671 = vmatmul.bf16.gmra.mxu0 %v4850
        %v5672 = vpop.f32.mrf.mxu0
        %v5673 = vadd.f32 %v5574, %v5672
        %v5674 = vpop.f32.mrf.mxu0
        %v5675 = vadd.f32 %v5576, %v5674
        %5676 = vdwg.mxu0
        %5677 = vmatpush.bf16.msra.mxu0 %v5358
        %5678 = vmatpush.bf16.msra.mxu0 %v5357
        %5679 = vmatpush.bf16.msra.mxu0 %v5356
        %5680 = vmatpush.bf16.msra.mxu0 %v5355
        %5681 = vmatpush.bf16.msra.mxu0 %v5354
        %5682 = vmatpush.bf16.msra.mxu0 %v5353
        %5683 = vmatpush.bf16.msra.mxu0 %v5352
        %5684 = vmatpush.bf16.msra.mxu0 %v5351
        %5685 = vmatmul.bf16.gmra.mxu0 %v3796
        %v5686 = vpop.f32.mrf.mxu0
        %v5687 = vadd.f32 %v5588, %v5686
        %v5688 = vpop.f32.mrf.mxu0
        %v5689 = vadd.f32 %v5590, %v5688
        %5690 = vmatmul.bf16.gmra.mxu0 %v3912
        %v5691 = vpop.f32.mrf.mxu0
        %v5692 = vadd.f32 %v5593, %v5691
        %v5693 = vpop.f32.mrf.mxu0
        %v5694 = vadd.f32 %v5595, %v5693
        %5695 = vmatmul.bf16.gmra.mxu0 %v3921
        %v5696 = vpop.f32.mrf.mxu0
        %v5697 = vadd.f32 %v5598, %v5696
        %v5698 = vpop.f32.mrf.mxu0
        %v5699 = vadd.f32 %v5600, %v5698
        %5700 = vmatmul.bf16.gmra.mxu0 %v3980
        %v5701 = vpop.f32.mrf.mxu0
        %v5702 = vadd.f32 %v5603, %v5701
        %v5703 = vpop.f32.mrf.mxu0
        %v5704 = vadd.f32 %v5605, %v5703
        %5705 = vmatmul.bf16.gmra.mxu0 %v4038
        %v5706 = vpop.f32.mrf.mxu0
        %v5707 = vadd.f32 %v5608, %v5706
        %v5708 = vpop.f32.mrf.mxu0
        %v5709 = vadd.f32 %v5610, %v5708
        %5710 = vmatmul.bf16.gmra.mxu0 %v4096
        %v5711 = vpop.f32.mrf.mxu0
        %v5712 = vadd.f32 %v5613, %v5711
        %v5713 = vpop.f32.mrf.mxu0
        %v5714 = vadd.f32 %v5615, %v5713
        %5715 = vmatmul.bf16.gmra.mxu0 %v4154
        %v5716 = vpop.f32.mrf.mxu0
        %v5717 = vadd.f32 %v5618, %v5716
        %v5718 = vpop.f32.mrf.mxu0
        %v5719 = vadd.f32 %v5620, %v5718
        %5720 = vmatmul.bf16.gmra.mxu0 %v4212
        %v5721 = vpop.f32.mrf.mxu0
        %v5722 = vadd.f32 %v5623, %v5721
        %v5723 = vpop.f32.mrf.mxu0
        %v5724 = vadd.f32 %v5625, %v5723
        %5725 = vmatmul.bf16.gmra.mxu0 %v4270
        %v5726 = vpop.f32.mrf.mxu0
        %v5727 = vadd.f32 %v5628, %v5726
        %v5728 = vpop.f32.mrf.mxu0
        %v5729 = vadd.f32 %v5630, %v5728
        %5730 = vmatmul.bf16.gmra.mxu0 %v4328
        %v5731 = vpop.f32.mrf.mxu0
        %v5732 = vadd.f32 %v5633, %v5731
        %v5733 = vpop.f32.mrf.mxu0
        %v5734 = vadd.f32 %v5635, %v5733
        %5735 = vmatmul.bf16.gmra.mxu0 %v4386
        %v5736 = vpop.f32.mrf.mxu0
        %v5737 = vadd.f32 %v5638, %v5736
        %v5738 = vpop.f32.mrf.mxu0
        %v5739 = vadd.f32 %v5640, %v5738
        %5740 = vmatmul.bf16.gmra.mxu0 %v4444
        %v5741 = vpop.f32.mrf.mxu0
        %v5742 = vadd.f32 %v5643, %v5741
        %v5743 = vpop.f32.mrf.mxu0
        %v5744 = vadd.f32 %v5645, %v5743
        %5745 = vmatmul.bf16.gmra.mxu0 %v4502
        %v5746 = vpop.f32.mrf.mxu0
        %v5747 = vadd.f32 %v5648, %v5746
        %v5748 = vpop.f32.mrf.mxu0
        %v5749 = vadd.f32 %v5650, %v5748
        %5750 = vmatmul.bf16.gmra.mxu0 %v4560
        %v5751 = vpop.f32.mrf.mxu0
        %v5752 = vadd.f32 %v5653, %v5751
        %v5753 = vpop.f32.mrf.mxu0
        %v5754 = vadd.f32 %v5655, %v5753
        %5755 = vmatmul.bf16.gmra.mxu0 %v4618
        %v5756 = vpop.f32.mrf.mxu0
        %v5757 = vadd.f32 %v5658, %v5756
        %v5758 = vpop.f32.mrf.mxu0
        %v5759 = vadd.f32 %v5660, %v5758
        %5760 = vmatmul.bf16.gmra.mxu0 %v4676
        %v5761 = vpop.f32.mrf.mxu0
        %v5762 = vadd.f32 %v5663, %v5761
        %v5763 = vpop.f32.mrf.mxu0
        %v5764 = vadd.f32 %v5665, %v5763
        %5765 = vmatmul.bf16.gmra.mxu0 %v4792
        %v5766 = vpop.f32.mrf.mxu0
        %v5767 = vadd.f32 %v5668, %v5766
        %v5768 = vpop.f32.mrf.mxu0
        %v5769 = vadd.f32 %v5670, %v5768
        %5770 = vmatmul.bf16.gmra.mxu0 %v4859
        %v5771 = vpop.f32.mrf.mxu0
        %v5772 = vadd.f32 %v5673, %v5771
        %v5773 = vpop.f32.mrf.mxu0
        %v5774 = vadd.f32 %v5675, %v5773
        %5775 = vdwg.mxu0
        %5776 = vmatpush.bf16.msra.mxu0 %v5366
        %5777 = vmatpush.bf16.msra.mxu0 %v5365
        %5778 = vmatpush.bf16.msra.mxu0 %v5364
        %5779 = vmatpush.bf16.msra.mxu0 %v5363
        %5780 = vmatpush.bf16.msra.mxu0 %v5362
        %5781 = vmatpush.bf16.msra.mxu0 %v5361
        %5782 = vmatpush.bf16.msra.mxu0 %v5360
        %5783 = vmatpush.bf16.msra.mxu0 %v5359
        %5784 = vmatmul.bf16.gmra.mxu0 %v3813
        %v5785 = vpop.f32.mrf.mxu0
        %v5786 = vadd.f32 %v5687, %v5785
        %v5787 = vpop.f32.mrf.mxu0
        %v5788 = vadd.f32 %v5689, %v5787
        %5789 = vmatmul.bf16.gmra.mxu0 %v3921
        %v5790 = vpop.f32.mrf.mxu0
        %v5791 = vadd.f32 %v5692, %v5790
        %v5792 = vpop.f32.mrf.mxu0
        %v5793 = vadd.f32 %v5694, %v5792
        %5794 = vmatmul.bf16.gmra.mxu0 %v3980
        %v5795 = vpop.f32.mrf.mxu0
        %v5796 = vadd.f32 %v5697, %v5795
        %v5797 = vpop.f32.mrf.mxu0
        %v5798 = vadd.f32 %v5699, %v5797
        %5799 = vmatmul.bf16.gmra.mxu0 %v4038
        %v5800 = vpop.f32.mrf.mxu0
        %v5801 = vadd.f32 %v5702, %v5800
        %v5802 = vpop.f32.mrf.mxu0
        %v5803 = vadd.f32 %v5704, %v5802
        %5804 = vmatmul.bf16.gmra.mxu0 %v4096
        %v5805 = vpop.f32.mrf.mxu0
        %v5806 = vadd.f32 %v5707, %v5805
        %v5807 = vpop.f32.mrf.mxu0
        %v5808 = vadd.f32 %v5709, %v5807
        %5809 = vmatmul.bf16.gmra.mxu0 %v4154
        %v5810 = vpop.f32.mrf.mxu0
        %v5811 = vadd.f32 %v5712, %v5810
        %v5812 = vpop.f32.mrf.mxu0
        %v5813 = vadd.f32 %v5714, %v5812
        %5814 = vmatmul.bf16.gmra.mxu0 %v4212
        %v5815 = vpop.f32.mrf.mxu0
        %v5816 = vadd.f32 %v5717, %v5815
        %v5817 = vpop.f32.mrf.mxu0
        %v5818 = vadd.f32 %v5719, %v5817
        %5819 = vmatmul.bf16.gmra.mxu0 %v4270
        %v5820 = vpop.f32.mrf.mxu0
        %v5821 = vadd.f32 %v5722, %v5820
        %v5822 = vpop.f32.mrf.mxu0
        %v5823 = vadd.f32 %v5724, %v5822
        %5824 = vmatmul.bf16.gmra.mxu0 %v4328
        %v5825 = vpop.f32.mrf.mxu0
        %v5826 = vadd.f32 %v5727, %v5825
        %v5827 = vpop.f32.mrf.mxu0
        %v5828 = vadd.f32 %v5729, %v5827
        %5829 = vmatmul.bf16.gmra.mxu0 %v4386
        %v5830 = vpop.f32.mrf.mxu0
        %v5831 = vadd.f32 %v5732, %v5830
        %v5832 = vpop.f32.mrf.mxu0
        %v5833 = vadd.f32 %v5734, %v5832
        %5834 = vmatmul.bf16.gmra.mxu0 %v4444
        %v5835 = vpop.f32.mrf.mxu0
        %v5836 = vadd.f32 %v5737, %v5835
        %v5837 = vpop.f32.mrf.mxu0
        %v5838 = vadd.f32 %v5739, %v5837
        %5839 = vmatmul.bf16.gmra.mxu0 %v4502
        %v5840 = vpop.f32.mrf.mxu0
        %v5841 = vadd.f32 %v5742, %v5840
        %v5842 = vpop.f32.mrf.mxu0
        %v5843 = vadd.f32 %v5744, %v5842
        %5844 = vmatmul.bf16.gmra.mxu0 %v4560
        %v5845 = vpop.f32.mrf.mxu0
        %v5846 = vadd.f32 %v5747, %v5845
        %v5847 = vpop.f32.mrf.mxu0
        %v5848 = vadd.f32 %v5749, %v5847
        %5849 = vmatmul.bf16.gmra.mxu0 %v4618
        %v5850 = vpop.f32.mrf.mxu0
        %v5851 = vadd.f32 %v5752, %v5850
        %v5852 = vpop.f32.mrf.mxu0
        %v5853 = vadd.f32 %v5754, %v5852
        %5854 = vmatmul.bf16.gmra.mxu0 %v4676
        %v5855 = vpop.f32.mrf.mxu0
        %v5856 = vadd.f32 %v5757, %v5855
        %v5857 = vpop.f32.mrf.mxu0
        %v5858 = vadd.f32 %v5759, %v5857
        %5859 = vmatmul.bf16.gmra.mxu0 %v4734
        %v5860 = vpop.f32.mrf.mxu0
        %v5861 = vadd.f32 %v5762, %v5860
        %v5862 = vpop.f32.mrf.mxu0
        %v5863 = vadd.f32 %v5764, %v5862
        %5864 = vmatmul.bf16.gmra.mxu0 %v4801
        %v5865 = vpop.f32.mrf.mxu0
        %v5866 = vadd.f32 %v5767, %v5865
        %v5867 = vpop.f32.mrf.mxu0
        %v5868 = vadd.f32 %v5769, %v5867
        %5869 = vmatmul.bf16.gmra.mxu0 %v4868
        %v5870 = vpop.f32.mrf.mxu0
        %v5871 = vadd.f32 %v5772, %v5870
        %v5872 = vpop.f32.mrf.mxu0
        %v5873 = vadd.f32 %v5774, %v5872
        %5874 = vdwg.mxu0
        %5875 = vmatpush.bf16.msra.mxu0 %v5374
        %5876 = vmatpush.bf16.msra.mxu0 %v5373
        %5877 = vmatpush.bf16.msra.mxu0 %v5372
        %5878 = vmatpush.bf16.msra.mxu0 %v5371
        %5879 = vmatpush.bf16.msra.mxu0 %v5370
        %5880 = vmatpush.bf16.msra.mxu0 %v5369
        %5881 = vmatpush.bf16.msra.mxu0 %v5368
        %5882 = vmatpush.bf16.msra.mxu0 %v5367
        %5883 = vmatmul.bf16.gmra.mxu0 %v3830
        %v5884 = vpop.f32.mrf.mxu0
        %v5885 = vadd.f32 %v5786, %v5884
        %v5886 = vpop.f32.mrf.mxu0
        %v5887 = vadd.f32 %v5788, %v5886
        %5888 = vmatmul.bf16.gmra.mxu0 %v3930
        %v5889 = vpop.f32.mrf.mxu0
        %v5890 = vadd.f32 %v5791, %v5889
        %v5891 = vpop.f32.mrf.mxu0
        %v5892 = vadd.f32 %v5793, %v5891
        %5893 = vmatmul.bf16.gmra.mxu0 %v3989
        %v5894 = vpop.f32.mrf.mxu0
        %v5895 = vadd.f32 %v5796, %v5894
        %v5896 = vpop.f32.mrf.mxu0
        %v5897 = vadd.f32 %v5798, %v5896
        %5898 = vmatmul.bf16.gmra.mxu0 %v4047
        %v5899 = vpop.f32.mrf.mxu0
        %v5900 = vadd.f32 %v5801, %v5899
        %v5901 = vpop.f32.mrf.mxu0
        %v5902 = vadd.f32 %v5803, %v5901
        %5903 = vmatmul.bf16.gmra.mxu0 %v4105
        %v5904 = vpop.f32.mrf.mxu0
        %v5905 = vadd.f32 %v5806, %v5904
        %v5906 = vpop.f32.mrf.mxu0
        %v5907 = vadd.f32 %v5808, %v5906
        %5908 = vmatmul.bf16.gmra.mxu0 %v4163
        %v5909 = vpop.f32.mrf.mxu0
        %v5910 = vadd.f32 %v5811, %v5909
        %v5911 = vpop.f32.mrf.mxu0
        %v5912 = vadd.f32 %v5813, %v5911
        %5913 = vmatmul.bf16.gmra.mxu0 %v4221
        %v5914 = vpop.f32.mrf.mxu0
        %v5915 = vadd.f32 %v5816, %v5914
        %v5916 = vpop.f32.mrf.mxu0
        %v5917 = vadd.f32 %v5818, %v5916
        %5918 = vmatmul.bf16.gmra.mxu0 %v4279
        %v5919 = vpop.f32.mrf.mxu0
        %v5920 = vadd.f32 %v5821, %v5919
        %v5921 = vpop.f32.mrf.mxu0
        %v5922 = vadd.f32 %v5823, %v5921
        %5923 = vmatmul.bf16.gmra.mxu0 %v4337
        %v5924 = vpop.f32.mrf.mxu0
        %v5925 = vadd.f32 %v5826, %v5924
        %v5926 = vpop.f32.mrf.mxu0
        %v5927 = vadd.f32 %v5828, %v5926
        %5928 = vmatmul.bf16.gmra.mxu0 %v4395
        %v5929 = vpop.f32.mrf.mxu0
        %v5930 = vadd.f32 %v5831, %v5929
        %v5931 = vpop.f32.mrf.mxu0
        %v5932 = vadd.f32 %v5833, %v5931
        %5933 = vmatmul.bf16.gmra.mxu0 %v4453
        %v5934 = vpop.f32.mrf.mxu0
        %v5935 = vadd.f32 %v5836, %v5934
        %v5936 = vpop.f32.mrf.mxu0
        %v5937 = vadd.f32 %v5838, %v5936
        %5938 = vmatmul.bf16.gmra.mxu0 %v4511
        %v5939 = vpop.f32.mrf.mxu0
        %v5940 = vadd.f32 %v5841, %v5939
        %v5941 = vpop.f32.mrf.mxu0
        %v5942 = vadd.f32 %v5843, %v5941
        %5943 = vmatmul.bf16.gmra.mxu0 %v4569
        %v5944 = vpop.f32.mrf.mxu0
        %v5945 = vadd.f32 %v5846, %v5944
        %v5946 = vpop.f32.mrf.mxu0
        %v5947 = vadd.f32 %v5848, %v5946
        %5948 = vmatmul.bf16.gmra.mxu0 %v4627
        %v5949 = vpop.f32.mrf.mxu0
        %v5950 = vadd.f32 %v5851, %v5949
        %v5951 = vpop.f32.mrf.mxu0
        %v5952 = vadd.f32 %v5853, %v5951
        %5953 = vmatmul.bf16.gmra.mxu0 %v4685
        %v5954 = vpop.f32.mrf.mxu0
        %v5955 = vadd.f32 %v5856, %v5954
        %v5956 = vpop.f32.mrf.mxu0
        %v5957 = vadd.f32 %v5858, %v5956
        %5958 = vmatmul.bf16.gmra.mxu0 %v4743
        %v5959 = vpop.f32.mrf.mxu0
        %v5960 = vadd.f32 %v5861, %v5959
        %v5961 = vpop.f32.mrf.mxu0
        %v5962 = vadd.f32 %v5863, %v5961
        %5963 = vmatmul.bf16.gmra.mxu0 %v4810
        %v5964 = vpop.f32.mrf.mxu0
        %v5965 = vadd.f32 %v5866, %v5964
        %v5966 = vpop.f32.mrf.mxu0
        %v5967 = vadd.f32 %v5868, %v5966
        %5968 = vmatmul.bf16.gmra.mxu0 %v4877
        %v5969 = vpop.f32.mrf.mxu0
        %v5970 = vadd.f32 %v5871, %v5969
        %v5971 = vpop.f32.mrf.mxu0
        %v5972 = vadd.f32 %v5873, %v5971
        %5973 = vdwg.mxu0
        %5974 = vmatpush.bf16.msra.mxu0 %v5382
        %5975 = vmatpush.bf16.msra.mxu0 %v5381
        %5976 = vmatpush.bf16.msra.mxu0 %v5380
        %5977 = vmatpush.bf16.msra.mxu0 %v5379
        %5978 = vmatpush.bf16.msra.mxu0 %v5378
        %5979 = vmatpush.bf16.msra.mxu0 %v5377
        %5980 = vmatpush.bf16.msra.mxu0 %v5376
        %5981 = vmatpush.bf16.msra.mxu0 %v5375
        %5982 = vmatmul.bf16.gmra.mxu0 %v3847
        %v5983 = vpop.f32.mrf.mxu0
        %v5984 = vadd.f32 %v5885, %v5983
        %v5985 = vpop.f32.mrf.mxu0
        %v5986 = vadd.f32 %v5887, %v5985
        %5987 = vmatmul.bf16.gmra.mxu0 %v3931
        %v5988 = vpop.f32.mrf.mxu0
        %v5989 = vadd.f32 %v5890, %v5988
        %v5990 = vpop.f32.mrf.mxu0
        %v5991 = vadd.f32 %v5892, %v5990
        %5992 = vmatmul.bf16.gmra.mxu0 %v3940
        %v5993 = vpop.f32.mrf.mxu0
        %v5994 = vadd.f32 %v5895, %v5993
        %v5995 = vpop.f32.mrf.mxu0
        %v5996 = vadd.f32 %v5897, %v5995
        %5997 = vmatmul.bf16.gmra.mxu0 %v3998
        %v5998 = vpop.f32.mrf.mxu0
        %v5999 = vadd.f32 %v5900, %v5998
        %v6000 = vpop.f32.mrf.mxu0
        %v6001 = vadd.f32 %v5902, %v6000
        %6002 = vmatmul.bf16.gmra.mxu0 %v4056
        %v6003 = vpop.f32.mrf.mxu0
        %v6004 = vadd.f32 %v5905, %v6003
        %v6005 = vpop.f32.mrf.mxu0
        %v6006 = vadd.f32 %v5907, %v6005
        %6007 = vmatmul.bf16.gmra.mxu0 %v4114
        %v6008 = vpop.f32.mrf.mxu0
        %v6009 = vadd.f32 %v5910, %v6008
        %v6010 = vpop.f32.mrf.mxu0
        %v6011 = vadd.f32 %v5912, %v6010
        %6012 = vmatmul.bf16.gmra.mxu0 %v4172
        %v6013 = vpop.f32.mrf.mxu0
        %v6014 = vadd.f32 %v5915, %v6013
        %v6015 = vpop.f32.mrf.mxu0
        %v6016 = vadd.f32 %v5917, %v6015
        %6017 = vmatmul.bf16.gmra.mxu0 %v4230
        %v6018 = vpop.f32.mrf.mxu0
        %v6019 = vadd.f32 %v5920, %v6018
        %v6020 = vpop.f32.mrf.mxu0
        %v6021 = vadd.f32 %v5922, %v6020
        %6022 = vmatmul.bf16.gmra.mxu0 %v4288
        %v6023 = vpop.f32.mrf.mxu0
        %v6024 = vadd.f32 %v5925, %v6023
        %v6025 = vpop.f32.mrf.mxu0
        %v6026 = vadd.f32 %v5927, %v6025
        %6027 = vmatmul.bf16.gmra.mxu0 %v4346
        %v6028 = vpop.f32.mrf.mxu0
        %v6029 = vadd.f32 %v5930, %v6028
        %v6030 = vpop.f32.mrf.mxu0
        %v6031 = vadd.f32 %v5932, %v6030
        %6032 = vmatmul.bf16.gmra.mxu0 %v4404
        %v6033 = vpop.f32.mrf.mxu0
        %v6034 = vadd.f32 %v5935, %v6033
        %v6035 = vpop.f32.mrf.mxu0
        %v6036 = vadd.f32 %v5937, %v6035
        %6037 = vmatmul.bf16.gmra.mxu0 %v4462
        %v6038 = vpop.f32.mrf.mxu0
        %v6039 = vadd.f32 %v5940, %v6038
        %v6040 = vpop.f32.mrf.mxu0
        %v6041 = vadd.f32 %v5942, %v6040
        %6042 = vmatmul.bf16.gmra.mxu0 %v4520
        %v6043 = vpop.f32.mrf.mxu0
        %v6044 = vadd.f32 %v5945, %v6043
        %v6045 = vpop.f32.mrf.mxu0
        %v6046 = vadd.f32 %v5947, %v6045
        %6047 = vmatmul.bf16.gmra.mxu0 %v4578
        %v6048 = vpop.f32.mrf.mxu0
        %v6049 = vadd.f32 %v5950, %v6048
        %v6050 = vpop.f32.mrf.mxu0
        %v6051 = vadd.f32 %v5952, %v6050
        %6052 = vmatmul.bf16.gmra.mxu0 %v4636
        %v6053 = vpop.f32.mrf.mxu0
        %v6054 = vadd.f32 %v5955, %v6053
        %v6055 = vpop.f32.mrf.mxu0
        %v6056 = vadd.f32 %v5957, %v6055
        %6057 = vmatmul.bf16.gmra.mxu0 %v4694
        %v6058 = vpop.f32.mrf.mxu0
        %v6059 = vadd.f32 %v5960, %v6058
        %v6060 = vpop.f32.mrf.mxu0
        %v6061 = vadd.f32 %v5962, %v6060
        %6062 = vmatmul.bf16.gmra.mxu0 %v4752
        %v6063 = vpop.f32.mrf.mxu0
        %v6064 = vadd.f32 %v5965, %v6063
        %v6065 = vpop.f32.mrf.mxu0
        %v6066 = vadd.f32 %v5967, %v6065
        %6067 = vmatmul.bf16.gmra.mxu0 %v4886
        %v6068 = vpop.f32.mrf.mxu0
        %v6069 = vadd.f32 %v5970, %v6068
        %v6070 = vpop.f32.mrf.mxu0
        %v6071 = vadd.f32 %v5972, %v6070
        %6072 = vdwg.mxu0
        %6073 = vmatpush.bf16.msra.mxu0 %v5390
        %6074 = vmatpush.bf16.msra.mxu0 %v5389
        %6075 = vmatpush.bf16.msra.mxu0 %v5388
        %6076 = vmatpush.bf16.msra.mxu0 %v5387
        %6077 = vmatpush.bf16.msra.mxu0 %v5386
        %6078 = vmatpush.bf16.msra.mxu0 %v5385
        %6079 = vmatpush.bf16.msra.mxu0 %v5384
        %6080 = vmatpush.bf16.msra.mxu0 %v5383
        %6081 = vmatmul.bf16.gmra.mxu0 %v3864
        %v6082 = vpop.f32.mrf.mxu0
        %v6083 = vadd.f32 %v5984, %v6082
        %v6084 = vpop.f32.mrf.mxu0
        %v6085 = vadd.f32 %v5986, %v6084
        %6086 = vmatmul.bf16.gmra.mxu0 %v3940
        %v6087 = vpop.f32.mrf.mxu0
        %v6088 = vadd.f32 %v5989, %v6087
        %v6089 = vpop.f32.mrf.mxu0
        %v6090 = vadd.f32 %v5991, %v6089
        %6091 = vmatmul.bf16.gmra.mxu0 %v3998
        %v6092 = vpop.f32.mrf.mxu0
        %v6093 = vadd.f32 %v5994, %v6092
        %v6094 = vpop.f32.mrf.mxu0
        %v6095 = vadd.f32 %v5996, %v6094
        %6096 = vmatmul.bf16.gmra.mxu0 %v4056
        %v6097 = vpop.f32.mrf.mxu0
        %v6098 = vadd.f32 %v5999, %v6097
        %v6099 = vpop.f32.mrf.mxu0
        %v6100 = vadd.f32 %v6001, %v6099
        %6101 = vmatmul.bf16.gmra.mxu0 %v4114
        %v6102 = vpop.f32.mrf.mxu0
        %v6103 = vadd.f32 %v6004, %v6102
        %v6104 = vpop.f32.mrf.mxu0
        %v6105 = vadd.f32 %v6006, %v6104
        %6106 = vmatmul.bf16.gmra.mxu0 %v4172
        %v6107 = vpop.f32.mrf.mxu0
        %v6108 = vadd.f32 %v6009, %v6107
        %v6109 = vpop.f32.mrf.mxu0
        %v6110 = vadd.f32 %v6011, %v6109
        %6111 = vmatmul.bf16.gmra.mxu0 %v4230
        %v6112 = vpop.f32.mrf.mxu0
        %v6113 = vadd.f32 %v6014, %v6112
        %v6114 = vpop.f32.mrf.mxu0
        %v6115 = vadd.f32 %v6016, %v6114
        %6116 = vmatmul.bf16.gmra.mxu0 %v4288
        %v6117 = vpop.f32.mrf.mxu0
        %v6118 = vadd.f32 %v6019, %v6117
        %v6119 = vpop.f32.mrf.mxu0
        %v6120 = vadd.f32 %v6021, %v6119
        %6121 = vmatmul.bf16.gmra.mxu0 %v4346
        %v6122 = vpop.f32.mrf.mxu0
        %v6123 = vadd.f32 %v6024, %v6122
        %v6124 = vpop.f32.mrf.mxu0
        %v6125 = vadd.f32 %v6026, %v6124
        %6126 = vmatmul.bf16.gmra.mxu0 %v4404
        %v6127 = vpop.f32.mrf.mxu0
        %v6128 = vadd.f32 %v6029, %v6127
        %v6129 = vpop.f32.mrf.mxu0
        %v6130 = vadd.f32 %v6031, %v6129
        %6131 = vmatmul.bf16.gmra.mxu0 %v4462
        %v6132 = vpop.f32.mrf.mxu0
        %v6133 = vadd.f32 %v6034, %v6132
        %v6134 = vpop.f32.mrf.mxu0
        %v6135 = vadd.f32 %v6036, %v6134
        %6136 = vmatmul.bf16.gmra.mxu0 %v4520
        %v6137 = vpop.f32.mrf.mxu0
        %v6138 = vadd.f32 %v6039, %v6137
        %v6139 = vpop.f32.mrf.mxu0
        %v6140 = vadd.f32 %v6041, %v6139
        %6141 = vmatmul.bf16.gmra.mxu0 %v4578
        %v6142 = vpop.f32.mrf.mxu0
        %v6143 = vadd.f32 %v6044, %v6142
        %v6144 = vpop.f32.mrf.mxu0
        %v6145 = vadd.f32 %v6046, %v6144
        %6146 = vmatmul.bf16.gmra.mxu0 %v4636
        %v6147 = vpop.f32.mrf.mxu0
        %v6148 = vadd.f32 %v6049, %v6147
        %v6149 = vpop.f32.mrf.mxu0
        %v6150 = vadd.f32 %v6051, %v6149
        %6151 = vmatmul.bf16.gmra.mxu0 %v4694
        %v6152 = vpop.f32.mrf.mxu0
        %v6153 = vadd.f32 %v6054, %v6152
        %v6154 = vpop.f32.mrf.mxu0
        %v6155 = vadd.f32 %v6056, %v6154
        %6156 = vmatmul.bf16.gmra.mxu0 %v4752
        %v6157 = vpop.f32.mrf.mxu0
        %v6158 = vadd.f32 %v6059, %v6157
        %v6159 = vpop.f32.mrf.mxu0
        %v6160 = vadd.f32 %v6061, %v6159
        %6161 = vmatmul.bf16.gmra.mxu0 %v4819
        %v6162 = vpop.f32.mrf.mxu0
        %v6163 = vadd.f32 %v6064, %v6162
        %v6164 = vpop.f32.mrf.mxu0
        %v6165 = vadd.f32 %v6066, %v6164
        %6166 = vmatmul.bf16.gmra.mxu0 %v4895
        %v6167 = vpop.f32.mrf.mxu0
        %v6168 = vadd.f32 %v6069, %v6167
        %v6169 = vpop.f32.mrf.mxu0
        %v6170 = vadd.f32 %v6071, %v6169
        %6171 = vdwg.mxu0
        %6172 = vmatpush.bf16.msra.mxu0 %v5398
        %6173 = vmatpush.bf16.msra.mxu0 %v5397
        %6174 = vmatpush.bf16.msra.mxu0 %v5396
        %6175 = vmatpush.bf16.msra.mxu0 %v5395
        %6176 = vmatpush.bf16.msra.mxu0 %v5394
        %6177 = vmatpush.bf16.msra.mxu0 %v5393
        %6178 = vmatpush.bf16.msra.mxu0 %v5392
        %6179 = vmatpush.bf16.msra.mxu0 %v5391
        %6180 = vmatmul.bf16.gmra.mxu0 %v3881
        %v6181 = vpop.f32.mrf.mxu0
        %v6182 = vadd.f32 %v6083, %v6181
        %v6183 = vpop.f32.mrf.mxu0
        %v6184 = vadd.f32 %v6085, %v6183
        %6185 = vmatmul.bf16.gmra.mxu0 %v3949
        %v6186 = vpop.f32.mrf.mxu0
        %v6187 = vadd.f32 %v6088, %v6186
        %v6188 = vpop.f32.mrf.mxu0
        %v6189 = vadd.f32 %v6090, %v6188
        %6190 = vmatmul.bf16.gmra.mxu0 %v4007
        %v6191 = vpop.f32.mrf.mxu0
        %v6192 = vadd.f32 %v6093, %v6191
        %v6193 = vpop.f32.mrf.mxu0
        %v6194 = vadd.f32 %v6095, %v6193
        %6195 = vmatmul.bf16.gmra.mxu0 %v4065
        %v6196 = vpop.f32.mrf.mxu0
        %v6197 = vadd.f32 %v6098, %v6196
        %v6198 = vpop.f32.mrf.mxu0
        %v6199 = vadd.f32 %v6100, %v6198
        %6200 = vmatmul.bf16.gmra.mxu0 %v4123
        %v6201 = vpop.f32.mrf.mxu0
        %v6202 = vadd.f32 %v6103, %v6201
        %v6203 = vpop.f32.mrf.mxu0
        %v6204 = vadd.f32 %v6105, %v6203
        %6205 = vmatmul.bf16.gmra.mxu0 %v4181
        %v6206 = vpop.f32.mrf.mxu0
        %v6207 = vadd.f32 %v6108, %v6206
        %v6208 = vpop.f32.mrf.mxu0
        %v6209 = vadd.f32 %v6110, %v6208
        %6210 = vmatmul.bf16.gmra.mxu0 %v4239
        %v6211 = vpop.f32.mrf.mxu0
        %v6212 = vadd.f32 %v6113, %v6211
        %v6213 = vpop.f32.mrf.mxu0
        %v6214 = vadd.f32 %v6115, %v6213
        %6215 = vmatmul.bf16.gmra.mxu0 %v4297
        %v6216 = vpop.f32.mrf.mxu0
        %v6217 = vadd.f32 %v6118, %v6216
        %v6218 = vpop.f32.mrf.mxu0
        %v6219 = vadd.f32 %v6120, %v6218
        %6220 = vmatmul.bf16.gmra.mxu0 %v4355
        %v6221 = vpop.f32.mrf.mxu0
        %v6222 = vadd.f32 %v6123, %v6221
        %v6223 = vpop.f32.mrf.mxu0
        %v6224 = vadd.f32 %v6125, %v6223
        %6225 = vmatmul.bf16.gmra.mxu0 %v4413
        %v6226 = vpop.f32.mrf.mxu0
        %v6227 = vadd.f32 %v6128, %v6226
        %v6228 = vpop.f32.mrf.mxu0
        %v6229 = vadd.f32 %v6130, %v6228
        %6230 = vmatmul.bf16.gmra.mxu0 %v4471
        %v6231 = vpop.f32.mrf.mxu0
        %v6232 = vadd.f32 %v6133, %v6231
        %v6233 = vpop.f32.mrf.mxu0
        %v6234 = vadd.f32 %v6135, %v6233
        %6235 = vmatmul.bf16.gmra.mxu0 %v4529
        %v6236 = vpop.f32.mrf.mxu0
        %v6237 = vadd.f32 %v6138, %v6236
        %v6238 = vpop.f32.mrf.mxu0
        %v6239 = vadd.f32 %v6140, %v6238
        %6240 = vmatmul.bf16.gmra.mxu0 %v4587
        %v6241 = vpop.f32.mrf.mxu0
        %v6242 = vadd.f32 %v6143, %v6241
        %v6243 = vpop.f32.mrf.mxu0
        %v6244 = vadd.f32 %v6145, %v6243
        %6245 = vmatmul.bf16.gmra.mxu0 %v4645
        %v6246 = vpop.f32.mrf.mxu0
        %v6247 = vadd.f32 %v6148, %v6246
        %v6248 = vpop.f32.mrf.mxu0
        %v6249 = vadd.f32 %v6150, %v6248
        %6250 = vmatmul.bf16.gmra.mxu0 %v4703
        %v6251 = vpop.f32.mrf.mxu0
        %v6252 = vadd.f32 %v6153, %v6251
        %v6253 = vpop.f32.mrf.mxu0
        %v6254 = vadd.f32 %v6155, %v6253
        %6255 = vmatmul.bf16.gmra.mxu0 %v4761
        %v6256 = vpop.f32.mrf.mxu0
        %v6257 = vadd.f32 %v6158, %v6256
        %v6258 = vpop.f32.mrf.mxu0
        %v6259 = vadd.f32 %v6160, %v6258
        %6260 = vmatmul.bf16.gmra.mxu0 %v4828
        %v6261 = vpop.f32.mrf.mxu0
        %v6262 = vadd.f32 %v6163, %v6261
        %v6263 = vpop.f32.mrf.mxu0
        %v6264 = vadd.f32 %v6165, %v6263
        %6265 = vmatmul.bf16.gmra.mxu0 %v4904
        %v6266 = vpop.f32.mrf.mxu0
        %v6267 = vadd.f32 %v6168, %v6266
        %v6268 = vpop.f32.mrf.mxu0
        %v6269 = vadd.f32 %v6170, %v6268
        %6270 = vdwg.mxu0
        %6271 = vmatpush.bf16.msra.mxu0 %v5406
        %6272 = vmatpush.bf16.msra.mxu0 %v5405
        %6273 = vmatpush.bf16.msra.mxu0 %v5404
        %6274 = vmatpush.bf16.msra.mxu0 %v5403
        %6275 = vmatpush.bf16.msra.mxu0 %v5402
        %6276 = vmatpush.bf16.msra.mxu0 %v5401
        %6277 = vmatpush.bf16.msra.mxu0 %v5400
        %6278 = vmatpush.bf16.msra.mxu0 %v5399
        %6279 = vmatmul.bf16.gmra.mxu0 %v3898
        %v6280 = vpop.f32.mrf.mxu0
        %v6281 = vadd.f32 %v6182, %v6280
        %v6282 = vpop.f32.mrf.mxu0
        %v6283 = vadd.f32 %v6184, %v6282
        %6284 = vmatmul.bf16.gmra.mxu0 %v3958
        %v6285 = vpop.f32.mrf.mxu0
        %v6286 = vadd.f32 %v6187, %v6285
        %v6287 = vpop.f32.mrf.mxu0
        %v6288 = vadd.f32 %v6189, %v6287
        %6289 = vmatmul.bf16.gmra.mxu0 %v4016
        %v6290 = vpop.f32.mrf.mxu0
        %v6291 = vadd.f32 %v6192, %v6290
        %v6292 = vpop.f32.mrf.mxu0
        %v6293 = vadd.f32 %v6194, %v6292
        %6294 = vmatmul.bf16.gmra.mxu0 %v4074
        %v6295 = vpop.f32.mrf.mxu0
        %v6296 = vadd.f32 %v6197, %v6295
        %v6297 = vpop.f32.mrf.mxu0
        %v6298 = vadd.f32 %v6199, %v6297
        %6299 = vmatmul.bf16.gmra.mxu0 %v4132
        %v6300 = vpop.f32.mrf.mxu0
        %v6301 = vadd.f32 %v6202, %v6300
        %v6302 = vpop.f32.mrf.mxu0
        %v6303 = vadd.f32 %v6204, %v6302
        %6304 = vmatmul.bf16.gmra.mxu0 %v4190
        %v6305 = vpop.f32.mrf.mxu0
        %v6306 = vadd.f32 %v6207, %v6305
        %v6307 = vpop.f32.mrf.mxu0
        %v6308 = vadd.f32 %v6209, %v6307
        %6309 = vmatmul.bf16.gmra.mxu0 %v4248
        %v6310 = vpop.f32.mrf.mxu0
        %v6311 = vadd.f32 %v6212, %v6310
        %v6312 = vpop.f32.mrf.mxu0
        %v6313 = vadd.f32 %v6214, %v6312
        %6314 = vmatmul.bf16.gmra.mxu0 %v4306
        %v6315 = vpop.f32.mrf.mxu0
        %v6316 = vadd.f32 %v6217, %v6315
        %v6317 = vpop.f32.mrf.mxu0
        %v6318 = vadd.f32 %v6219, %v6317
        %6319 = vmatmul.bf16.gmra.mxu0 %v4364
        %v6320 = vpop.f32.mrf.mxu0
        %v6321 = vadd.f32 %v6222, %v6320
        %v6322 = vpop.f32.mrf.mxu0
        %v6323 = vadd.f32 %v6224, %v6322
        %6324 = vmatmul.bf16.gmra.mxu0 %v4422
        %v6325 = vpop.f32.mrf.mxu0
        %v6326 = vadd.f32 %v6227, %v6325
        %v6327 = vpop.f32.mrf.mxu0
        %v6328 = vadd.f32 %v6229, %v6327
        %6329 = vmatmul.bf16.gmra.mxu0 %v4480
        %v6330 = vpop.f32.mrf.mxu0
        %v6331 = vadd.f32 %v6232, %v6330
        %v6332 = vpop.f32.mrf.mxu0
        %v6333 = vadd.f32 %v6234, %v6332
        %6334 = vmatmul.bf16.gmra.mxu0 %v4538
        %v6335 = vpop.f32.mrf.mxu0
        %v6336 = vadd.f32 %v6237, %v6335
        %v6337 = vpop.f32.mrf.mxu0
        %v6338 = vadd.f32 %v6239, %v6337
        %6339 = vmatmul.bf16.gmra.mxu0 %v4596
        %v6340 = vpop.f32.mrf.mxu0
        %v6341 = vadd.f32 %v6242, %v6340
        %v6342 = vpop.f32.mrf.mxu0
        %v6343 = vadd.f32 %v6244, %v6342
        %6344 = vmatmul.bf16.gmra.mxu0 %v4654
        %v6345 = vpop.f32.mrf.mxu0
        %v6346 = vadd.f32 %v6247, %v6345
        %v6347 = vpop.f32.mrf.mxu0
        %v6348 = vadd.f32 %v6249, %v6347
        %6349 = vmatmul.bf16.gmra.mxu0 %v4712
        %v6350 = vpop.f32.mrf.mxu0
        %v6351 = vadd.f32 %v6252, %v6350
        %v6352 = vpop.f32.mrf.mxu0
        %v6353 = vadd.f32 %v6254, %v6352
        %6354 = vmatmul.bf16.gmra.mxu0 %v4770
        %v6355 = vpop.f32.mrf.mxu0
        %v6356 = vadd.f32 %v6257, %v6355
        %v6357 = vpop.f32.mrf.mxu0
        %v6358 = vadd.f32 %v6259, %v6357
        %6359 = vmatmul.bf16.gmra.mxu0 %v4837
        %v6360 = vpop.f32.mrf.mxu0
        %v6361 = vadd.f32 %v6262, %v6360
        %v6362 = vpop.f32.mrf.mxu0
        %v6363 = vadd.f32 %v6264, %v6362
        %6364 = vmatmul.bf16.gmra.mxu0 %v4913
        %v6365 = vpop.f32.mrf.mxu0
        %v6366 = vadd.f32 %v6267, %v6365
        %v6367 = vpop.f32.mrf.mxu0
        %v6368 = vadd.f32 %v6269, %v6367
        %6369 = vdwg.mxu0
        %v6370 = vmax.f32 %v6281, 0.0
        %v6371 = vmax.f32 %v6283, 0.0
        %v6372 = vmax.f32 %v6286, 0.0
        %v6373 = vmax.f32 %v6288, 0.0
        %v6374 = vmax.f32 %v6291, 0.0
        %v6375 = vmax.f32 %v6293, 0.0
        %v6376 = vmax.f32 %v6296, 0.0
        %v6377 = vmax.f32 %v6298, 0.0
        %v6378 = vmax.f32 %v6301, 0.0
        %v6379 = vmax.f32 %v6303, 0.0
        %v6380 = vmax.f32 %v6306, 0.0
        %v6381 = vmax.f32 %v6308, 0.0
        %v6382 = vmax.f32 %v6311, 0.0
        %v6383 = vmax.f32 %v6313, 0.0
        %v6384 = vmax.f32 %v6316, 0.0
        %v6385 = vmax.f32 %v6318, 0.0
        %v6386 = vmax.f32 %v6321, 0.0
        %v6387 = vmax.f32 %v6323, 0.0
        %v6388 = vmax.f32 %v6326, 0.0
        %v6389 = vmax.f32 %v6328, 0.0
        %v6390 = vmax.f32 %v6331, 0.0
        %v6391 = vmax.f32 %v6333, 0.0
        %v6392 = vmax.f32 %v6336, 0.0
        %v6393 = vmax.f32 %v6338, 0.0
        %v6394 = vmax.f32 %v6341, 0.0
        %v6395 = vmax.f32 %v6343, 0.0
        %v6396 = vmax.f32 %v6346, 0.0
        %v6397 = vmax.f32 %v6348, 0.0
        %v6398 = vmax.f32 %v6351, 0.0
        %v6399 = vmax.f32 %v6353, 0.0
        %v6400 = vmax.f32 %v6356, 0.0
        %v6401 = vmax.f32 %v6358, 0.0
        %v6402 = vmax.f32 %v6361, 0.0
        %v6403 = vmax.f32 %v6363, 0.0
        %v6404 = vmax.f32 %v6366, 0.0
        %v6405 = vmax.f32 %v6368, 0.0
        %v6406 = vld [vmem:[%s6] sm:$0xff]
        %v6407 = vld [vmem:[%s6 + $0x8] sm:$0xff]
        %v6408 = vld [vmem:[%s6 + $0x10] sm:$0xff]
        %v6409 = vld [vmem:[%s6 + $0x18] sm:$0xff]
        %v6410 = vld [vmem:[%s6 + $0x20] sm:$0xff]
        %v6411 = vld [vmem:[%s6 + $0x28] sm:$0xff]
        %v6412 = vld [vmem:[%s6 + $0x30] sm:$0xff]
        %v6413 = vld [vmem:[%s6 + $0x38] sm:$0xff]
        %v6414 = vld [vmem:[%s6 + $0x40] sm:$0xff]
        %v6415 = vld [vmem:[%s6 + $0x48] sm:$0xff]
        %v6416 = vld [vmem:[%s6 + $0x50] sm:$0xff]
        %v6417 = vld [vmem:[%s6 + $0x58] sm:$0xff]
        %v6418 = vld [vmem:[%s6 + $0x60] sm:$0xff]
        %v6419 = vld [vmem:[%s6 + $0x68] sm:$0xff]
        %v6420 = vld [vmem:[%s6 + $0x70] sm:$0xff]
        %v6421 = vld [vmem:[%s6 + $0x78] sm:$0xff]
        %v6422 = vld [vmem:[%s6 + $0x80] sm:$0xff]
        %v6423 = vld [vmem:[%s6 + $0x88] sm:$0xff]
        %v6424 = vld [vmem:[%s6 + $0x90] sm:$0xff]
        %v6425 = vld [vmem:[%s6 + $0x98] sm:$0xff]
        %v6426 = vld [vmem:[%s6 + $0xa0] sm:$0xff]
        %v6427 = vld [vmem:[%s6 + $0xa8] sm:$0xff]
        %v6428 = vld [vmem:[%s6 + $0xb0] sm:$0xff]
        %v6429 = vld [vmem:[%s6 + $0xb8] sm:$0xff]
        %v6430 = vld [vmem:[%s6 + $0xc0] sm:$0xff]
        %v6431 = vld [vmem:[%s6 + $0xc8] sm:$0xff]
        %v6432 = vld [vmem:[%s6 + $0xd0] sm:$0xff]
        %v6433 = vld [vmem:[%s6 + $0xd8] sm:$0xff]
        %v6434 = vld [vmem:[%s6 + $0xe0] sm:$0xff]
        %v6435 = vld [vmem:[%s6 + $0xe8] sm:$0xff]
        %v6436 = vld [vmem:[%s6 + $0xf0] sm:$0xff]
        %v6437 = vld [vmem:[%s6 + $0xf8] sm:$0xff]
        %v6438 = vld [vmem:[%s6 + $0x100] sm:$0xff]
        %v6439 = vld [vmem:[%s6 + $0x108] sm:$0xff]
        %v6440 = vld [vmem:[%s6 + $0x110] sm:$0xff]
        %v6441 = vld [vmem:[%s6 + $0x118] sm:$0xff]
        %6443 = vset.pattern.permute.xlu0 0
        %6444 = vperm.xlu0 %6443, %v6406
        %v6445 = vpop.permute.xlu0 %6444
        %6448 = vset.pattern.permute.xlu0 0
        %6449 = vperm.xlu0 %6448, %v6407
        %v6450 = vpop.permute.xlu0 %6449
        %6453 = vset.pattern.permute.xlu0 0
        %6454 = vperm.xlu0 %6453, %v6408
        %v6455 = vpop.permute.xlu0 %6454
        %6458 = vset.pattern.permute.xlu0 0
        %6459 = vperm.xlu0 %6458, %v6409
        %v6460 = vpop.permute.xlu0 %6459
        %6463 = vset.pattern.permute.xlu0 0
        %6464 = vperm.xlu0 %6463, %v6410
        %v6465 = vpop.permute.xlu0 %6464
        %6468 = vset.pattern.permute.xlu0 0
        %6469 = vperm.xlu0 %6468, %v6411
        %v6470 = vpop.permute.xlu0 %6469
        %6473 = vset.pattern.permute.xlu0 0
        %6474 = vperm.xlu0 %6473, %v6412
        %v6475 = vpop.permute.xlu0 %6474
        %6478 = vset.pattern.permute.xlu0 0
        %6479 = vperm.xlu0 %6478, %v6413
        %v6480 = vpop.permute.xlu0 %6479
        %6483 = vset.pattern.permute.xlu0 0
        %6484 = vperm.xlu0 %6483, %v6414
        %v6485 = vpop.permute.xlu0 %6484
        %6488 = vset.pattern.permute.xlu0 0
        %6489 = vperm.xlu0 %6488, %v6415
        %v6490 = vpop.permute.xlu0 %6489
        %6493 = vset.pattern.permute.xlu0 0
        %6494 = vperm.xlu0 %6493, %v6416
        %v6495 = vpop.permute.xlu0 %6494
        %6498 = vset.pattern.permute.xlu0 0
        %6499 = vperm.xlu0 %6498, %v6417
        %v6500 = vpop.permute.xlu0 %6499
        %6503 = vset.pattern.permute.xlu0 0
        %6504 = vperm.xlu0 %6503, %v6418
        %v6505 = vpop.permute.xlu0 %6504
        %6508 = vset.pattern.permute.xlu0 0
        %6509 = vperm.xlu0 %6508, %v6419
        %v6510 = vpop.permute.xlu0 %6509
        %6513 = vset.pattern.permute.xlu0 0
        %6514 = vperm.xlu0 %6513, %v6420
        %v6515 = vpop.permute.xlu0 %6514
        %6518 = vset.pattern.permute.xlu0 0
        %6519 = vperm.xlu0 %6518, %v6421
        %v6520 = vpop.permute.xlu0 %6519
        %6523 = vset.pattern.permute.xlu0 0
        %6524 = vperm.xlu0 %6523, %v6422
        %v6525 = vpop.permute.xlu0 %6524
        %6528 = vset.pattern.permute.xlu0 0
        %6529 = vperm.xlu0 %6528, %v6423
        %v6530 = vpop.permute.xlu0 %6529
        %6533 = vset.pattern.permute.xlu0 0
        %6534 = vperm.xlu0 %6533, %v6424
        %v6535 = vpop.permute.xlu0 %6534
        %6538 = vset.pattern.permute.xlu0 0
        %6539 = vperm.xlu0 %6538, %v6425
        %v6540 = vpop.permute.xlu0 %6539
        %6543 = vset.pattern.permute.xlu0 0
        %6544 = vperm.xlu0 %6543, %v6426
        %v6545 = vpop.permute.xlu0 %6544
        %6548 = vset.pattern.permute.xlu0 0
        %6549 = vperm.xlu0 %6548, %v6427
        %v6550 = vpop.permute.xlu0 %6549
        %6553 = vset.pattern.permute.xlu0 0
        %6554 = vperm.xlu0 %6553, %v6428
        %v6555 = vpop.permute.xlu0 %6554
        %6558 = vset.pattern.permute.xlu0 0
        %6559 = vperm.xlu0 %6558, %v6429
        %v6560 = vpop.permute.xlu0 %6559
        %6563 = vset.pattern.permute.xlu0 0
        %6564 = vperm.xlu0 %6563, %v6430
        %v6565 = vpop.permute.xlu0 %6564
        %6568 = vset.pattern.permute.xlu0 0
        %6569 = vperm.xlu0 %6568, %v6431
        %v6570 = vpop.permute.xlu0 %6569
        %6573 = vset.pattern.permute.xlu0 0
        %6574 = vperm.xlu0 %6573, %v6432
        %v6575 = vpop.permute.xlu0 %6574
        %6578 = vset.pattern.permute.xlu0 0
        %6579 = vperm.xlu0 %6578, %v6433
        %v6580 = vpop.permute.xlu0 %6579
        %6583 = vset.pattern.permute.xlu0 0
        %6584 = vperm.xlu0 %6583, %v6434
        %v6585 = vpop.permute.xlu0 %6584
        %6588 = vset.pattern.permute.xlu0 0
        %6589 = vperm.xlu0 %6588, %v6435
        %v6590 = vpop.permute.xlu0 %6589
        %6593 = vset.pattern.permute.xlu0 0
        %6594 = vperm.xlu0 %6593, %v6436
        %v6595 = vpop.permute.xlu0 %6594
        %6598 = vset.pattern.permute.xlu0 0
        %6599 = vperm.xlu0 %6598, %v6437
        %v6600 = vpop.permute.xlu0 %6599
        %6603 = vset.pattern.permute.xlu0 0
        %6604 = vperm.xlu0 %6603, %v6438
        %v6605 = vpop.permute.xlu0 %6604
        %6608 = vset.pattern.permute.xlu0 0
        %6609 = vperm.xlu0 %6608, %v6439
        %v6610 = vpop.permute.xlu0 %6609
        %6613 = vset.pattern.permute.xlu0 0
        %6614 = vperm.xlu0 %6613, %v6440
        %v6615 = vpop.permute.xlu0 %6614
        %6618 = vset.pattern.permute.xlu0 0
        %6619 = vperm.xlu0 %6618, %v6441
        %v6620 = vpop.permute.xlu0 %6619
        %v6622 = vmul.f32 %v6370, %v6445
        %v6623 = vmul.f32 %v6371, %v6450
        %v6624 = vmul.f32 %v6372, %v6455
        %v6625 = vmul.f32 %v6373, %v6460
        %v6626 = vmul.f32 %v6374, %v6465
        %v6627 = vmul.f32 %v6375, %v6470
        %v6628 = vmul.f32 %v6376, %v6475
        %v6629 = vmul.f32 %v6377, %v6480
        %v6630 = vmul.f32 %v6378, %v6485
        %v6631 = vmul.f32 %v6379, %v6490
        %v6632 = vmul.f32 %v6380, %v6495
        %v6633 = vmul.f32 %v6381, %v6500
        %v6634 = vmul.f32 %v6382, %v6505
        %v6635 = vmul.f32 %v6383, %v6510
        %v6636 = vmul.f32 %v6384, %v6515
        %v6637 = vmul.f32 %v6385, %v6520
        %v6638 = vmul.f32 %v6386, %v6525
        %v6639 = vmul.f32 %v6387, %v6530
        %v6640 = vmul.f32 %v6388, %v6535
        %v6641 = vmul.f32 %v6389, %v6540
        %v6642 = vmul.f32 %v6390, %v6545
        %v6643 = vmul.f32 %v6391, %v6550
        %v6644 = vmul.f32 %v6392, %v6555
        %v6645 = vmul.f32 %v6393, %v6560
        %v6646 = vmul.f32 %v6394, %v6565
        %v6647 = vmul.f32 %v6395, %v6570
        %v6648 = vmul.f32 %v6396, %v6575
        %v6649 = vmul.f32 %v6397, %v6580
        %v6650 = vmul.f32 %v6398, %v6585
        %v6651 = vmul.f32 %v6399, %v6590
        %v6652 = vmul.f32 %v6400, %v6595
        %v6653 = vmul.f32 %v6401, %v6600
        %v6654 = vmul.f32 %v6402, %v6605
        %v6655 = vmul.f32 %v6403, %v6610
        %v6656 = vmul.f32 %v6404, %v6615
        %v6657 = vmul.f32 %v6405, %v6620
        %v6658 = vadd.f32 %v6622, %v6623
        %v6659 = vadd.f32 %v6658, %v6624
        %v6660 = vadd.f32 %v6659, %v6625
        %v6661 = vadd.f32 %v6660, %v6626
        %v6662 = vadd.f32 %v6661, %v6627
        %v6663 = vadd.f32 %v6662, %v6628
        %v6664 = vadd.f32 %v6663, %v6629
        %v6665 = vadd.f32 %v6664, %v6630
        %v6666 = vadd.f32 %v6665, %v6631
        %v6667 = vadd.f32 %v6666, %v6632
        %v6668 = vadd.f32 %v6667, %v6633
        %v6669 = vadd.f32 %v6668, %v6634
        %v6670 = vadd.f32 %v6669, %v6635
        %v6671 = vadd.f32 %v6670, %v6636
        %v6672 = vadd.f32 %v6671, %v6637
        %v6673 = vadd.f32 %v6672, %v6638
        %v6674 = vadd.f32 %v6673, %v6639
        %v6675 = vadd.f32 %v6674, %v6640
        %v6676 = vadd.f32 %v6675, %v6641
        %v6677 = vadd.f32 %v6676, %v6642
        %v6678 = vadd.f32 %v6677, %v6643
        %v6679 = vadd.f32 %v6678, %v6644
        %v6680 = vadd.f32 %v6679, %v6645
        %v6681 = vadd.f32 %v6680, %v6646
        %v6682 = vadd.f32 %v6681, %v6647
        %v6683 = vadd.f32 %v6682, %v6648
        %v6684 = vadd.f32 %v6683, %v6649
        %v6685 = vadd.f32 %v6684, %v6650
        %v6686 = vadd.f32 %v6685, %v6651
        %v6687 = vadd.f32 %v6686, %v6652
        %v6688 = vadd.f32 %v6687, %v6653
        %v6689 = vadd.f32 %v6688, %v6654
        %v6690 = vadd.f32 %v6689, %v6655
        %v6691 = vadd.f32 %v6690, %v6656
        %v6692 = vadd.f32 %v6691, %v6657
        %v6693 = vrot.slane %v6692, 4
        %v6694 = vadd.f32 %v6692, %v6693
        %v6695 = vrot.slane %v6694, 2
        %v6696 = vadd.f32 %v6694, %v6695
        %v6697 = vrot.slane %v6696, 1
        %v6698 = vadd.f32 %v6696, %v6697
        %6699 = vst [vmem:[%s270] sm:$0x1] %v6698
        %s6700 = sand.u32 %s181, 1
        %s6701 = scalar_lea.sflag [#allocation4], %s6700
        %s6702 = sand.u32 %s181, 1
        %s6703 = scalar_lea.vmem [#allocation3], %s6702
        // Predicated region
        $region49: #{backbone_forward.1} parent=47 // pred_check
          %p6704 = pneg %p191
        $region50: #{backbone_forward.1} parent=47 // pred_check_branch
          %6706 = sbr.rel (%p6704) target = $region52
        $region51: #{backbone_forward.1} parent=47 // pred_region
          %6708 = vsyncadd %s6701, 0
          %s6709 = scalar_lea.hbm %s7, %s21
          %s6711 = sshll.u32 %s6703, 4
          %s6712 = int_to_ptr.vmem [resolvable:$true] %s6711
          %s6713 = sshll.u32 %s6709, 4
          %s6714 = int_to_ptr.hbm [resolvable:$true] %s6713
          %6716 = dma.vmem_to_hbm [thread:$0]  %s6712, 16, %s6714, %s6701
        $region52: #{backbone_forward.1} parent=47 // pred_fallthru
          _
      $region48: #{backbone_forward.1} parent=5 // pred_fallthru
        _
      %p6717 = scmp.le.s32.totalorder 2, %s16
      // Predicated region
      $region53: #{backbone_forward.1} parent=5 // pred_check
        %p6718 = pneg %p6717
      $region54: #{backbone_forward.1} parent=5 // pred_check_branch
        %6720 = sbr.rel (%p6718) target = $region56
      $region55: #{backbone_forward.1} parent=5 // pred_region
        %s6721 = ssub.s32 %s16, 2
        // Predicated region
        $region57: #{backbone_forward.1} parent=55 // pred_check
          %p6722 = pneg %p197
        $region58: #{backbone_forward.1} parent=55 // pred_check_branch
          %6724 = sbr.rel (%p6722) target = $region60
        $region59: #{backbone_forward.1} parent=55 // pred_region
          %s6725 = sand.u32 %s182, 1
          %s6726 = scalar_lea.sflag [#allocation4], %s6725
          %s6727 = sand.u32 %s182, 1
          %s6728 = scalar_lea.vmem [#allocation3], %s6727
          %6730 = dma.done %s6726, 16
        $region60: #{backbone_forward.1} parent=55 // pred_fallthru
          _
      $region56: #{backbone_forward.1} parent=5 // pred_fallthru
        _
    $region6: #{backbone_forward.1} parent=1 // loop_footer
      %s20 = sadd.s32 1, %s16
    $region7: #{backbone_forward.1} parent=1 // loop_footer_branch
      %15 = sbr.rel target = $region3
    $region8: #{backbone_forward.1} parent=1 // loop_exit
      _
    %6731 = vsyncpa [#allocation4], 1
    %s6732 = scalar_lea.sflag [#allocation4], 1
    %6733 = vsyncpa %s6732, 1

</llo_original>
